<compile_context>
chip_gen: v7x
topology: tpu7x:2x2x1
jax: 0.10.0
libtpu: 0.0.40
codegen_flags: <defaults>
</compile_context>

<pallas_src>
import math
from functools import partial

import jax
import jax.numpy as jnp
from jax import lax
from jax.experimental import pallas as pl
from jax.experimental.pallas import tpu as pltpu


# ----------------------------------------------------------------------------
# Fused transformer-stack kernel (one grid step per layer)
# ----------------------------------------------------------------------------
def _gpt_layers_kernel(x_ref,
                       w_attn_ref, b_attn_ref, w_ap_ref, b_ap_ref,
                       w_fc_ref, b_fc_ref, w_mp_ref, b_mp_ref,
                       o_ref, resid_ref, *, B, T, n_head):
    layer = pl.program_id(0)
    n_layers = pl.num_programs(0)

    # Load the token stream into the persistent VMEM residual scratch once.
    @pl.when(layer == 0)
    def _():
        resid_ref[...] = x_ref[...].astype(jnp.float32)

    x = resid_ref[...]                              # (M, C), M = B*T
    M, C = x.shape
    D = C // n_head
    scale = 1.0 / math.sqrt(D)

    # ---------------- causal self-attention ----------------
    # Fused qkv projection: one (M, C) @ (C, 3C) matmul (B*T rows on the MXU).
    qkv = jnp.dot(x, w_attn_ref[0], preferred_element_type=jnp.float32)
    qkv = qkv + b_attn_ref[0]                       # (M, 3C)

    # Split heads and stack them on a leading batch axis -> (H*B, T, D).
    q_heads, k_heads, v_heads = [], [], []
    for h in range(n_head):
        q_heads.append(qkv[:, 0 * C + h * D: 0 * C + (h + 1) * D].reshape(B, T, D))
        k_heads.append(qkv[:, 1 * C + h * D: 1 * C + (h + 1) * D].reshape(B, T, D))
        v_heads.append(qkv[:, 2 * C + h * D: 2 * C + (h + 1) * D].reshape(B, T, D))
    q = jnp.concatenate(q_heads, axis=0)            # (H*B, T, D)
    k = jnp.concatenate(k_heads, axis=0)
    v = jnp.concatenate(v_heads, axis=0)

    # Batched scores: contract on D (no transpose materialized).
    s = jnp.einsum('gqd,gkd->gqk', q, k,
                   preferred_element_type=jnp.float32) * scale   # (H*B, T, T)

    # Causal mask with a large finite negative (avoids -inf NaN corner cases).
    row = lax.broadcasted_iota(jnp.int32, (T, T), 0)
    col = lax.broadcasted_iota(jnp.int32, (T, T), 1)
    causal = (col <= row)[None, :, :]
    s = jnp.where(causal, s, jnp.float32(-1e30))

    # Stable softmax; normalization via approximate reciprocal (EUP).
    m = jnp.max(s, axis=-1, keepdims=True)
    p = jnp.exp(s - m)
    denom = jnp.sum(p, axis=-1, keepdims=True)
    p = p * pl.reciprocal(denom, approx=True)

    pv = jnp.einsum('gqk,gkd->gqd', p, v,
                    preferred_element_type=jnp.float32)          # (H*B, T, D)

    # Output projection: concat_h(pv_h) @ W == sum_h pv_h @ W[h*D:(h+1)*D, :]
    # (sublane-aligned row slices of W; avoids a lane-dim concatenate).
    w_ap = w_ap_ref[0]                                           # (C, C)
    y = jnp.zeros((M, C), jnp.float32)
    for h in range(n_head):
        pv_h = pv[h * B:(h + 1) * B].reshape(M, D)               # (M, D)
        y = y + jnp.dot(pv_h, w_ap[h * D:(h + 1) * D, :],
                        preferred_element_type=jnp.float32)
    y = y + b_ap_ref[0]
    x = x + y                                                    # residual 1

    # ---------------- MLP (linear variant: no activation) ----------------
    hidden = jnp.dot(x, w_fc_ref[0], preferred_element_type=jnp.float32)
    hidden = hidden + b_fc_ref[0]
    y = jnp.dot(hidden, w_mp_ref[0], preferred_element_type=jnp.float32)
    y = y + b_mp_ref[0]
    x = x + y                                                    # residual 2

    resid_ref[...] = x

    @pl.when(layer == n_layers - 1)
    def _():
        o_ref[...] = x.astype(o_ref.dtype)


def gpt_blocks(x, blocks, n_head):
    """All transformer layers in one pallas_call; grid axis = layer."""
    B, T, C = x.shape
    L = blocks["w_attn"].shape[0]
    M = B * T
    x2 = x.reshape(M, C)
    out = pl.pallas_call(
        partial(_gpt_layers_kernel, B=B, T=T, n_head=n_head),
        out_shape=jax.ShapeDtypeStruct((M, C), x.dtype),
        grid=(L,),
        in_specs=[
            pl.BlockSpec((M, C), lambda l: (0, 0)),
            pl.BlockSpec((1, C, 3 * C), lambda l: (l, 0, 0)),
            pl.BlockSpec((1, 1, 3 * C), lambda l: (l, 0, 0)),
            pl.BlockSpec((1, C, C), lambda l: (l, 0, 0)),
            pl.BlockSpec((1, 1, C), lambda l: (l, 0, 0)),
            pl.BlockSpec((1, C, 4 * C), lambda l: (l, 0, 0)),
            pl.BlockSpec((1, 1, 4 * C), lambda l: (l, 0, 0)),
            pl.BlockSpec((1, 4 * C, C), lambda l: (l, 0, 0)),
            pl.BlockSpec((1, 1, C), lambda l: (l, 0, 0)),
        ],
        out_specs=pl.BlockSpec((M, C), lambda l: (0, 0)),
        scratch_shapes=[pltpu.VMEM((M, C), jnp.float32)],
        compiler_params=pltpu.CompilerParams(
            dimension_semantics=("arbitrary",)),   # layers are sequential
    )(x2,
      blocks["w_attn"], blocks["b_attn"],
      blocks["w_attn_proj"], blocks["b_attn_proj"],
      blocks["w_fc"], blocks["b_fc"],
      blocks["w_mlp_proj"], blocks["b_mlp_proj"])
    return out.reshape(B, T, C)


# ----------------------------------------------------------------------------
# LM head, tiled over the vocab dimension
# ----------------------------------------------------------------------------
def _lm_head_kernel(x_ref, w_ref, o_ref):
    o_ref[...] = jnp.dot(x_ref[...].astype(jnp.float32), w_ref[...],
                         preferred_element_type=jnp.float32).astype(o_ref.dtype)


def lm_head(x2d, w_head, *, tile_v=128):
    M, C = x2d.shape
    V = w_head.shape[1]
    tv = tile_v if V % tile_v == 0 else V   # fall back to full V if unaligned
    return pl.pallas_call(
        _lm_head_kernel,
        out_shape=jax.ShapeDtypeStruct((M, V), x2d.dtype),
        grid=(V // tv,),
        in_specs=[
            pl.BlockSpec((M, C), lambda j: (0, 0)),
            pl.BlockSpec((C, tv), lambda j: (0, j)),
        ],
        out_specs=pl.BlockSpec((M, tv), lambda j: (0, j)),
        compiler_params=pltpu.CompilerParams(
            dimension_semantics=("parallel",)),
    )(x2d, w_head)


# ----------------------------------------------------------------------------
# Model: parameter init + forward
# ----------------------------------------------------------------------------
def init_params(key, n_embd, n_layer, block_size):
    std = 0.02
    C = n_embd
    k = jax.random.split(key, 6)

    def normal(kk, shape):
        return std * jax.random.normal(kk, shape, jnp.float32)

    return {
        "tok_emb": normal(k[0], (block_size, C)),
        "pos_emb": jnp.zeros((1, block_size, C), jnp.float32),
        "w_head": normal(k[1], (C, block_size)),     # vocab == block_size here
        "blocks": {                                  # stacked per-layer weights
            "w_attn":      normal(k[2], (n_layer, C, 3 * C)),
            "b_attn":      jnp.zeros((n_layer, 1, 3 * C), jnp.float32),
            "w_attn_proj": normal(k[3], (n_layer, C, C)),
            "b_attn_proj": jnp.zeros((n_layer, 1, C), jnp.float32),
            "w_fc":        normal(k[4], (n_layer, C, 4 * C)),
            "b_fc":        jnp.zeros((n_layer, 1, 4 * C), jnp.float32),
            "w_mlp_proj":  normal(k[5], (n_layer, 4 * C, C)),
            "b_mlp_proj":  jnp.zeros((n_layer, 1, C), jnp.float32),
        },
    }


def gpt_forward(params, idx, n_head):
    B, T = idx.shape
    # glue: embedding gather + positional-embedding add (ln/dropout = identity)
    x = jnp.take(params["tok_emb"], idx, axis=0)          # (B, T, C)
    x = x + params["pos_emb"][:, :T, :]
    x = gpt_blocks(x, params["blocks"], n_head)           # all layers, 1 call
    x2 = x.reshape(B * T, x.shape[-1])                    # flatten B*T for head
    logits = lm_head(x2, params["w_head"])                # (B*T, V), vocab-tiled
    V = params["w_head"].shape[1]
    # TODO(synk): cross-entropy loss for the `targets is not None` path is not
    # implemented (reference returns loss=None when targets is None).
    return logits.reshape(B, T, V), None


# ----------------------------------------------------------------------------
if __name__ == "__main__":
    n_embd, n_layer, n_head, block_size = 128, 4, 4, 128
    B, T = 2, 16

    key = jax.random.PRNGKey(0)
    key, pkey, ikey = jax.random.split(key, 3)
    params = init_params(pkey, n_embd, n_layer, block_size)
    idx = jax.random.randint(ikey, (B, T), 0, block_size, dtype=jnp.int32)

    logits, loss = gpt_forward(params, idx, n_head)
    logits = jax.block_until_ready(logits)
    assert logits.shape == (B, T, block_size)
    assert bool(jnp.isfinite(logits).all())
    assert loss is None
    print("KERNEL_OK")
</pallas_src>

<mosaic_0001>
module attributes {stable_mosaic.version = 11 : i64} {
  func.func @_gpt_layers_kernel(%arg0: i32, %arg1: memref<32x128xf32, #tpu.memory_space<vmem>>, %arg2: memref<1x128x384xf32, #tpu.memory_space<vmem>>, %arg3: memref<1x1x384xf32, #tpu.memory_space<vmem>>, %arg4: memref<1x128x128xf32, #tpu.memory_space<vmem>>, %arg5: memref<1x1x128xf32, #tpu.memory_space<vmem>>, %arg6: memref<1x128x512xf32, #tpu.memory_space<vmem>>, %arg7: memref<1x1x512xf32, #tpu.memory_space<vmem>>, %arg8: memref<1x512x128xf32, #tpu.memory_space<vmem>>, %arg9: memref<1x1x128xf32, #tpu.memory_space<vmem>>, %arg10: memref<32x128xf32, #tpu.memory_space<vmem>>, %arg11: memref<32x128xf32, #tpu.memory_space<vmem>>) attributes {dimension_semantics = [#tpu.dimension_semantics<arbitrary>], iteration_bounds = array<i64: 4>, scalar_prefetch = 0 : i64, scratch_operands = 1 : i64, tpu.core_type = #tpu.core_type<tc>, window_params = [{pipeline_mode = #tpu.pipeline_mode<synchronous>, transform_indices = @transform_0, window_bounds = array<i64: 32, 128>}, {transform_indices = @transform_1, window_bounds = array<i64: 1, 128, 384>}, {transform_indices = @transform_2, window_bounds = array<i64: 1, 1, 384>}, {transform_indices = @transform_3, window_bounds = array<i64: 1, 128, 128>}, {transform_indices = @transform_4, window_bounds = array<i64: 1, 1, 128>}, {transform_indices = @transform_5, window_bounds = array<i64: 1, 128, 512>}, {transform_indices = @transform_6, window_bounds = array<i64: 1, 1, 512>}, {transform_indices = @transform_7, window_bounds = array<i64: 1, 512, 128>}, {transform_indices = @transform_8, window_bounds = array<i64: 1, 1, 128>}, {pipeline_mode = #tpu.pipeline_mode<synchronous>, transform_indices = @transform_9, window_bounds = array<i64: 32, 128>}]} {
    %c0_i32 = arith.constant 0 : i32
    %0 = arith.cmpi eq, %arg0, %c0_i32 : i32
    %1 = arith.extui %0 : i1 to i32
    %c0_i32_0 = arith.constant 0 : i32
    %2 = arith.cmpi ne, %1, %c0_i32_0 : i32
    scf.if %2 {
      %c0_42 = arith.constant 0 : index
      %c0_43 = arith.constant 0 : index
      %107 = vector.load %arg1[%c0_42, %c0_43] : memref<32x128xf32, #tpu.memory_space<vmem>>, vector<32x128xf32>
      %c0_44 = arith.constant 0 : index
      %c0_45 = arith.constant 0 : index
      %108 = vector.load %arg11[%c0_44, %c0_45] : memref<32x128xf32, #tpu.memory_space<vmem>>, vector<32x128xf32>
      tpu.vector_store %arg11[%c0_44, %c0_45], %107 {strides = array<i32>} : memref<32x128xf32, #tpu.memory_space<vmem>>, vector<32x128xf32>,
    } else {
    }
    %c0 = arith.constant 0 : index
    %c0_1 = arith.constant 0 : index
    %3 = vector.load %arg11[%c0, %c0_1] : memref<32x128xf32, #tpu.memory_space<vmem>>, vector<32x128xf32>
    %c0_2 = arith.constant 0 : index
    %c0_3 = arith.constant 0 : index
    %c0_4 = arith.constant 0 : index
    %4 = vector.load %arg2[%c0_2, %c0_3, %c0_4] : memref<1x128x384xf32, #tpu.memory_space<vmem>>, vector<1x128x384xf32>
    %5 = vector.shape_cast %4 : vector<1x128x384xf32> to vector<128x384xf32>
    %cst = arith.constant dense<0.000000e+00> : vector<32x384xf32>
    %6 = tpu.matmul %3, %5, %cst {dimension_numbers = #tpu.dot_dimension_numbers<[1], [0], [0], [1], [0, 0, 1, 1], [], []>} : vector<32x128xf32>, vector<128x384xf32>, vector<32x384xf32> -> vector<32x384xf32>
    %c0_5 = arith.constant 0 : index
    %c0_6 = arith.constant 0 : index
    %c0_7 = arith.constant 0 : index
    %7 = vector.load %arg3[%c0_5, %c0_6, %c0_7] : memref<1x1x384xf32, #tpu.memory_space<vmem>>, vector<1x1x384xf32>
    %8 = vector.shape_cast %7 : vector<1x1x384xf32> to vector<1x384xf32>
    %9 = vector.broadcast %8 : vector<1x384xf32> to vector<32x384xf32>
    %10 = arith.addf %6, %9 : vector<32x384xf32>
    %11 = vector.extract_strided_slice %10 {offsets = [0, 0], sizes = [32, 32], strides = [1, 1]} : vector<32x384xf32> to vector<32x32xf32>
    %12 = vector.shape_cast %11 : vector<32x32xf32> to vector<2x16x32xf32>
    %13 = vector.extract_strided_slice %10 {offsets = [0, 128], sizes = [32, 32], strides = [1, 1]} : vector<32x384xf32> to vector<32x32xf32>
    %14 = vector.shape_cast %13 : vector<32x32xf32> to vector<2x16x32xf32>
    %15 = vector.extract_strided_slice %10 {offsets = [0, 256], sizes = [32, 32], strides = [1, 1]} : vector<32x384xf32> to vector<32x32xf32>
    %16 = vector.shape_cast %15 : vector<32x32xf32> to vector<2x16x32xf32>
    %17 = vector.extract_strided_slice %10 {offsets = [0, 32], sizes = [32, 32], strides = [1, 1]} : vector<32x384xf32> to vector<32x32xf32>
    %18 = vector.shape_cast %17 : vector<32x32xf32> to vector<2x16x32xf32>
    %19 = vector.extract_strided_slice %10 {offsets = [0, 160], sizes = [32, 32], strides = [1, 1]} : vector<32x384xf32> to vector<32x32xf32>
    %20 = vector.shape_cast %19 : vector<32x32xf32> to vector<2x16x32xf32>
    %21 = vector.extract_strided_slice %10 {offsets = [0, 288], sizes = [32, 32], strides = [1, 1]} : vector<32x384xf32> to vector<32x32xf32>
    %22 = vector.shape_cast %21 : vector<32x32xf32> to vector<2x16x32xf32>
    %23 = vector.extract_strided_slice %10 {offsets = [0, 64], sizes = [32, 32], strides = [1, 1]} : vector<32x384xf32> to vector<32x32xf32>
    %24 = vector.shape_cast %23 : vector<32x32xf32> to vector<2x16x32xf32>
    %25 = vector.extract_strided_slice %10 {offsets = [0, 192], sizes = [32, 32], strides = [1, 1]} : vector<32x384xf32> to vector<32x32xf32>
    %26 = vector.shape_cast %25 : vector<32x32xf32> to vector<2x16x32xf32>
    %27 = vector.extract_strided_slice %10 {offsets = [0, 320], sizes = [32, 32], strides = [1, 1]} : vector<32x384xf32> to vector<32x32xf32>
    %28 = vector.shape_cast %27 : vector<32x32xf32> to vector<2x16x32xf32>
    %29 = vector.extract_strided_slice %10 {offsets = [0, 96], sizes = [32, 32], strides = [1, 1]} : vector<32x384xf32> to vector<32x32xf32>
    %30 = vector.shape_cast %29 : vector<32x32xf32> to vector<2x16x32xf32>
    %31 = vector.extract_strided_slice %10 {offsets = [0, 224], sizes = [32, 32], strides = [1, 1]} : vector<32x384xf32> to vector<32x32xf32>
    %32 = vector.shape_cast %31 : vector<32x32xf32> to vector<2x16x32xf32>
    %33 = vector.extract_strided_slice %10 {offsets = [0, 352], sizes = [32, 32], strides = [1, 1]} : vector<32x384xf32> to vector<32x32xf32>
    %34 = vector.shape_cast %33 : vector<32x32xf32> to vector<2x16x32xf32>
    %35 = tpu.concatenate %12, %18, %24, %30 in 0 : vector<2x16x32xf32>, vector<2x16x32xf32>, vector<2x16x32xf32>, vector<2x16x32xf32> -> vector<8x16x32xf32>
    %36 = tpu.concatenate %14, %20, %26, %32 in 0 : vector<2x16x32xf32>, vector<2x16x32xf32>, vector<2x16x32xf32>, vector<2x16x32xf32> -> vector<8x16x32xf32>
    %37 = tpu.concatenate %16, %22, %28, %34 in 0 : vector<2x16x32xf32>, vector<2x16x32xf32>, vector<2x16x32xf32>, vector<2x16x32xf32> -> vector<8x16x32xf32>
    "tpu.trace_start"() <{level = 10 : i32, message = "gqd,gkd->gqk"}> : () -> ()
    %cst_8 = arith.constant dense<0.000000e+00> : vector<8x16x16xf32>
    %38 = tpu.matmul %35, %36, %cst_8 {dimension_numbers = #tpu.dot_dimension_numbers<[2], [2], [1], [1], [0, 0, 0, 1, 1, 1], [0], [0]>} : vector<8x16x32xf32>, vector<8x16x32xf32>, vector<8x16x16xf32> -> vector<8x16x16xf32>
    "tpu.trace_stop"() : () -> ()
    %cst_9 = arith.constant 0.176776692 : f32
    %39 = vector.broadcast %cst_9 : f32 to vector<8x16x16xf32>
    %40 = arith.mulf %38, %39 : vector<8x16x16xf32>
    %41 = tpu.iota {dimensions = array<i32: 0>} : vector<16x16xi32>
    %42 = tpu.iota {dimensions = array<i32: 1>} : vector<16x16xi32>
    %43 = arith.cmpi sle, %42, %41 : vector<16x16xi32>
    %44 = vector.shape_cast %43 : vector<16x16xi1> to vector<1x16x16xi1>
    %cst_10 = arith.constant -1.000000e+30 : f32
    %45 = vector.shape_cast %44 : vector<1x16x16xi1> to vector<1x16x16xi1>
    %46 = vector.broadcast %45 : vector<1x16x16xi1> to vector<8x16x16xi1>
    %47 = vector.broadcast %cst_10 : f32 to vector<8x16x16xf32>
    %48 = arith.select %46, %40, %47 : vector<8x16x16xi1>, vector<8x16x16xf32>
    %cst_11 = arith.constant dense<0xFF800000> : vector<8x16xf32>
    %49 = vector.multi_reduction <maximumf>, %48, %cst_11 [2] : vector<8x16x16xf32> to vector<8x16xf32>
    %50 = vector.shape_cast %49 : vector<8x16xf32> to vector<8x16x1xf32>
    %51 = vector.broadcast %50 : vector<8x16x1xf32> to vector<8x16x16xf32>
    %52 = arith.subf %48, %51 : vector<8x16x16xf32>
    %53 = math.exp %52 : vector<8x16x16xf32>
    %cst_12 = arith.constant dense<0.000000e+00> : vector<8x16xf32>
    %54 = vector.multi_reduction <add>, %53, %cst_12 [2] : vector<8x16x16xf32> to vector<8x16xf32>
    %55 = vector.shape_cast %54 : vector<8x16xf32> to vector<8x16x1xf32>
    %56 = tpu.reciprocal %55 {approx = true} : vector<8x16x1xf32> -> vector<8x16x1xf32>
    %57 = vector.broadcast %56 : vector<8x16x1xf32> to vector<8x16x16xf32>
    %58 = arith.mulf %53, %57 : vector<8x16x16xf32>
    "tpu.trace_start"() <{level = 10 : i32, message = "gqk,gkd->gqd"}> : () -> ()
    %cst_13 = arith.constant dense<0.000000e+00> : vector<8x16x32xf32>
    %59 = tpu.matmul %58, %37, %cst_13 {dimension_numbers = #tpu.dot_dimension_numbers<[2], [1], [1], [2], [0, 0, 0, 1, 1, 2], [0], [0]>} : vector<8x16x16xf32>, vector<8x16x32xf32>, vector<8x16x32xf32> -> vector<8x16x32xf32>
    "tpu.trace_stop"() : () -> ()
    %c0_14 = arith.constant 0 : index
    %c0_15 = arith.constant 0 : index
    %c0_16 = arith.constant 0 : index
    %60 = vector.load %arg4[%c0_14, %c0_15, %c0_16] : memref<1x128x128xf32, #tpu.memory_space<vmem>>, vector<1x128x128xf32>
    %61 = vector.shape_cast %60 : vector<1x128x128xf32> to vector<128x128xf32>
    %cst_17 = arith.constant 0.000000e+00 : f32
    %62 = vector.broadcast %cst_17 : f32 to vector<32x128xf32>
    %63 = vector.extract_strided_slice %59 {offsets = [0, 0, 0], sizes = [2, 16, 32], strides = [1, 1, 1]} : vector<8x16x32xf32> to vector<2x16x32xf32>
    %64 = vector.shape_cast %63 : vector<2x16x32xf32> to vector<32x32xf32>
    %65 = vector.extract_strided_slice %61 {offsets = [0, 0], sizes = [32, 128], strides = [1, 1]} : vector<128x128xf32> to vector<32x128xf32>
    %cst_18 = arith.constant dense<0.000000e+00> : vector<32x128xf32>
    %66 = tpu.matmul %64, %65, %cst_18 {dimension_numbers = #tpu.dot_dimension_numbers<[1], [0], [0], [1], [0, 0, 1, 1], [], []>} : vector<32x32xf32>, vector<32x128xf32>, vector<32x128xf32> -> vector<32x128xf32>
    %67 = arith.addf %62, %66 : vector<32x128xf32>
    %68 = vector.extract_strided_slice %59 {offsets = [2, 0, 0], sizes = [2, 16, 32], strides = [1, 1, 1]} : vector<8x16x32xf32> to vector<2x16x32xf32>
    %69 = vector.shape_cast %68 : vector<2x16x32xf32> to vector<32x32xf32>
    %70 = vector.extract_strided_slice %61 {offsets = [32, 0], sizes = [32, 128], strides = [1, 1]} : vector<128x128xf32> to vector<32x128xf32>
    %cst_19 = arith.constant dense<0.000000e+00> : vector<32x128xf32>
    %71 = tpu.matmul %69, %70, %cst_19 {dimension_numbers = #tpu.dot_dimension_numbers<[1], [0], [0], [1], [0, 0, 1, 1], [], []>} : vector<32x32xf32>, vector<32x128xf32>, vector<32x128xf32> -> vector<32x128xf32>
    %72 = arith.addf %67, %71 : vector<32x128xf32>
    %73 = vector.extract_strided_slice %59 {offsets = [4, 0, 0], sizes = [2, 16, 32], strides = [1, 1, 1]} : vector<8x16x32xf32> to vector<2x16x32xf32>
    %74 = vector.shape_cast %73 : vector<2x16x32xf32> to vector<32x32xf32>
    %75 = vector.extract_strided_slice %61 {offsets = [64, 0], sizes = [32, 128], strides = [1, 1]} : vector<128x128xf32> to vector<32x128xf32>
    %cst_20 = arith.constant dense<0.000000e+00> : vector<32x128xf32>
    %76 = tpu.matmul %74, %75, %cst_20 {dimension_numbers = #tpu.dot_dimension_numbers<[1], [0], [0], [1], [0, 0, 1, 1], [], []>} : vector<32x32xf32>, vector<32x128xf32>, vector<32x128xf32> -> vector<32x128xf32>
    %77 = arith.addf %72, %76 : vector<32x128xf32>
    %78 = vector.extract_strided_slice %59 {offsets = [6, 0, 0], sizes = [2, 16, 32], strides = [1, 1, 1]} : vector<8x16x32xf32> to vector<2x16x32xf32>
    %79 = vector.shape_cast %78 : vector<2x16x32xf32> to vector<32x32xf32>
    %80 = vector.extract_strided_slice %61 {offsets = [96, 0], sizes = [32, 128], strides = [1, 1]} : vector<128x128xf32> to vector<32x128xf32>
    %cst_21 = arith.constant dense<0.000000e+00> : vector<32x128xf32>
    %81 = tpu.matmul %79, %80, %cst_21 {dimension_numbers = #tpu.dot_dimension_numbers<[1], [0], [0], [1], [0, 0, 1, 1], [], []>} : vector<32x32xf32>, vector<32x128xf32>, vector<32x128xf32> -> vector<32x128xf32>
    %82 = arith.addf %77, %81 : vector<32x128xf32>
    %c0_22 = arith.constant 0 : index
    %c0_23 = arith.constant 0 : index
    %c0_24 = arith.constant 0 : index
    %83 = vector.load %arg5[%c0_22, %c0_23, %c0_24] : memref<1x1x128xf32, #tpu.memory_space<vmem>>, vector<1x1x128xf32>
    %84 = vector.shape_cast %83 : vector<1x1x128xf32> to vector<1x128xf32>
    %85 = vector.broadcast %84 : vector<1x128xf32> to vector<32x128xf32>
    %86 = arith.addf %82, %85 : vector<32x128xf32>
    %87 = arith.addf %3, %86 : vector<32x128xf32>
    %c0_25 = arith.constant 0 : index
    %c0_26 = arith.constant 0 : index
    %c0_27 = arith.constant 0 : index
    %88 = vector.load %arg6[%c0_25, %c0_26, %c0_27] : memref<1x128x512xf32, #tpu.memory_space<vmem>>, vector<1x128x512xf32>
    %89 = vector.shape_cast %88 : vector<1x128x512xf32> to vector<128x512xf32>
    %cst_28 = arith.constant dense<0.000000e+00> : vector<32x512xf32>
    %90 = tpu.matmul %87, %89, %cst_28 {dimension_numbers = #tpu.dot_dimension_numbers<[1], [0], [0], [1], [0, 0, 1, 1], [], []>} : vector<32x128xf32>, vector<128x512xf32>, vector<32x512xf32> -> vector<32x512xf32>
    %c0_29 = arith.constant 0 : index
    %c0_30 = arith.constant 0 : index
    %c0_31 = arith.constant 0 : index
    %91 = vector.load %arg7[%c0_29, %c0_30, %c0_31] : memref<1x1x512xf32, #tpu.memory_space<vmem>>, vector<1x1x512xf32>
    %92 = vector.shape_cast %91 : vector<1x1x512xf32> to vector<1x512xf32>
    %93 = vector.broadcast %92 : vector<1x512xf32> to vector<32x512xf32>
    %94 = arith.addf %90, %93 : vector<32x512xf32>
    %c0_32 = arith.constant 0 : index
    %c0_33 = arith.constant 0 : index
    %c0_34 = arith.constant 0 : index
    %95 = vector.load %arg8[%c0_32, %c0_33, %c0_34] : memref<1x512x128xf32, #tpu.memory_space<vmem>>, vector<1x512x128xf32>
    %96 = vector.shape_cast %95 : vector<1x512x128xf32> to vector<512x128xf32>
    %cst_35 = arith.constant dense<0.000000e+00> : vector<32x128xf32>
    %97 = tpu.matmul %94, %96, %cst_35 {dimension_numbers = #tpu.dot_dimension_numbers<[1], [0], [0], [1], [0, 0, 1, 1], [], []>} : vector<32x512xf32>, vector<512x128xf32>, vector<32x128xf32> -> vector<32x128xf32>
    %c0_36 = arith.constant 0 : index
    %c0_37 = arith.constant 0 : index
    %c0_38 = arith.constant 0 : index
    %98 = vector.load %arg9[%c0_36, %c0_37, %c0_38] : memref<1x1x128xf32, #tpu.memory_space<vmem>>, vector<1x1x128xf32>
    %99 = vector.shape_cast %98 : vector<1x1x128xf32> to vector<1x128xf32>
    %100 = vector.broadcast %99 : vector<1x128xf32> to vector<32x128xf32>
    %101 = arith.addf %97, %100 : vector<32x128xf32>
    %102 = arith.addf %87, %101 : vector<32x128xf32>
    %c0_39 = arith.constant 0 : index
    %c0_40 = arith.constant 0 : index
    %103 = vector.load %arg11[%c0_39, %c0_40] : memref<32x128xf32, #tpu.memory_space<vmem>>, vector<32x128xf32>
    tpu.vector_store %arg11[%c0_39, %c0_40], %102 {strides = array<i32>} : memref<32x128xf32, #tpu.memory_space<vmem>>, vector<32x128xf32>,
    %c3_i32 = arith.constant 3 : i32
    %104 = arith.cmpi eq, %arg0, %c3_i32 : i32
    %105 = arith.extui %104 : i1 to i32
    %c0_i32_41 = arith.constant 0 : i32
    %106 = arith.cmpi ne, %105, %c0_i32_41 : i32
    scf.if %106 {
      %c0_42 = arith.constant 0 : index
      %c0_43 = arith.constant 0 : index
      %107 = vector.load %arg10[%c0_42, %c0_43] : memref<32x128xf32, #tpu.memory_space<vmem>>, vector<32x128xf32>
      tpu.vector_store %arg10[%c0_42, %c0_43], %102 {strides = array<i32>} : memref<32x128xf32, #tpu.memory_space<vmem>>, vector<32x128xf32>,
    } else {
    }
    return
  }
  func.func @transform_0(%arg0: i32) -> (i32, i32) {
    %c0_i32 = arith.constant 0 : i32
    %c0_i32_0 = arith.constant 0 : i32
    %c0_i32_1 = arith.constant 0 : i32
    return %c0_i32, %c0_i32_0 : i32, i32
  }
  func.func @transform_1(%arg0: i32) -> (i32, i32, i32) {
    %c0_i32 = arith.constant 0 : i32
    %c0_i32_0 = arith.constant 0 : i32
    %c0_i32_1 = arith.constant 0 : i32
    return %arg0, %c0_i32, %c0_i32_0 : i32, i32, i32
  }
  func.func @transform_2(%arg0: i32) -> (i32, i32, i32) {
    %c0_i32 = arith.constant 0 : i32
    %c0_i32_0 = arith.constant 0 : i32
    %c0_i32_1 = arith.constant 0 : i32
    return %arg0, %c0_i32, %c0_i32_0 : i32, i32, i32
  }
  func.func @transform_3(%arg0: i32) -> (i32, i32, i32) {
    %c0_i32 = arith.constant 0 : i32
    %c0_i32_0 = arith.constant 0 : i32
    %c0_i32_1 = arith.constant 0 : i32
    return %arg0, %c0_i32, %c0_i32_0 : i32, i32, i32
  }
  func.func @transform_4(%arg0: i32) -> (i32, i32, i32) {
    %c0_i32 = arith.constant 0 : i32
    %c0_i32_0 = arith.constant 0 : i32
    %c0_i32_1 = arith.constant 0 : i32
    return %arg0, %c0_i32, %c0_i32_0 : i32, i32, i32
  }
  func.func @transform_5(%arg0: i32) -> (i32, i32, i32) {
    %c0_i32 = arith.constant 0 : i32
    %c0_i32_0 = arith.constant 0 : i32
    %c0_i32_1 = arith.constant 0 : i32
    return %arg0, %c0_i32, %c0_i32_0 : i32, i32, i32
  }
  func.func @transform_6(%arg0: i32) -> (i32, i32, i32) {
    %c0_i32 = arith.constant 0 : i32
    %c0_i32_0 = arith.constant 0 : i32
    %c0_i32_1 = arith.constant 0 : i32
    return %arg0, %c0_i32, %c0_i32_0 : i32, i32, i32
  }
  func.func @transform_7(%arg0: i32) -> (i32, i32, i32) {
    %c0_i32 = arith.constant 0 : i32
    %c0_i32_0 = arith.constant 0 : i32
    %c0_i32_1 = arith.constant 0 : i32
    return %arg0, %c0_i32, %c0_i32_0 : i32, i32, i32
  }
  func.func @transform_8(%arg0: i32) -> (i32, i32, i32) {
    %c0_i32 = arith.constant 0 : i32
    %c0_i32_0 = arith.constant 0 : i32
    %c0_i32_1 = arith.constant 0 : i32
    return %arg0, %c0_i32, %c0_i32_0 : i32, i32, i32
  }
  func.func @transform_9(%arg0: i32) -> (i32, i32) {
    %c0_i32 = arith.constant 0 : i32
    %c0_i32_0 = arith.constant 0 : i32
    %c0_i32_1 = arith.constant 0 : i32
    return %c0_i32, %c0_i32_0 : i32, i32
  }
}

</mosaic_0001>

<llo_original>
// kernel: tpu_custom_call.1
$region0: #{tpu_custom_call.1}
  #allocation0 [shape = 'u32[]', space=smem, size = 0x4, offset = 0x4, fixed_abs, tag = 'smem constant byte address 0x4 - core index']
  #allocation1 [shape = 'u32[144,128]{1,0:T(1,128)}', space=vmem, size = 0x12000, scoped, tag = 'internal scratch']
  #allocation2 [shape = 'f32[32,128]{1,0:T(8,128)}', space=vmem, size = 0x4000, scoped, tag = 'scratch operand']
  %s0 = inlined_call_operand.hbm [shape: f32[32,128], index: 0, kind: input, shape index: {}]
  %s1 = inlined_call_operand.hbm [shape: f32[4,128,384], index: 1, kind: input, shape index: {}]
  %s2 = inlined_call_operand.hbm [shape: f32[4,1,384], index: 2, kind: input, shape index: {}]
  %s3 = inlined_call_operand.hbm [shape: f32[4,128,128], index: 3, kind: input, shape index: {}]
  %s4 = inlined_call_operand.vmem [shape: f32[4,1,128], index: 4, kind: input, shape index: {}]
  %s5 = inlined_call_operand.hbm [shape: f32[4,128,512], index: 5, kind: input, shape index: {}]
  %s6 = inlined_call_operand.vmem [shape: f32[4,1,512], index: 6, kind: input, shape index: {}]
  %s7 = inlined_call_operand.hbm [shape: f32[4,512,128], index: 7, kind: input, shape index: {}]
  %s8 = inlined_call_operand.vmem [shape: f32[4,1,128], index: 8, kind: input, shape index: {}]
  %s9 = inlined_call_operand.hbm [shape: f32[32,128], index: 9, kind: output, shape index: {}]
  %s10 = sld [smem:[#allocation0]]
  $region101: #{tpu_custom_call.1} parent=0
    _
  %s12 = ssub.s32 1, %s10
  %s13 = scalar_select 0, %s12, %s10
  $region1: #{tpu_custom_call.1} parent=0
    #allocation3 [shape = 'u8[16384]{0}', space=vmem, size = 0x4000, scoped, tag = 'input window, operand 0, single buffered']
    #allocation4 [shape = 's32[2]{0}', space=sflag, size = 0x8, scoped, tag = 'scoped memory for tpu_custom_call.1']
    #allocation5 [shape = 's32[2]{0}', space=sflag, size = 0x8, scoped, tag = 'scoped memory for tpu_custom_call.1']
    #allocation6 [shape = 'u8[393216]{0}', space=vmem, size = 0x60000, scoped, tag = 'input window, operand 1']
    #allocation7 [shape = 's32[2]{0}', space=sflag, size = 0x8, scoped, tag = 'scoped memory for tpu_custom_call.1']
    #allocation8 [shape = 'u8[3072]{0}', space=vmem, size = 0xc00, scoped, tag = 'input window, operand 2']
    #allocation9 [shape = 'u8[131072]{0}', space=vmem, size = 0x20000, scoped, tag = 'input window, operand 3']
    #allocation10 [shape = 's32[2]{0}', space=sflag, size = 0x8, scoped, tag = 'scoped memory for tpu_custom_call.1']
    #allocation11 [shape = 'u8[524288]{0}', space=vmem, size = 0x80000, scoped, tag = 'input window, operand 5']
    #allocation12 [shape = 'u8[524288]{0}', space=vmem, size = 0x80000, scoped, tag = 'input window, operand 7']
    #allocation13 [shape = 's32[2]{0}', space=sflag, size = 0x8, scoped, tag = 'scoped memory for tpu_custom_call.1']
    #allocation14 [shape = 'u8[16384]{0}', space=vmem, size = 0x4000, scoped, tag = 'output window, operand 0, single buffered']
    %14 = vsyncpa [#allocation4], 0
    %15 = vsyncpa [#allocation7], 0
    %s16 = scalar_lea.sflag [#allocation7], 1
    %17 = vsyncpa %s16, 0
    %18 = vsyncpa [#allocation10], 0
    %s19 = scalar_lea.sflag [#allocation10], 1
    %20 = vsyncpa %s19, 0
    %21 = vsyncpa [#allocation13], 0
    %s22 = scalar_lea.sflag [#allocation13], 1
    %23 = vsyncpa %s22, 0
    %24 = vsyncpa [#allocation5], 0
    loop: start=0, step=1, limit=6
    $region2: #{tpu_custom_call.1} parent=1 // loop_pre_header
      _
    $region3: #{tpu_custom_call.1} parent=1 // loop_header
      %s26 = sphi 0, %s30
      %p27 = scmp.ge.s32.totalorder %s26, 6
      %s34 = sphi 0, %s34
      %s36 = sphi 0, %s34
      %s37 = sphi 0, %s36
      %s51 = sphi 0, %s37
      %s57 = sphi 0, %s59
      %s60 = sphi 0, %s57
      %s61 = sphi 0, %s60
      %s77 = sphi 0, %s61
      %s83 = sphi 0, %s85
      %s86 = sphi 0, %s83
      %s87 = sphi 0, %s86
      %s103 = sphi 0, %s87
      %s109 = sphi 0, %s111
      %s112 = sphi 0, %s109
      %s113 = sphi 0, %s112
      %s129 = sphi 0, %s113
      %s135 = sphi 0, %s137
      %s138 = sphi 0, %s135
      %s139 = sphi 0, %s138
      %s155 = sphi 0, %s139
      %s161 = sphi 0, %s163
      %s164 = sphi 0, %s161
      %s165 = sphi 0, %s164
      %s181 = sphi 0, %s165
      %s187 = sphi 0, %s189
      %s190 = sphi 0, %s187
      %s191 = sphi 0, %s190
      %s207 = sphi 0, %s191
      %s213 = sphi 0, %s215
      %s216 = sphi 0, %s213
      %s217 = sphi 0, %s216
      %s233 = sphi 0, %s217
      %s239 = sphi 0, %s241
      %s242 = sphi 0, %s239
      %s243 = sphi 0, %s242
      %s259 = sphi 0, %s243
      %s263 = sphi 0, %s263
      %s265 = sphi 0, %s263
      %s266 = sphi 0, %s265
      %s280 = sphi 0, %s266
    $region4: #{tpu_custom_call.1} parent=1 // loop_header_branch
      %29 = sbr.rel (%p27) target = $region8
    $region5: #{tpu_custom_call.1} parent=1 // loop_body
      %s31 = ssub.s32 %s26, 1
      %s32 = ssub.s32 %s26, 2
      %s33 = sadd.s32 %s26, 1
      %s35 = sadd.s32 %s34, 1
      %p38 = scmp.eq.s32.totalorder %s26, 3
      %p39 = scmp.ne.s32.totalorder %s34, %s36
      %p40 = scmp.eq.s32.totalorder %s26, 0
      %p41 = por %p39, %p40
      %p42 = scmp.ne.s32.totalorder %s34, %s36
      %p43 = scmp.eq.s32.totalorder %s31, 3
      %p44 = por %p42, %p43
      %p45 = scmp.ne.s32.totalorder %s36, %s37
      %p46 = scmp.eq.s32.totalorder %s31, 0
      %p47 = por %p45, %p46
      %p48 = scmp.ne.s32.totalorder %s36, %s37
      %p49 = scmp.eq.s32.totalorder %s32, 3
      %p50 = por %p48, %p49
      %p52 = scmp.ne.s32.totalorder %s37, %s51
      %p53 = scmp.eq.s32.totalorder %s32, 0
      %p54 = por %p52, %p53
      %s55 = ssub.s32 %s26, %s33
      %p56 = scmp.eq.s32.totalorder %s55, 0
      %s58 = sadd.s32 %s57, 1
      %s59 = scalar_select %p56, %s57, %s58
      %p62 = pneg %p56
      %p63 = scmp.eq.s32.totalorder %s26, 3
      %p64 = por %p62, %p63
      %p65 = scmp.ne.s32.totalorder %s57, %s60
      %p66 = scmp.eq.s32.totalorder %s26, 0
      %p67 = por %p65, %p66
      %p68 = scmp.ne.s32.totalorder %s57, %s60
      %p69 = scmp.eq.s32.totalorder %s31, 3
      %p70 = por %p68, %p69
      %p71 = scmp.ne.s32.totalorder %s60, %s61
      %p72 = scmp.eq.s32.totalorder %s31, 0
      %p73 = por %p71, %p72
      %p74 = scmp.ne.s32.totalorder %s60, %s61
      %p75 = scmp.eq.s32.totalorder %s32, 3
      %p76 = por %p74, %p75
      %p78 = scmp.ne.s32.totalorder %s61, %s77
      %p79 = scmp.eq.s32.totalorder %s32, 0
      %p80 = por %p78, %p79
      %s81 = ssub.s32 %s26, %s33
      %p82 = scmp.eq.s32.totalorder %s81, 0
      %s84 = sadd.s32 %s83, 1
      %s85 = scalar_select %p82, %s83, %s84
      %p88 = pneg %p82
      %p89 = scmp.eq.s32.totalorder %s26, 3
      %p90 = por %p88, %p89
      %p91 = scmp.ne.s32.totalorder %s83, %s86
      %p92 = scmp.eq.s32.totalorder %s26, 0
      %p93 = por %p91, %p92
      %p94 = scmp.ne.s32.totalorder %s83, %s86
      %p95 = scmp.eq.s32.totalorder %s31, 3
      %p96 = por %p94, %p95
      %p97 = scmp.ne.s32.totalorder %s86, %s87
      %p98 = scmp.eq.s32.totalorder %s31, 0
      %p99 = por %p97, %p98
      %p100 = scmp.ne.s32.totalorder %s86, %s87
      %p101 = scmp.eq.s32.totalorder %s32, 3
      %p102 = por %p100, %p101
      %p104 = scmp.ne.s32.totalorder %s87, %s103
      %p105 = scmp.eq.s32.totalorder %s32, 0
      %p106 = por %p104, %p105
      %s107 = ssub.s32 %s26, %s33
      %p108 = scmp.eq.s32.totalorder %s107, 0
      %s110 = sadd.s32 %s109, 1
      %s111 = scalar_select %p108, %s109, %s110
      %p114 = pneg %p108
      %p115 = scmp.eq.s32.totalorder %s26, 3
      %p116 = por %p114, %p115
      %p117 = scmp.ne.s32.totalorder %s109, %s112
      %p118 = scmp.eq.s32.totalorder %s26, 0
      %p119 = por %p117, %p118
      %p120 = scmp.ne.s32.totalorder %s109, %s112
      %p121 = scmp.eq.s32.totalorder %s31, 3
      %p122 = por %p120, %p121
      %p123 = scmp.ne.s32.totalorder %s112, %s113
      %p124 = scmp.eq.s32.totalorder %s31, 0
      %p125 = por %p123, %p124
      %p126 = scmp.ne.s32.totalorder %s112, %s113
      %p127 = scmp.eq.s32.totalorder %s32, 3
      %p128 = por %p126, %p127
      %p130 = scmp.ne.s32.totalorder %s113, %s129
      %p131 = scmp.eq.s32.totalorder %s32, 0
      %p132 = por %p130, %p131
      %s133 = ssub.s32 %s26, %s33
      %p134 = scmp.eq.s32.totalorder %s133, 0
      %s136 = sadd.s32 %s135, 1
      %s137 = scalar_select %p134, %s135, %s136
      %p140 = pneg %p134
      %p141 = scmp.eq.s32.totalorder %s26, 3
      %p142 = por %p140, %p141
      %p143 = scmp.ne.s32.totalorder %s135, %s138
      %p144 = scmp.eq.s32.totalorder %s26, 0
      %p145 = por %p143, %p144
      %p146 = scmp.ne.s32.totalorder %s135, %s138
      %p147 = scmp.eq.s32.totalorder %s31, 3
      %p148 = por %p146, %p147
      %p149 = scmp.ne.s32.totalorder %s138, %s139
      %p150 = scmp.eq.s32.totalorder %s31, 0
      %p151 = por %p149, %p150
      %p152 = scmp.ne.s32.totalorder %s138, %s139
      %p153 = scmp.eq.s32.totalorder %s32, 3
      %p154 = por %p152, %p153
      %p156 = scmp.ne.s32.totalorder %s139, %s155
      %p157 = scmp.eq.s32.totalorder %s32, 0
      %p158 = por %p156, %p157
      %s159 = ssub.s32 %s26, %s33
      %p160 = scmp.eq.s32.totalorder %s159, 0
      %s162 = sadd.s32 %s161, 1
      %s163 = scalar_select %p160, %s161, %s162
      %p166 = pneg %p160
      %p167 = scmp.eq.s32.totalorder %s26, 3
      %p168 = por %p166, %p167
      %p169 = scmp.ne.s32.totalorder %s161, %s164
      %p170 = scmp.eq.s32.totalorder %s26, 0
      %p171 = por %p169, %p170
      %p172 = scmp.ne.s32.totalorder %s161, %s164
      %p173 = scmp.eq.s32.totalorder %s31, 3
      %p174 = por %p172, %p173
      %p175 = scmp.ne.s32.totalorder %s164, %s165
      %p176 = scmp.eq.s32.totalorder %s31, 0
      %p177 = por %p175, %p176
      %p178 = scmp.ne.s32.totalorder %s164, %s165
      %p179 = scmp.eq.s32.totalorder %s32, 3
      %p180 = por %p178, %p179
      %p182 = scmp.ne.s32.totalorder %s165, %s181
      %p183 = scmp.eq.s32.totalorder %s32, 0
      %p184 = por %p182, %p183
      %s185 = ssub.s32 %s26, %s33
      %p186 = scmp.eq.s32.totalorder %s185, 0
      %s188 = sadd.s32 %s187, 1
      %s189 = scalar_select %p186, %s187, %s188
      %p192 = pneg %p186
      %p193 = scmp.eq.s32.totalorder %s26, 3
      %p194 = por %p192, %p193
      %p195 = scmp.ne.s32.totalorder %s187, %s190
      %p196 = scmp.eq.s32.totalorder %s26, 0
      %p197 = por %p195, %p196
      %p198 = scmp.ne.s32.totalorder %s187, %s190
      %p199 = scmp.eq.s32.totalorder %s31, 3
      %p200 = por %p198, %p199
      %p201 = scmp.ne.s32.totalorder %s190, %s191
      %p202 = scmp.eq.s32.totalorder %s31, 0
      %p203 = por %p201, %p202
      %p204 = scmp.ne.s32.totalorder %s190, %s191
      %p205 = scmp.eq.s32.totalorder %s32, 3
      %p206 = por %p204, %p205
      %p208 = scmp.ne.s32.totalorder %s191, %s207
      %p209 = scmp.eq.s32.totalorder %s32, 0
      %p210 = por %p208, %p209
      %s211 = ssub.s32 %s26, %s33
      %p212 = scmp.eq.s32.totalorder %s211, 0
      %s214 = sadd.s32 %s213, 1
      %s215 = scalar_select %p212, %s213, %s214
      %p218 = pneg %p212
      %p219 = scmp.eq.s32.totalorder %s26, 3
      %p220 = por %p218, %p219
      %p221 = scmp.ne.s32.totalorder %s213, %s216
      %p222 = scmp.eq.s32.totalorder %s26, 0
      %p223 = por %p221, %p222
      %p224 = scmp.ne.s32.totalorder %s213, %s216
      %p225 = scmp.eq.s32.totalorder %s31, 3
      %p226 = por %p224, %p225
      %p227 = scmp.ne.s32.totalorder %s216, %s217
      %p228 = scmp.eq.s32.totalorder %s31, 0
      %p229 = por %p227, %p228
      %p230 = scmp.ne.s32.totalorder %s216, %s217
      %p231 = scmp.eq.s32.totalorder %s32, 3
      %p232 = por %p230, %p231
      %p234 = scmp.ne.s32.totalorder %s217, %s233
      %p235 = scmp.eq.s32.totalorder %s32, 0
      %p236 = por %p234, %p235
      %s237 = ssub.s32 %s26, %s33
      %p238 = scmp.eq.s32.totalorder %s237, 0
      %s240 = sadd.s32 %s239, 1
      %s241 = scalar_select %p238, %s239, %s240
      %p244 = pneg %p238
      %p245 = scmp.eq.s32.totalorder %s26, 3
      %p246 = por %p244, %p245
      %p247 = scmp.ne.s32.totalorder %s239, %s242
      %p248 = scmp.eq.s32.totalorder %s26, 0
      %p249 = por %p247, %p248
      %p250 = scmp.ne.s32.totalorder %s239, %s242
      %p251 = scmp.eq.s32.totalorder %s31, 3
      %p252 = por %p250, %p251
      %p253 = scmp.ne.s32.totalorder %s242, %s243
      %p254 = scmp.eq.s32.totalorder %s31, 0
      %p255 = por %p253, %p254
      %p256 = scmp.ne.s32.totalorder %s242, %s243
      %p257 = scmp.eq.s32.totalorder %s32, 3
      %p258 = por %p256, %p257
      %p260 = scmp.ne.s32.totalorder %s243, %s259
      %p261 = scmp.eq.s32.totalorder %s32, 0
      %p262 = por %p260, %p261
      %s264 = sadd.s32 %s263, 1
      %p267 = scmp.eq.s32.totalorder %s26, 3
      %p268 = scmp.ne.s32.totalorder %s263, %s265
      %p269 = scmp.eq.s32.totalorder %s26, 0
      %p270 = por %p268, %p269
      %p271 = scmp.ne.s32.totalorder %s263, %s265
      %p272 = scmp.eq.s32.totalorder %s31, 3
      %p273 = por %p271, %p272
      %p274 = scmp.ne.s32.totalorder %s265, %s266
      %p275 = scmp.eq.s32.totalorder %s31, 0
      %p276 = por %p274, %p275
      %p277 = scmp.ne.s32.totalorder %s265, %s266
      %p278 = scmp.eq.s32.totalorder %s32, 3
      %p279 = por %p277, %p278
      %p281 = scmp.ne.s32.totalorder %s266, %s280
      %p282 = scmp.eq.s32.totalorder %s32, 0
      %p283 = por %p281, %p282
      %p284 = scmp.le.s32.totalorder 1, %s26
      %p285 = scmp.lt.s32.totalorder %s26, 5
      %p286 = pnand %p284, %p285
      %p287 = pneg %p286
      // Predicated region
      $region9: #{tpu_custom_call.1} parent=5 // pred_check
        _
      $region10: #{tpu_custom_call.1} parent=5 // pred_check_branch
        %289 = sbr.rel (%p286) target = $region12
      $region11: #{tpu_custom_call.1} parent=5 // pred_region
        %s290 = ssub.s32 %s26, 1
        // Predicated region
        $region13: #{tpu_custom_call.1} parent=11 // pred_check
          %p291 = pneg %p47
        $region14: #{tpu_custom_call.1} parent=11 // pred_check_branch
          %293 = sbr.rel (%p291) target = $region16
        $region15: #{tpu_custom_call.1} parent=11 // pred_region
          %s295 = ssub.s32 512, 512
          %296 = vsyncadd [#allocation4], %s295
          %s297 = sshll.u32 [#allocation3], 4
          %s298 = int_to_ptr.vmem [resolvable:$true] %s297
          %303 = dma.hbm_to_vmem [thread:$0]  %s0, 512, %s298, [#allocation4], 128, 128, 8
        $region16: #{tpu_custom_call.1} parent=11 // pred_fallthru
          _
      $region12: #{tpu_custom_call.1} parent=5 // pred_fallthru
        _
      %p304 = scmp.lt.s32.totalorder %s26, 4
      // Predicated region
      $region17: #{tpu_custom_call.1} parent=5 // pred_check
        %p305 = pneg %p304
      $region18: #{tpu_custom_call.1} parent=5 // pred_check_branch
        %307 = sbr.rel (%p305) target = $region20
      $region19: #{tpu_custom_call.1} parent=5 // pred_region
        // Predicated region
        $region21: #{tpu_custom_call.1} parent=19 // pred_check
          %p308 = pneg %p67
        $region22: #{tpu_custom_call.1} parent=19 // pred_check_branch
          %310 = sbr.rel (%p308) target = $region24
        $region23: #{tpu_custom_call.1} parent=19 // pred_region
          %s311 = sand.u32 %s26, 1
          %s312 = scalar_lea.sflag [#allocation7], %s311
          %s313 = sand.u32 %s57, 1
          %s314 = smul.addr %s313, 384
          %s315 = scalar_lea.vmem [#allocation6], %s314
          %s317 = ssub.s32 6144, 6144
          %318 = vsyncadd %s312, %s317
          %s319 = smul.addr %s26, 48
          %s320 = smul.addr %s319, 128
          %s321 = scalar_lea.hbm %s1, %s320
          %s322 = sshll.u32 %s315, 4
          %s323 = int_to_ptr.vmem [resolvable:$true] %s322
          %328 = dma.hbm_to_vmem [thread:$0]  %s321, 6144, %s323, %s312, 384, 384, 24
        $region24: #{tpu_custom_call.1} parent=19 // pred_fallthru
          _
        // Predicated region
        $region25: #{tpu_custom_call.1} parent=19 // pred_check
          %p329 = pneg %p93
        $region26: #{tpu_custom_call.1} parent=19 // pred_check_branch
          %331 = sbr.rel (%p329) target = $region28
        $region27: #{tpu_custom_call.1} parent=19 // pred_region
          %s332 = sand.u32 %s26, 1
          %s333 = scalar_lea.sflag [#allocation7], %s332
          %s334 = sand.u32 %s83, 1
          %s335 = smul.addr %s334, 3
          %s336 = scalar_lea.vmem [#allocation8], %s335
          %s338 = ssub.s32 48, 48
          %339 = vsyncadd %s333, %s338
          %s340 = smul.addr %s26, 3
          %s341 = smul.addr %s340, 16
          %s342 = scalar_lea.hbm %s2, %s341
          %s344 = sshll.u32 %s336, 4
          %s345 = int_to_ptr.vmem [resolvable:$true] %s344
          %347 = dma.hbm_to_vmem [thread:$0]  %s342, 48, %s345, %s333
        $region28: #{tpu_custom_call.1} parent=19 // pred_fallthru
          _
        // Predicated region
        $region29: #{tpu_custom_call.1} parent=19 // pred_check
          %p348 = pneg %p119
        $region30: #{tpu_custom_call.1} parent=19 // pred_check_branch
          %350 = sbr.rel (%p348) target = $region32
        $region31: #{tpu_custom_call.1} parent=19 // pred_region
          %s351 = sand.u32 %s26, 1
          %s352 = scalar_lea.sflag [#allocation10], %s351
          %s353 = sand.u32 %s109, 1
          %s354 = smul.addr %s353, 128
          %s355 = scalar_lea.vmem [#allocation9], %s354
          %s357 = ssub.s32 2048, 2048
          %358 = vsyncadd %s352, %s357
          %s359 = smul.addr %s26, 16
          %s360 = smul.addr %s359, 128
          %s361 = scalar_lea.hbm %s3, %s360
          %s362 = sshll.u32 %s355, 4
          %s363 = int_to_ptr.vmem [resolvable:$true] %s362
          %368 = dma.hbm_to_vmem [thread:$0]  %s361, 2048, %s363, %s352, 128, 128, 8
        $region32: #{tpu_custom_call.1} parent=19 // pred_fallthru
          _
        // Predicated region
        $region33: #{tpu_custom_call.1} parent=19 // pred_check
          %p369 = pneg %p145
        $region34: #{tpu_custom_call.1} parent=19 // pred_check_branch
          %371 = sbr.rel (%p369) target = $region36
        $region35: #{tpu_custom_call.1} parent=19 // pred_region
          %p372 = scmp.lt.s32.totalorder %s26, 3
          %s373 = scalar_select %p372, %s26, 3
          %s374 = scalar_lea.vmem %s4, %s373
        $region36: #{tpu_custom_call.1} parent=19 // pred_fallthru
          _
        // Predicated region
        $region37: #{tpu_custom_call.1} parent=19 // pred_check
          %p375 = pneg %p171
        $region38: #{tpu_custom_call.1} parent=19 // pred_check_branch
          %377 = sbr.rel (%p375) target = $region40
        $region39: #{tpu_custom_call.1} parent=19 // pred_region
          %s378 = sand.u32 %s26, 1
          %s379 = scalar_lea.sflag [#allocation10], %s378
          %s380 = sand.u32 %s161, 1
          %s381 = smul.addr %s380, 512
          %s382 = scalar_lea.vmem [#allocation11], %s381
          %s384 = ssub.s32 8192, 8192
          %385 = vsyncadd %s379, %s384
          %s386 = smul.addr %s26, 64
          %s387 = smul.addr %s386, 128
          %s388 = scalar_lea.hbm %s5, %s387
          %s389 = sshll.u32 %s382, 4
          %s390 = int_to_ptr.vmem [resolvable:$true] %s389
          %395 = dma.hbm_to_vmem [thread:$0]  %s388, 8192, %s390, %s379, 512, 512, 32
        $region40: #{tpu_custom_call.1} parent=19 // pred_fallthru
          _
        // Predicated region
        $region41: #{tpu_custom_call.1} parent=19 // pred_check
          %p396 = pneg %p197
        $region42: #{tpu_custom_call.1} parent=19 // pred_check_branch
          %398 = sbr.rel (%p396) target = $region44
        $region43: #{tpu_custom_call.1} parent=19 // pred_region
          %p399 = scmp.lt.s32.totalorder %s26, 3
          %s400 = scalar_select %p399, %s26, 3
          %s401 = smul.addr %s400, 4
          %s402 = scalar_lea.vmem %s6, %s401
        $region44: #{tpu_custom_call.1} parent=19 // pred_fallthru
          _
        // Predicated region
        $region45: #{tpu_custom_call.1} parent=19 // pred_check
          %p403 = pneg %p223
        $region46: #{tpu_custom_call.1} parent=19 // pred_check_branch
          %405 = sbr.rel (%p403) target = $region48
        $region47: #{tpu_custom_call.1} parent=19 // pred_region
          %s406 = sand.u32 %s213, 1
          %s407 = scalar_lea.sflag [#allocation13], %s406
          %s408 = sand.u32 %s213, 1
          %s409 = smul.addr %s408, 512
          %s410 = scalar_lea.vmem [#allocation12], %s409
          %s412 = ssub.s32 8192, 8192
          %413 = vsyncadd %s407, %s412
          %s414 = smul.addr %s26, 64
          %s415 = smul.addr %s414, 128
          %s416 = scalar_lea.hbm %s7, %s415
          %s417 = sshll.u32 %s410, 4
          %s418 = int_to_ptr.vmem [resolvable:$true] %s417
          %423 = dma.hbm_to_vmem [thread:$0]  %s416, 8192, %s418, %s407, 128, 128, 8
        $region48: #{tpu_custom_call.1} parent=19 // pred_fallthru
          _
        // Predicated region
        $region49: #{tpu_custom_call.1} parent=19 // pred_check
          %p424 = pneg %p249
        $region50: #{tpu_custom_call.1} parent=19 // pred_check_branch
          %426 = sbr.rel (%p424) target = $region52
        $region51: #{tpu_custom_call.1} parent=19 // pred_region
          %p427 = scmp.lt.s32.totalorder %s26, 3
          %s428 = scalar_select %p427, %s26, 3
          %s429 = scalar_lea.vmem %s8, %s428
        $region52: #{tpu_custom_call.1} parent=19 // pred_fallthru
          _
      $region20: #{tpu_custom_call.1} parent=5 // pred_fallthru
        _
      %p430 = scmp.le.s32.totalorder 1, %s26
      %p431 = scmp.lt.s32.totalorder %s26, 5
      %p432 = pnand %p430, %p431
      %p433 = pneg %p432
      // Predicated region
      $region53: #{tpu_custom_call.1} parent=5 // pred_check
        _
      $region54: #{tpu_custom_call.1} parent=5 // pred_check_branch
        %435 = sbr.rel (%p432) target = $region56
      $region55: #{tpu_custom_call.1} parent=5 // pred_region
        %s436 = ssub.s32 %s26, 1
        // Predicated region
        $region57: #{tpu_custom_call.1} parent=55 // pred_check
          %p437 = pneg %p47
        $region58: #{tpu_custom_call.1} parent=55 // pred_check_branch
          %439 = sbr.rel (%p437) target = $region60
        $region59: #{tpu_custom_call.1} parent=55 // pred_region
          %440 = dma.done [#allocation4], 512
        $region60: #{tpu_custom_call.1} parent=55 // pred_fallthru
          _
        %s441 = sand.u32 %s31, 1
        %s442 = scalar_lea.sflag [#allocation7], %s441
        %s443 = sand.u32 %s60, 1
        %s444 = smul.addr %s443, 384
        %s445 = scalar_lea.vmem [#allocation6], %s444
        // Predicated region
        $region61: #{tpu_custom_call.1} parent=55 // pred_check
          %p446 = pneg %p73
        $region62: #{tpu_custom_call.1} parent=55 // pred_check_branch
          %448 = sbr.rel (%p446) target = $region64
        $region63: #{tpu_custom_call.1} parent=55 // pred_region
          %449 = dma.done %s442, 6144
        $region64: #{tpu_custom_call.1} parent=55 // pred_fallthru
          _
        %s450 = sand.u32 %s31, 1
        %s451 = scalar_lea.sflag [#allocation7], %s450
        %s452 = sand.u32 %s86, 1
        %s453 = smul.addr %s452, 3
        %s454 = scalar_lea.vmem [#allocation8], %s453
        // Predicated region
        $region65: #{tpu_custom_call.1} parent=55 // pred_check
          %p455 = pneg %p99
        $region66: #{tpu_custom_call.1} parent=55 // pred_check_branch
          %457 = sbr.rel (%p455) target = $region68
        $region67: #{tpu_custom_call.1} parent=55 // pred_region
          %458 = dma.done %s451, 48
        $region68: #{tpu_custom_call.1} parent=55 // pred_fallthru
          _
        %s459 = sand.u32 %s31, 1
        %s460 = scalar_lea.sflag [#allocation10], %s459
        %s461 = sand.u32 %s112, 1
        %s462 = smul.addr %s461, 128
        %s463 = scalar_lea.vmem [#allocation9], %s462
        // Predicated region
        $region69: #{tpu_custom_call.1} parent=55 // pred_check
          %p464 = pneg %p125
        $region70: #{tpu_custom_call.1} parent=55 // pred_check_branch
          %466 = sbr.rel (%p464) target = $region72
        $region71: #{tpu_custom_call.1} parent=55 // pred_region
          %467 = dma.done %s460, 2048
        $region72: #{tpu_custom_call.1} parent=55 // pred_fallthru
          _
        %s468 = sand.u32 %s31, 1
        %s469 = scalar_lea.sflag [#allocation10], %s468
        %s470 = sand.u32 %s164, 1
        %s471 = smul.addr %s470, 512
        %s472 = scalar_lea.vmem [#allocation11], %s471
        // Predicated region
        $region73: #{tpu_custom_call.1} parent=55 // pred_check
          %p473 = pneg %p177
        $region74: #{tpu_custom_call.1} parent=55 // pred_check_branch
          %475 = sbr.rel (%p473) target = $region76
        $region75: #{tpu_custom_call.1} parent=55 // pred_region
          %476 = dma.done %s469, 8192
        $region76: #{tpu_custom_call.1} parent=55 // pred_fallthru
          _
        %s477 = sand.u32 %s216, 1
        %s478 = scalar_lea.sflag [#allocation13], %s477
        %s479 = sand.u32 %s216, 1
        %s480 = smul.addr %s479, 512
        %s481 = scalar_lea.vmem [#allocation12], %s480
        // Predicated region
        $region77: #{tpu_custom_call.1} parent=55 // pred_check
          %p482 = pneg %p229
        $region78: #{tpu_custom_call.1} parent=55 // pred_check_branch
          %484 = sbr.rel (%p482) target = $region80
        $region79: #{tpu_custom_call.1} parent=55 // pred_region
          %485 = dma.done %s478, 8192
        $region80: #{tpu_custom_call.1} parent=55 // pred_fallthru
          _
        %p486 = pneg %p47
        %p487 = pneg %p44
        %s488 = sand.u32 %s31, 1
        %s489 = scalar_lea.sflag [#allocation7], %s488
        %s490 = sand.u32 %s60, 1
        %s491 = smul.addr %s490, 384
        %s492 = scalar_lea.vmem [#allocation6], %s491
        %p493 = pneg %p73
        %p494 = pneg %p70
        %s495 = sand.u32 %s31, 1
        %s496 = scalar_lea.sflag [#allocation7], %s495
        %s497 = sand.u32 %s86, 1
        %s498 = smul.addr %s497, 3
        %s499 = scalar_lea.vmem [#allocation8], %s498
        %p500 = pneg %p99
        %p501 = pneg %p96
        %s502 = sand.u32 %s31, 1
        %s503 = scalar_lea.sflag [#allocation10], %s502
        %s504 = sand.u32 %s112, 1
        %s505 = smul.addr %s504, 128
        %s506 = scalar_lea.vmem [#allocation9], %s505
        %p507 = pneg %p125
        %p508 = pneg %p122
        %p509 = scmp.lt.s32.totalorder %s31, 3
        %s510 = scalar_select %p509, %s31, 3
        %s511 = scalar_lea.vmem %s4, %s510
        %p512 = pneg %p151
        %p513 = pneg %p148
        %s514 = sand.u32 %s31, 1
        %s515 = scalar_lea.sflag [#allocation10], %s514
        %s516 = sand.u32 %s164, 1
        %s517 = smul.addr %s516, 512
        %s518 = scalar_lea.vmem [#allocation11], %s517
        %p519 = pneg %p177
        %p520 = pneg %p174
        %p521 = scmp.lt.s32.totalorder %s31, 3
        %s522 = scalar_select %p521, %s31, 3
        %s523 = smul.addr %s522, 4
        %s524 = scalar_lea.vmem %s6, %s523
        %p525 = pneg %p203
        %p526 = pneg %p200
        %s527 = sand.u32 %s216, 1
        %s528 = scalar_lea.sflag [#allocation13], %s527
        %s529 = sand.u32 %s216, 1
        %s530 = smul.addr %s529, 512
        %s531 = scalar_lea.vmem [#allocation12], %s530
        %p532 = pneg %p229
        %p533 = pneg %p226
        %p534 = scmp.lt.s32.totalorder %s31, 3
        %s535 = scalar_select %p534, %s31, 3
        %s536 = scalar_lea.vmem %s8, %s535
        %p537 = pneg %p255
        %p538 = pneg %p252
        %p539 = pneg %p276
        %p540 = pneg %p273
        %p541 = scmp.lt.s32.totalorder %s31, 3
        %s542 = scalar_select %p541, %s31, 3
        %s543 = scalar_lea.vmem %s4, %s542
        %p544 = scmp.lt.s32.totalorder %s31, 3
        %s545 = scalar_select %p544, %s31, 3
        %s546 = smul.addr %s545, 4
        %s547 = scalar_lea.vmem %s6, %s546
        %p548 = scmp.lt.s32.totalorder %s31, 3
        %s549 = scalar_select %p548, %s31, 3
        %s550 = scalar_lea.vmem %s8, %s549
        %p551 = scmp.eq.s32.totalorder %s31, 0
        // Predicated region
        $region81: #{tpu_custom_call.1} parent=55 // pred_check
          %p552 = pneg %p551
        $region82: #{tpu_custom_call.1} parent=55 // pred_check_branch
          %554 = sbr.rel (%p552) target = $region84
        $region83: #{tpu_custom_call.1} parent=55 // pred_region
          %v555 = vld [vmem:[#allocation3] sm:$0xff]
          %v556 = vld [vmem:[#allocation3 + $0x8] sm:$0xff]
          %v557 = vld [vmem:[#allocation3 + $0x10] sm:$0xff]
          %v558 = vld [vmem:[#allocation3 + $0x18] sm:$0xff]
          %559 = vst [vmem:[#allocation2] sm:$0xff] %v555
          %560 = vst [vmem:[#allocation2 + $0x8] sm:$0xff] %v556
          %561 = vst [vmem:[#allocation2 + $0x10] sm:$0xff] %v557
          %562 = vst [vmem:[#allocation2 + $0x18] sm:$0xff] %v558
        $region84: #{tpu_custom_call.1} parent=55 // pred_fallthru
          _
        %v563 = vld [vmem:[#allocation2] sm:$0xff]
        %v564 = vld [vmem:[#allocation2 + $0x8] sm:$0xff]
        %v565 = vld [vmem:[#allocation2 + $0x10] sm:$0xff]
        %v566 = vld [vmem:[#allocation2 + $0x18] sm:$0xff]
        %v567 = vld [vmem:[%s445] sm:$0xff]
        %v568 = vld [vmem:[%s445 + $0x8] sm:$0xff]
        %v569 = vld [vmem:[%s445 + $0x10] sm:$0xff]
        %v570 = vld [vmem:[%s445 + $0x18] sm:$0xff]
        %v571 = vld [vmem:[%s445 + $0x20] sm:$0xff]
        %v572 = vld [vmem:[%s445 + $0x28] sm:$0xff]
        %v573 = vld [vmem:[%s445 + $0x30] sm:$0xff]
        %v574 = vld [vmem:[%s445 + $0x38] sm:$0xff]
        %v575 = vld [vmem:[%s445 + $0x40] sm:$0xff]
        %v576 = vld [vmem:[%s445 + $0x48] sm:$0xff]
        %v577 = vld [vmem:[%s445 + $0x50] sm:$0xff]
        %v578 = vld [vmem:[%s445 + $0x58] sm:$0xff]
        %v579 = vld [vmem:[%s445 + $0x60] sm:$0xff]
        %v580 = vld [vmem:[%s445 + $0x68] sm:$0xff]
        %v581 = vld [vmem:[%s445 + $0x70] sm:$0xff]
        %v582 = vld [vmem:[%s445 + $0x78] sm:$0xff]
        %v583 = vld [vmem:[%s445 + $0x80] sm:$0xff]
        %v584 = vld [vmem:[%s445 + $0x88] sm:$0xff]
        %v585 = vld [vmem:[%s445 + $0x90] sm:$0xff]
        %v586 = vld [vmem:[%s445 + $0x98] sm:$0xff]
        %v587 = vld [vmem:[%s445 + $0xa0] sm:$0xff]
        %v588 = vld [vmem:[%s445 + $0xa8] sm:$0xff]
        %v589 = vld [vmem:[%s445 + $0xb0] sm:$0xff]
        %v590 = vld [vmem:[%s445 + $0xb8] sm:$0xff]
        %v591 = vld [vmem:[%s445 + $0xc0] sm:$0xff]
        %v592 = vld [vmem:[%s445 + $0xc8] sm:$0xff]
        %v593 = vld [vmem:[%s445 + $0xd0] sm:$0xff]
        %v594 = vld [vmem:[%s445 + $0xd8] sm:$0xff]
        %v595 = vld [vmem:[%s445 + $0xe0] sm:$0xff]
        %v596 = vld [vmem:[%s445 + $0xe8] sm:$0xff]
        %v597 = vld [vmem:[%s445 + $0xf0] sm:$0xff]
        %v598 = vld [vmem:[%s445 + $0xf8] sm:$0xff]
        %v599 = vld [vmem:[%s445 + $0x100] sm:$0xff]
        %v600 = vld [vmem:[%s445 + $0x108] sm:$0xff]
        %v601 = vld [vmem:[%s445 + $0x110] sm:$0xff]
        %v602 = vld [vmem:[%s445 + $0x118] sm:$0xff]
        %v603 = vld [vmem:[%s445 + $0x120] sm:$0xff]
        %v604 = vld [vmem:[%s445 + $0x128] sm:$0xff]
        %v605 = vld [vmem:[%s445 + $0x130] sm:$0xff]
        %v606 = vld [vmem:[%s445 + $0x138] sm:$0xff]
        %v607 = vld [vmem:[%s445 + $0x140] sm:$0xff]
        %v608 = vld [vmem:[%s445 + $0x148] sm:$0xff]
        %v609 = vld [vmem:[%s445 + $0x150] sm:$0xff]
        %v610 = vld [vmem:[%s445 + $0x158] sm:$0xff]
        %v611 = vld [vmem:[%s445 + $0x160] sm:$0xff]
        %v612 = vld [vmem:[%s445 + $0x168] sm:$0xff]
        %v613 = vld [vmem:[%s445 + $0x170] sm:$0xff]
        %v614 = vld [vmem:[%s445 + $0x178] sm:$0xff]
        %v615 = vld [vmem:[%s454] sm:$0x7]
        %v617 = vlaneseq
        %v618 = vshrl.u32 %v617, 7
        %v619 = vsub.s32 0, %v618
        %v620 = vrot.slane %v615, %v619
        %v621 = vlaneseq
        %v622 = vshrl.u32 %v621, 7
        %v623 = vsub.s32 1, %v622
        %v624 = vrot.slane %v615, %v623
        %v625 = vlaneseq
        %v626 = vshrl.u32 %v625, 7
        %v627 = vsub.s32 2, %v626
        %v628 = vrot.slane %v615, %v627
        %632 = vmatprep.subr.mxu0 %v568
        %633 = vmatpush1.msra.mxu0 %v567
        %634 = vmatprep.subr.mxu0 %v571
        %635 = vmatpush1.msra.mxu0 %v570
        %636 = vmatprep.subr.mxu0 %v574
        %637 = vmatpush1.msra.mxu0 %v573
        %638 = vmatprep.subr.mxu0 %v577
        %639 = vmatpush1.msra.mxu0 %v576
        %640 = vmatprep.subr.mxu0 %v580
        %641 = vmatpush1.msra.mxu0 %v579
        %642 = vmatprep.subr.mxu0 %v583
        %643 = vmatpush1.msra.mxu0 %v582
        %644 = vmatprep.subr.mxu0 %v586
        %645 = vmatpush1.msra.mxu0 %v585
        %646 = vmatprep.subr.mxu0 %v589
        %647 = vmatpush1.msra.mxu0 %v588
        %648 = vmatprep.subr.mxu0 %v592
        %649 = vmatpush1.msra.mxu0 %v591
        %650 = vmatprep.subr.mxu0 %v595
        %651 = vmatpush1.msra.mxu0 %v594
        %652 = vmatprep.subr.mxu0 %v598
        %653 = vmatpush1.msra.mxu0 %v597
        %654 = vmatprep.subr.mxu0 %v601
        %655 = vmatpush1.msra.mxu0 %v600
        %656 = vmatprep.subr.mxu0 %v604
        %657 = vmatpush1.msra.mxu0 %v603
        %658 = vmatprep.subr.mxu0 %v607
        %659 = vmatpush1.msra.mxu0 %v606
        %660 = vmatprep.subr.mxu0 %v610
        %661 = vmatpush1.msra.mxu0 %v609
        %662 = vmatprep.subr.mxu0 %v613
        %663 = vmatpush1.msra.mxu0 %v612
        %664 = vmatprep.subr.mxu0 0.0
        %665 = vmatpush1.msra.mxu0 0.0
        %666 = vmatprep.subr.mxu0 0.0
        %667 = vmatpush1.msra.mxu0 0.0
        %668 = vmatprep.subr.mxu0 0.0
        %669 = vmatpush1.msra.mxu0 0.0
        %670 = vmatprep.subr.mxu0 0.0
        %671 = vmatpush1.msra.mxu0 0.0
        %672 = vmatprep.subr.mxu0 0.0
        %673 = vmatpush1.msra.mxu0 0.0
        %674 = vmatprep.subr.mxu0 0.0
        %675 = vmatpush1.msra.mxu0 0.0
        %676 = vmatprep.subr.mxu0 0.0
        %677 = vmatpush1.msra.mxu0 0.0
        %678 = vmatprep.subr.mxu0 0.0
        %679 = vmatpush1.msra.mxu0 0.0
        %680 = vmatprep.subr.mxu0 0.0
        %681 = vmatpush1.msra.mxu0 0.0
        %682 = vmatprep.subr.mxu0 0.0
        %683 = vmatpush1.msra.mxu0 0.0
        %684 = vmatprep.subr.mxu0 0.0
        %685 = vmatpush1.msra.mxu0 0.0
        %686 = vmatprep.subr.mxu0 0.0
        %687 = vmatpush1.msra.mxu0 0.0
        %688 = vmatprep.subr.mxu0 0.0
        %689 = vmatpush1.msra.mxu0 0.0
        %690 = vmatprep.subr.mxu0 0.0
        %691 = vmatpush1.msra.mxu0 0.0
        %692 = vmatprep.subr.mxu0 0.0
        %693 = vmatpush1.msra.mxu0 0.0
        %694 = vmatprep.subr.mxu0 0.0
        %695 = vmatpush1.msra.mxu0 0.0
        %696 = vmatprep.mubr.f32.mxu0 0.0
        %697 = vmatmul.mubr.f32.gmra.mrb[0].mxu0 %v563
        %v698 = vpop.f32.mrb[0].mxu0
        %v699 = vadd.f32 %v620, %v698
        %v700 = vpop.f32.mrb[0].mxu0
        %v701 = vadd.f32 %v624, %v700
        %702 = vmatprep.mubr.f32.mxu0 0.0
        %703 = vmatmul.mubr.f32.gmra.mrb[0].mxu0 %v564
        %v704 = vpop.f32.mrb[0].mxu0
        %v705 = vadd.f32 %v620, %v704
        %v706 = vpop.f32.mrb[0].mxu0
        %v707 = vadd.f32 %v624, %v706
        %708 = vmatprep.mubr.f32.mxu0 0.0
        %709 = vmatmul.mubr.f32.gmra.mrb[0].mxu0 %v565
        %v710 = vpop.f32.mrb[0].mxu0
        %v711 = vadd.f32 %v620, %v710
        %v712 = vpop.f32.mrb[0].mxu0
        %v713 = vadd.f32 %v624, %v712
        %714 = vmatprep.mubr.f32.mxu0 0.0
        %715 = vmatmul.mubr.f32.gmra.mrb[0].mxu0 %v566
        %v716 = vpop.f32.mrb[0].mxu0
        %v717 = vadd.f32 %v620, %v716
        %v718 = vpop.f32.mrb[0].mxu0
        %v719 = vadd.f32 %v624, %v718
        %720 = vdwg.mxu0
        %721 = vmatprep.subr.mxu0 0.0
        %722 = vmatpush1.msra.mxu0 %v569
        %723 = vmatprep.subr.mxu0 0.0
        %724 = vmatpush1.msra.mxu0 %v572
        %725 = vmatprep.subr.mxu0 0.0
        %726 = vmatpush1.msra.mxu0 %v575
        %727 = vmatprep.subr.mxu0 0.0
        %728 = vmatpush1.msra.mxu0 %v578
        %729 = vmatprep.subr.mxu0 0.0
        %730 = vmatpush1.msra.mxu0 %v581
        %731 = vmatprep.subr.mxu0 0.0
        %732 = vmatpush1.msra.mxu0 %v584
        %733 = vmatprep.subr.mxu0 0.0
        %734 = vmatpush1.msra.mxu0 %v587
        %735 = vmatprep.subr.mxu0 0.0
        %736 = vmatpush1.msra.mxu0 %v590
        %737 = vmatprep.subr.mxu0 0.0
        %738 = vmatpush1.msra.mxu0 %v593
        %739 = vmatprep.subr.mxu0 0.0
        %740 = vmatpush1.msra.mxu0 %v596
        %741 = vmatprep.subr.mxu0 0.0
        %742 = vmatpush1.msra.mxu0 %v599
        %743 = vmatprep.subr.mxu0 0.0
        %744 = vmatpush1.msra.mxu0 %v602
        %745 = vmatprep.subr.mxu0 0.0
        %746 = vmatpush1.msra.mxu0 %v605
        %747 = vmatprep.subr.mxu0 0.0
        %748 = vmatpush1.msra.mxu0 %v608
        %749 = vmatprep.subr.mxu0 0.0
        %750 = vmatpush1.msra.mxu0 %v611
        %751 = vmatprep.subr.mxu0 0.0
        %752 = vmatpush1.msra.mxu0 %v614
        %753 = vmatprep.subr.mxu0 0.0
        %754 = vmatpush1.msra.mxu0 0.0
        %755 = vmatprep.subr.mxu0 0.0
        %756 = vmatpush1.msra.mxu0 0.0
        %757 = vmatprep.subr.mxu0 0.0
        %758 = vmatpush1.msra.mxu0 0.0
        %759 = vmatprep.subr.mxu0 0.0
        %760 = vmatpush1.msra.mxu0 0.0
        %761 = vmatprep.subr.mxu0 0.0
        %762 = vmatpush1.msra.mxu0 0.0
        %763 = vmatprep.subr.mxu0 0.0
        %764 = vmatpush1.msra.mxu0 0.0
        %765 = vmatprep.subr.mxu0 0.0
        %766 = vmatpush1.msra.mxu0 0.0
        %767 = vmatprep.subr.mxu0 0.0
        %768 = vmatpush1.msra.mxu0 0.0
        %769 = vmatprep.subr.mxu0 0.0
        %770 = vmatpush1.msra.mxu0 0.0
        %771 = vmatprep.subr.mxu0 0.0
        %772 = vmatpush1.msra.mxu0 0.0
        %773 = vmatprep.subr.mxu0 0.0
        %774 = vmatpush1.msra.mxu0 0.0
        %775 = vmatprep.subr.mxu0 0.0
        %776 = vmatpush1.msra.mxu0 0.0
        %777 = vmatprep.subr.mxu0 0.0
        %778 = vmatpush1.msra.mxu0 0.0
        %779 = vmatprep.subr.mxu0 0.0
        %780 = vmatpush1.msra.mxu0 0.0
        %781 = vmatprep.subr.mxu0 0.0
        %782 = vmatpush1.msra.mxu0 0.0
        %783 = vmatprep.subr.mxu0 0.0
        %784 = vmatpush1.msra.mxu0 0.0
        %785 = vmatprep.mubr.f32.mxu0 0.0
        %786 = vmatmul.mubr.f32.gmra.mrb[0].mxu0 %v563
        %v787 = vpop.f32.mrb[0].mxu0
        %v788 = vadd.f32 %v628, %v787
        %v789 = vpop.f32.mrb[0].mxu0
        %790 = vmatprep.mubr.f32.mxu0 0.0
        %791 = vmatmul.mubr.f32.gmra.mrb[0].mxu0 %v564
        %v792 = vpop.f32.mrb[0].mxu0
        %v793 = vadd.f32 %v628, %v792
        %v794 = vpop.f32.mrb[0].mxu0
        %795 = vmatprep.mubr.f32.mxu0 0.0
        %796 = vmatmul.mubr.f32.gmra.mrb[0].mxu0 %v565
        %v797 = vpop.f32.mrb[0].mxu0
        %v798 = vadd.f32 %v628, %v797
        %v799 = vpop.f32.mrb[0].mxu0
        %800 = vmatprep.mubr.f32.mxu0 0.0
        %801 = vmatmul.mubr.f32.gmra.mrb[0].mxu0 %v566
        %v802 = vpop.f32.mrb[0].mxu0
        %v803 = vadd.f32 %v628, %v802
        %v804 = vpop.f32.mrb[0].mxu0
        %805 = vdwg.mxu0
        %810 = vrot.lane.b32.xlu0 %v699, 96
        %v811 = vpop.permute.xlu0 %810
        %812 = vrot.lane.b32.xlu0 %v705, 96
        %v813 = vpop.permute.xlu0 %812
        %814 = vrot.lane.b32.xlu0 %v711, 96
        %v815 = vpop.permute.xlu0 %814
        %816 = vrot.lane.b32.xlu0 %v717, 96
        %v817 = vpop.permute.xlu0 %816
        %818 = vrot.lane.b32.xlu0 %v699, 64
        %v819 = vpop.permute.xlu0 %818
        %820 = vrot.lane.b32.xlu0 %v705, 64
        %v821 = vpop.permute.xlu0 %820
        %822 = vrot.lane.b32.xlu0 %v711, 64
        %v823 = vpop.permute.xlu0 %822
        %824 = vrot.lane.b32.xlu0 %v717, 64
        %v825 = vpop.permute.xlu0 %824
        %826 = vrot.lane.b32.xlu0 %v699, 32
        %v827 = vpop.permute.xlu0 %826
        %828 = vrot.lane.b32.xlu0 %v705, 32
        %v829 = vpop.permute.xlu0 %828
        %830 = vrot.lane.b32.xlu0 %v711, 32
        %v831 = vpop.permute.xlu0 %830
        %832 = vrot.lane.b32.xlu0 %v717, 32
        %v833 = vpop.permute.xlu0 %832
        %838 = vrot.lane.b32.xlu0 %v701, 96
        %v839 = vpop.permute.xlu0 %838
        %840 = vrot.lane.b32.xlu0 %v707, 96
        %v841 = vpop.permute.xlu0 %840
        %842 = vrot.lane.b32.xlu0 %v713, 96
        %v843 = vpop.permute.xlu0 %842
        %844 = vrot.lane.b32.xlu0 %v719, 96
        %v845 = vpop.permute.xlu0 %844
        %846 = vrot.lane.b32.xlu0 %v701, 64
        %v847 = vpop.permute.xlu0 %846
        %848 = vrot.lane.b32.xlu0 %v707, 64
        %v849 = vpop.permute.xlu0 %848
        %850 = vrot.lane.b32.xlu0 %v713, 64
        %v851 = vpop.permute.xlu0 %850
        %852 = vrot.lane.b32.xlu0 %v719, 64
        %v853 = vpop.permute.xlu0 %852
        %854 = vrot.lane.b32.xlu0 %v701, 32
        %v855 = vpop.permute.xlu0 %854
        %856 = vrot.lane.b32.xlu0 %v707, 32
        %v857 = vpop.permute.xlu0 %856
        %858 = vrot.lane.b32.xlu0 %v713, 32
        %v859 = vpop.permute.xlu0 %858
        %860 = vrot.lane.b32.xlu0 %v719, 32
        %v861 = vpop.permute.xlu0 %860
        %866 = vrot.lane.b32.xlu0 %v788, 96
        %v867 = vpop.permute.xlu0 %866
        %868 = vrot.lane.b32.xlu0 %v793, 96
        %v869 = vpop.permute.xlu0 %868
        %870 = vrot.lane.b32.xlu0 %v798, 96
        %v871 = vpop.permute.xlu0 %870
        %872 = vrot.lane.b32.xlu0 %v803, 96
        %v873 = vpop.permute.xlu0 %872
        %878 = vrot.lane.b32.xlu0 %v788, 64
        %v879 = vpop.permute.xlu0 %878
        %880 = vrot.lane.b32.xlu0 %v793, 64
        %v881 = vpop.permute.xlu0 %880
        %882 = vrot.lane.b32.xlu0 %v798, 64
        %v883 = vpop.permute.xlu0 %882
        %884 = vrot.lane.b32.xlu0 %v803, 64
        %v885 = vpop.permute.xlu0 %884
        %890 = vrot.lane.b32.xlu0 %v788, 32
        %v891 = vpop.permute.xlu0 %890
        %892 = vrot.lane.b32.xlu0 %v793, 32
        %v893 = vpop.permute.xlu0 %892
        %894 = vrot.lane.b32.xlu0 %v798, 32
        %v895 = vpop.permute.xlu0 %894
        %896 = vrot.lane.b32.xlu0 %v803, 32
        %v897 = vpop.permute.xlu0 %896
        %vm902 = vcmask 261120
        %v903 = vsel %vm902, %v699, 0
        %v905 = vsel %vm902, %v705, 0
        %v907 = vsel %vm902, %v701, 0
        %v909 = vsel %vm902, %v707, 0
        %911 = vmatprep.subr.mxu0 0.0
        %912 = vmatpush1.xpose.msra.mxu0 %v907
        %913 = vmatprep.subr.mxu0 0.0
        %914 = vmatpush1.xpose.msra.mxu0 %v909
        %915 = vmatprep.subr.mxu0 0.0
        %916 = vmatpush1.xpose.msra.mxu0 0.0
        %917 = vmatprep.subr.mxu0 0.0
        %918 = vmatpush1.xpose.msra.mxu0 0.0
        %919 = vmatprep.subr.mxu0 0.0
        %920 = vmatpush1.xpose.msra.mxu0 0.0
        %921 = vmatprep.subr.mxu0 0.0
        %922 = vmatpush1.xpose.msra.mxu0 0.0
        %923 = vmatprep.subr.mxu0 0.0
        %924 = vmatpush1.xpose.msra.mxu0 0.0
        %925 = vmatprep.subr.mxu0 0.0
        %926 = vmatpush1.xpose.msra.mxu0 0.0
        %927 = vmatprep.subr.mxu0 0.0
        %928 = vmatpush1.xpose.msra.mxu0 0.0
        %929 = vmatprep.subr.mxu0 0.0
        %930 = vmatpush1.xpose.msra.mxu0 0.0
        %931 = vmatprep.subr.mxu0 0.0
        %932 = vmatpush1.xpose.msra.mxu0 0.0
        %933 = vmatprep.subr.mxu0 0.0
        %934 = vmatpush1.xpose.msra.mxu0 0.0
        %935 = vmatprep.subr.mxu0 0.0
        %936 = vmatpush1.xpose.msra.mxu0 0.0
        %937 = vmatprep.subr.mxu0 0.0
        %938 = vmatpush1.xpose.msra.mxu0 0.0
        %939 = vmatprep.subr.mxu0 0.0
        %940 = vmatpush1.xpose.msra.mxu0 0.0
        %941 = vmatprep.subr.mxu0 0.0
        %942 = vmatpush1.xpose.msra.mxu0 0.0
        %943 = vmatprep.subr.mxu0 0.0
        %944 = vmatpush1.xpose.msra.mxu0 0.0
        %945 = vmatprep.subr.mxu0 0.0
        %946 = vmatpush1.xpose.msra.mxu0 0.0
        %947 = vmatprep.subr.mxu0 0.0
        %948 = vmatpush1.xpose.msra.mxu0 0.0
        %949 = vmatprep.subr.mxu0 0.0
        %950 = vmatpush1.xpose.msra.mxu0 0.0
        %951 = vmatprep.subr.mxu0 0.0
        %952 = vmatpush1.xpose.msra.mxu0 0.0
        %953 = vmatprep.subr.mxu0 0.0
        %954 = vmatpush1.xpose.msra.mxu0 0.0
        %955 = vmatprep.subr.mxu0 0.0
        %956 = vmatpush1.xpose.msra.mxu0 0.0
        %957 = vmatprep.subr.mxu0 0.0
        %958 = vmatpush1.xpose.msra.mxu0 0.0
        %959 = vmatprep.subr.mxu0 0.0
        %960 = vmatpush1.xpose.msra.mxu0 0.0
        %961 = vmatprep.subr.mxu0 0.0
        %962 = vmatpush1.xpose.msra.mxu0 0.0
        %963 = vmatprep.subr.mxu0 0.0
        %964 = vmatpush1.xpose.msra.mxu0 0.0
        %965 = vmatprep.subr.mxu0 0.0
        %966 = vmatpush1.xpose.msra.mxu0 0.0
        %967 = vmatprep.subr.mxu0 0.0
        %968 = vmatpush1.xpose.msra.mxu0 0.0
        %969 = vmatprep.subr.mxu0 0.0
        %970 = vmatpush1.xpose.msra.mxu0 0.0
        %971 = vmatprep.subr.mxu0 0.0
        %972 = vmatpush1.xpose.msra.mxu0 0.0
        %973 = vmatprep.subr.mxu0 0.0
        %974 = vmatpush1.xpose.msra.mxu0 0.0
        %975 = vmatprep.mubr.f32.mxu0 0.0
        %976 = vmatmul.mubr.f32.gmra.mrb[0].mxu0 %v903
        %v977 = vpop.f32.mrb[0].mxu0
        %v978 = vadd.f32 0.0, %v977
        %v979 = vpop.f32.mrb[0].mxu0
        %980 = vmatprep.mubr.f32.mxu0 0.0
        %981 = vmatmul.mubr.f32.gmra.mrb[0].mxu0 %v905
        %v982 = vpop.f32.mrb[0].mxu0
        %v983 = vadd.f32 0.0, %v982
        %v984 = vpop.f32.mrb[0].mxu0
        %985 = vdwg.mxu0
        %v986 = vsel %vm902, %v711, 0
        %v988 = vsel %vm902, %v717, 0
        %v990 = vsel %vm902, %v713, 0
        %v992 = vsel %vm902, %v719, 0
        %994 = vmatprep.subr.mxu0 0.0
        %995 = vmatpush1.xpose.msra.mxu0 %v990
        %996 = vmatprep.subr.mxu0 0.0
        %997 = vmatpush1.xpose.msra.mxu0 %v992
        %998 = vmatprep.subr.mxu0 0.0
        %999 = vmatpush1.xpose.msra.mxu0 0.0
        %1000 = vmatprep.subr.mxu0 0.0
        %1001 = vmatpush1.xpose.msra.mxu0 0.0
        %1002 = vmatprep.subr.mxu0 0.0
        %1003 = vmatpush1.xpose.msra.mxu0 0.0
        %1004 = vmatprep.subr.mxu0 0.0
        %1005 = vmatpush1.xpose.msra.mxu0 0.0
        %1006 = vmatprep.subr.mxu0 0.0
        %1007 = vmatpush1.xpose.msra.mxu0 0.0
        %1008 = vmatprep.subr.mxu0 0.0
        %1009 = vmatpush1.xpose.msra.mxu0 0.0
        %1010 = vmatprep.subr.mxu0 0.0
        %1011 = vmatpush1.xpose.msra.mxu0 0.0
        %1012 = vmatprep.subr.mxu0 0.0
        %1013 = vmatpush1.xpose.msra.mxu0 0.0
        %1014 = vmatprep.subr.mxu0 0.0
        %1015 = vmatpush1.xpose.msra.mxu0 0.0
        %1016 = vmatprep.subr.mxu0 0.0
        %1017 = vmatpush1.xpose.msra.mxu0 0.0
        %1018 = vmatprep.subr.mxu0 0.0
        %1019 = vmatpush1.xpose.msra.mxu0 0.0
        %1020 = vmatprep.subr.mxu0 0.0
        %1021 = vmatpush1.xpose.msra.mxu0 0.0
        %1022 = vmatprep.subr.mxu0 0.0
        %1023 = vmatpush1.xpose.msra.mxu0 0.0
        %1024 = vmatprep.subr.mxu0 0.0
        %1025 = vmatpush1.xpose.msra.mxu0 0.0
        %1026 = vmatprep.subr.mxu0 0.0
        %1027 = vmatpush1.xpose.msra.mxu0 0.0
        %1028 = vmatprep.subr.mxu0 0.0
        %1029 = vmatpush1.xpose.msra.mxu0 0.0
        %1030 = vmatprep.subr.mxu0 0.0
        %1031 = vmatpush1.xpose.msra.mxu0 0.0
        %1032 = vmatprep.subr.mxu0 0.0
        %1033 = vmatpush1.xpose.msra.mxu0 0.0
        %1034 = vmatprep.subr.mxu0 0.0
        %1035 = vmatpush1.xpose.msra.mxu0 0.0
        %1036 = vmatprep.subr.mxu0 0.0
        %1037 = vmatpush1.xpose.msra.mxu0 0.0
        %1038 = vmatprep.subr.mxu0 0.0
        %1039 = vmatpush1.xpose.msra.mxu0 0.0
        %1040 = vmatprep.subr.mxu0 0.0
        %1041 = vmatpush1.xpose.msra.mxu0 0.0
        %1042 = vmatprep.subr.mxu0 0.0
        %1043 = vmatpush1.xpose.msra.mxu0 0.0
        %1044 = vmatprep.subr.mxu0 0.0
        %1045 = vmatpush1.xpose.msra.mxu0 0.0
        %1046 = vmatprep.subr.mxu0 0.0
        %1047 = vmatpush1.xpose.msra.mxu0 0.0
        %1048 = vmatprep.subr.mxu0 0.0
        %1049 = vmatpush1.xpose.msra.mxu0 0.0
        %1050 = vmatprep.subr.mxu0 0.0
        %1051 = vmatpush1.xpose.msra.mxu0 0.0
        %1052 = vmatprep.subr.mxu0 0.0
        %1053 = vmatpush1.xpose.msra.mxu0 0.0
        %1054 = vmatprep.subr.mxu0 0.0
        %1055 = vmatpush1.xpose.msra.mxu0 0.0
        %1056 = vmatprep.subr.mxu0 0.0
        %1057 = vmatpush1.xpose.msra.mxu0 0.0
        %1058 = vmatprep.mubr.f32.mxu0 0.0
        %1059 = vmatmul.mubr.f32.gmra.mrb[0].mxu0 %v986
        %v1060 = vpop.f32.mrb[0].mxu0
        %v1061 = vadd.f32 0.0, %v1060
        %v1062 = vpop.f32.mrb[0].mxu0
        %1063 = vmatprep.mubr.f32.mxu0 0.0
        %1064 = vmatmul.mubr.f32.gmra.mrb[0].mxu0 %v988
        %v1065 = vpop.f32.mrb[0].mxu0
        %v1066 = vadd.f32 0.0, %v1065
        %v1067 = vpop.f32.mrb[0].mxu0
        %1068 = vdwg.mxu0
        %v1069 = vsel %vm902, %v811, 0
        %v1071 = vsel %vm902, %v813, 0
        %v1073 = vsel %vm902, %v839, 0
        %v1075 = vsel %vm902, %v841, 0
        %1077 = vmatprep.subr.mxu0 0.0
        %1078 = vmatpush1.xpose.msra.mxu0 %v1073
        %1079 = vmatprep.subr.mxu0 0.0
        %1080 = vmatpush1.xpose.msra.mxu0 %v1075
        %1081 = vmatprep.subr.mxu0 0.0
        %1082 = vmatpush1.xpose.msra.mxu0 0.0
        %1083 = vmatprep.subr.mxu0 0.0
        %1084 = vmatpush1.xpose.msra.mxu0 0.0
        %1085 = vmatprep.subr.mxu0 0.0
        %1086 = vmatpush1.xpose.msra.mxu0 0.0
        %1087 = vmatprep.subr.mxu0 0.0
        %1088 = vmatpush1.xpose.msra.mxu0 0.0
        %1089 = vmatprep.subr.mxu0 0.0
        %1090 = vmatpush1.xpose.msra.mxu0 0.0
        %1091 = vmatprep.subr.mxu0 0.0
        %1092 = vmatpush1.xpose.msra.mxu0 0.0
        %1093 = vmatprep.subr.mxu0 0.0
        %1094 = vmatpush1.xpose.msra.mxu0 0.0
        %1095 = vmatprep.subr.mxu0 0.0
        %1096 = vmatpush1.xpose.msra.mxu0 0.0
        %1097 = vmatprep.subr.mxu0 0.0
        %1098 = vmatpush1.xpose.msra.mxu0 0.0
        %1099 = vmatprep.subr.mxu0 0.0
        %1100 = vmatpush1.xpose.msra.mxu0 0.0
        %1101 = vmatprep.subr.mxu0 0.0
        %1102 = vmatpush1.xpose.msra.mxu0 0.0
        %1103 = vmatprep.subr.mxu0 0.0
        %1104 = vmatpush1.xpose.msra.mxu0 0.0
        %1105 = vmatprep.subr.mxu0 0.0
        %1106 = vmatpush1.xpose.msra.mxu0 0.0
        %1107 = vmatprep.subr.mxu0 0.0
        %1108 = vmatpush1.xpose.msra.mxu0 0.0
        %1109 = vmatprep.subr.mxu0 0.0
        %1110 = vmatpush1.xpose.msra.mxu0 0.0
        %1111 = vmatprep.subr.mxu0 0.0
        %1112 = vmatpush1.xpose.msra.mxu0 0.0
        %1113 = vmatprep.subr.mxu0 0.0
        %1114 = vmatpush1.xpose.msra.mxu0 0.0
        %1115 = vmatprep.subr.mxu0 0.0
        %1116 = vmatpush1.xpose.msra.mxu0 0.0
        %1117 = vmatprep.subr.mxu0 0.0
        %1118 = vmatpush1.xpose.msra.mxu0 0.0
        %1119 = vmatprep.subr.mxu0 0.0
        %1120 = vmatpush1.xpose.msra.mxu0 0.0
        %1121 = vmatprep.subr.mxu0 0.0
        %1122 = vmatpush1.xpose.msra.mxu0 0.0
        %1123 = vmatprep.subr.mxu0 0.0
        %1124 = vmatpush1.xpose.msra.mxu0 0.0
        %1125 = vmatprep.subr.mxu0 0.0
        %1126 = vmatpush1.xpose.msra.mxu0 0.0
        %1127 = vmatprep.subr.mxu0 0.0
        %1128 = vmatpush1.xpose.msra.mxu0 0.0
        %1129 = vmatprep.subr.mxu0 0.0
        %1130 = vmatpush1.xpose.msra.mxu0 0.0
        %1131 = vmatprep.subr.mxu0 0.0
        %1132 = vmatpush1.xpose.msra.mxu0 0.0
        %1133 = vmatprep.subr.mxu0 0.0
        %1134 = vmatpush1.xpose.msra.mxu0 0.0
        %1135 = vmatprep.subr.mxu0 0.0
        %1136 = vmatpush1.xpose.msra.mxu0 0.0
        %1137 = vmatprep.subr.mxu0 0.0
        %1138 = vmatpush1.xpose.msra.mxu0 0.0
        %1139 = vmatprep.subr.mxu0 0.0
        %1140 = vmatpush1.xpose.msra.mxu0 0.0
        %1141 = vmatprep.mubr.f32.mxu0 0.0
        %1142 = vmatmul.mubr.f32.gmra.mrb[0].mxu0 %v1069
        %v1143 = vpop.f32.mrb[0].mxu0
        %v1144 = vadd.f32 0.0, %v1143
        %v1145 = vpop.f32.mrb[0].mxu0
        %1146 = vmatprep.mubr.f32.mxu0 0.0
        %1147 = vmatmul.mubr.f32.gmra.mrb[0].mxu0 %v1071
        %v1148 = vpop.f32.mrb[0].mxu0
        %v1149 = vadd.f32 0.0, %v1148
        %v1150 = vpop.f32.mrb[0].mxu0
        %1151 = vdwg.mxu0
        %v1152 = vsel %vm902, %v815, 0
        %v1154 = vsel %vm902, %v817, 0
        %v1156 = vsel %vm902, %v843, 0
        %v1158 = vsel %vm902, %v845, 0
        %1160 = vmatprep.subr.mxu0 0.0
        %1161 = vmatpush1.xpose.msra.mxu0 %v1156
        %1162 = vmatprep.subr.mxu0 0.0
        %1163 = vmatpush1.xpose.msra.mxu0 %v1158
        %1164 = vmatprep.subr.mxu0 0.0
        %1165 = vmatpush1.xpose.msra.mxu0 0.0
        %1166 = vmatprep.subr.mxu0 0.0
        %1167 = vmatpush1.xpose.msra.mxu0 0.0
        %1168 = vmatprep.subr.mxu0 0.0
        %1169 = vmatpush1.xpose.msra.mxu0 0.0
        %1170 = vmatprep.subr.mxu0 0.0
        %1171 = vmatpush1.xpose.msra.mxu0 0.0
        %1172 = vmatprep.subr.mxu0 0.0
        %1173 = vmatpush1.xpose.msra.mxu0 0.0
        %1174 = vmatprep.subr.mxu0 0.0
        %1175 = vmatpush1.xpose.msra.mxu0 0.0
        %1176 = vmatprep.subr.mxu0 0.0
        %1177 = vmatpush1.xpose.msra.mxu0 0.0
        %1178 = vmatprep.subr.mxu0 0.0
        %1179 = vmatpush1.xpose.msra.mxu0 0.0
        %1180 = vmatprep.subr.mxu0 0.0
        %1181 = vmatpush1.xpose.msra.mxu0 0.0
        %1182 = vmatprep.subr.mxu0 0.0
        %1183 = vmatpush1.xpose.msra.mxu0 0.0
        %1184 = vmatprep.subr.mxu0 0.0
        %1185 = vmatpush1.xpose.msra.mxu0 0.0
        %1186 = vmatprep.subr.mxu0 0.0
        %1187 = vmatpush1.xpose.msra.mxu0 0.0
        %1188 = vmatprep.subr.mxu0 0.0
        %1189 = vmatpush1.xpose.msra.mxu0 0.0
        %1190 = vmatprep.subr.mxu0 0.0
        %1191 = vmatpush1.xpose.msra.mxu0 0.0
        %1192 = vmatprep.subr.mxu0 0.0
        %1193 = vmatpush1.xpose.msra.mxu0 0.0
        %1194 = vmatprep.subr.mxu0 0.0
        %1195 = vmatpush1.xpose.msra.mxu0 0.0
        %1196 = vmatprep.subr.mxu0 0.0
        %1197 = vmatpush1.xpose.msra.mxu0 0.0
        %1198 = vmatprep.subr.mxu0 0.0
        %1199 = vmatpush1.xpose.msra.mxu0 0.0
        %1200 = vmatprep.subr.mxu0 0.0
        %1201 = vmatpush1.xpose.msra.mxu0 0.0
        %1202 = vmatprep.subr.mxu0 0.0
        %1203 = vmatpush1.xpose.msra.mxu0 0.0
        %1204 = vmatprep.subr.mxu0 0.0
        %1205 = vmatpush1.xpose.msra.mxu0 0.0
        %1206 = vmatprep.subr.mxu0 0.0
        %1207 = vmatpush1.xpose.msra.mxu0 0.0
        %1208 = vmatprep.subr.mxu0 0.0
        %1209 = vmatpush1.xpose.msra.mxu0 0.0
        %1210 = vmatprep.subr.mxu0 0.0
        %1211 = vmatpush1.xpose.msra.mxu0 0.0
        %1212 = vmatprep.subr.mxu0 0.0
        %1213 = vmatpush1.xpose.msra.mxu0 0.0
        %1214 = vmatprep.subr.mxu0 0.0
        %1215 = vmatpush1.xpose.msra.mxu0 0.0
        %1216 = vmatprep.subr.mxu0 0.0
        %1217 = vmatpush1.xpose.msra.mxu0 0.0
        %1218 = vmatprep.subr.mxu0 0.0
        %1219 = vmatpush1.xpose.msra.mxu0 0.0
        %1220 = vmatprep.subr.mxu0 0.0
        %1221 = vmatpush1.xpose.msra.mxu0 0.0
        %1222 = vmatprep.subr.mxu0 0.0
        %1223 = vmatpush1.xpose.msra.mxu0 0.0
        %1224 = vmatprep.mubr.f32.mxu0 0.0
        %1225 = vmatmul.mubr.f32.gmra.mrb[0].mxu0 %v1152
        %v1226 = vpop.f32.mrb[0].mxu0
        %v1227 = vadd.f32 0.0, %v1226
        %v1228 = vpop.f32.mrb[0].mxu0
        %1229 = vmatprep.mubr.f32.mxu0 0.0
        %1230 = vmatmul.mubr.f32.gmra.mrb[0].mxu0 %v1154
        %v1231 = vpop.f32.mrb[0].mxu0
        %v1232 = vadd.f32 0.0, %v1231
        %v1233 = vpop.f32.mrb[0].mxu0
        %1234 = vdwg.mxu0
        %v1235 = vsel %vm902, %v819, 0
        %v1237 = vsel %vm902, %v821, 0
        %v1239 = vsel %vm902, %v847, 0
        %v1241 = vsel %vm902, %v849, 0
        %1243 = vmatprep.subr.mxu0 0.0
        %1244 = vmatpush1.xpose.msra.mxu0 %v1239
        %1245 = vmatprep.subr.mxu0 0.0
        %1246 = vmatpush1.xpose.msra.mxu0 %v1241
        %1247 = vmatprep.subr.mxu0 0.0
        %1248 = vmatpush1.xpose.msra.mxu0 0.0
        %1249 = vmatprep.subr.mxu0 0.0
        %1250 = vmatpush1.xpose.msra.mxu0 0.0
        %1251 = vmatprep.subr.mxu0 0.0
        %1252 = vmatpush1.xpose.msra.mxu0 0.0
        %1253 = vmatprep.subr.mxu0 0.0
        %1254 = vmatpush1.xpose.msra.mxu0 0.0
        %1255 = vmatprep.subr.mxu0 0.0
        %1256 = vmatpush1.xpose.msra.mxu0 0.0
        %1257 = vmatprep.subr.mxu0 0.0
        %1258 = vmatpush1.xpose.msra.mxu0 0.0
        %1259 = vmatprep.subr.mxu0 0.0
        %1260 = vmatpush1.xpose.msra.mxu0 0.0
        %1261 = vmatprep.subr.mxu0 0.0
        %1262 = vmatpush1.xpose.msra.mxu0 0.0
        %1263 = vmatprep.subr.mxu0 0.0
        %1264 = vmatpush1.xpose.msra.mxu0 0.0
        %1265 = vmatprep.subr.mxu0 0.0
        %1266 = vmatpush1.xpose.msra.mxu0 0.0
        %1267 = vmatprep.subr.mxu0 0.0
        %1268 = vmatpush1.xpose.msra.mxu0 0.0
        %1269 = vmatprep.subr.mxu0 0.0
        %1270 = vmatpush1.xpose.msra.mxu0 0.0
        %1271 = vmatprep.subr.mxu0 0.0
        %1272 = vmatpush1.xpose.msra.mxu0 0.0
        %1273 = vmatprep.subr.mxu0 0.0
        %1274 = vmatpush1.xpose.msra.mxu0 0.0
        %1275 = vmatprep.subr.mxu0 0.0
        %1276 = vmatpush1.xpose.msra.mxu0 0.0
        %1277 = vmatprep.subr.mxu0 0.0
        %1278 = vmatpush1.xpose.msra.mxu0 0.0
        %1279 = vmatprep.subr.mxu0 0.0
        %1280 = vmatpush1.xpose.msra.mxu0 0.0
        %1281 = vmatprep.subr.mxu0 0.0
        %1282 = vmatpush1.xpose.msra.mxu0 0.0
        %1283 = vmatprep.subr.mxu0 0.0
        %1284 = vmatpush1.xpose.msra.mxu0 0.0
        %1285 = vmatprep.subr.mxu0 0.0
        %1286 = vmatpush1.xpose.msra.mxu0 0.0
        %1287 = vmatprep.subr.mxu0 0.0
        %1288 = vmatpush1.xpose.msra.mxu0 0.0
        %1289 = vmatprep.subr.mxu0 0.0
        %1290 = vmatpush1.xpose.msra.mxu0 0.0
        %1291 = vmatprep.subr.mxu0 0.0
        %1292 = vmatpush1.xpose.msra.mxu0 0.0
        %1293 = vmatprep.subr.mxu0 0.0
        %1294 = vmatpush1.xpose.msra.mxu0 0.0
        %1295 = vmatprep.subr.mxu0 0.0
        %1296 = vmatpush1.xpose.msra.mxu0 0.0
        %1297 = vmatprep.subr.mxu0 0.0
        %1298 = vmatpush1.xpose.msra.mxu0 0.0
        %1299 = vmatprep.subr.mxu0 0.0
        %1300 = vmatpush1.xpose.msra.mxu0 0.0
        %1301 = vmatprep.subr.mxu0 0.0
        %1302 = vmatpush1.xpose.msra.mxu0 0.0
        %1303 = vmatprep.subr.mxu0 0.0
        %1304 = vmatpush1.xpose.msra.mxu0 0.0
        %1305 = vmatprep.subr.mxu0 0.0
        %1306 = vmatpush1.xpose.msra.mxu0 0.0
        %1307 = vmatprep.mubr.f32.mxu0 0.0
        %1308 = vmatmul.mubr.f32.gmra.mrb[0].mxu0 %v1235
        %v1309 = vpop.f32.mrb[0].mxu0
        %v1310 = vadd.f32 0.0, %v1309
        %v1311 = vpop.f32.mrb[0].mxu0
        %1312 = vmatprep.mubr.f32.mxu0 0.0
        %1313 = vmatmul.mubr.f32.gmra.mrb[0].mxu0 %v1237
        %v1314 = vpop.f32.mrb[0].mxu0
        %v1315 = vadd.f32 0.0, %v1314
        %v1316 = vpop.f32.mrb[0].mxu0
        %1317 = vdwg.mxu0
        %v1318 = vsel %vm902, %v823, 0
        %v1320 = vsel %vm902, %v825, 0
        %v1322 = vsel %vm902, %v851, 0
        %v1324 = vsel %vm902, %v853, 0
        %1326 = vmatprep.subr.mxu0 0.0
        %1327 = vmatpush1.xpose.msra.mxu0 %v1322
        %1328 = vmatprep.subr.mxu0 0.0
        %1329 = vmatpush1.xpose.msra.mxu0 %v1324
        %1330 = vmatprep.subr.mxu0 0.0
        %1331 = vmatpush1.xpose.msra.mxu0 0.0
        %1332 = vmatprep.subr.mxu0 0.0
        %1333 = vmatpush1.xpose.msra.mxu0 0.0
        %1334 = vmatprep.subr.mxu0 0.0
        %1335 = vmatpush1.xpose.msra.mxu0 0.0
        %1336 = vmatprep.subr.mxu0 0.0
        %1337 = vmatpush1.xpose.msra.mxu0 0.0
        %1338 = vmatprep.subr.mxu0 0.0
        %1339 = vmatpush1.xpose.msra.mxu0 0.0
        %1340 = vmatprep.subr.mxu0 0.0
        %1341 = vmatpush1.xpose.msra.mxu0 0.0
        %1342 = vmatprep.subr.mxu0 0.0
        %1343 = vmatpush1.xpose.msra.mxu0 0.0
        %1344 = vmatprep.subr.mxu0 0.0
        %1345 = vmatpush1.xpose.msra.mxu0 0.0
        %1346 = vmatprep.subr.mxu0 0.0
        %1347 = vmatpush1.xpose.msra.mxu0 0.0
        %1348 = vmatprep.subr.mxu0 0.0
        %1349 = vmatpush1.xpose.msra.mxu0 0.0
        %1350 = vmatprep.subr.mxu0 0.0
        %1351 = vmatpush1.xpose.msra.mxu0 0.0
        %1352 = vmatprep.subr.mxu0 0.0
        %1353 = vmatpush1.xpose.msra.mxu0 0.0
        %1354 = vmatprep.subr.mxu0 0.0
        %1355 = vmatpush1.xpose.msra.mxu0 0.0
        %1356 = vmatprep.subr.mxu0 0.0
        %1357 = vmatpush1.xpose.msra.mxu0 0.0
        %1358 = vmatprep.subr.mxu0 0.0
        %1359 = vmatpush1.xpose.msra.mxu0 0.0
        %1360 = vmatprep.subr.mxu0 0.0
        %1361 = vmatpush1.xpose.msra.mxu0 0.0
        %1362 = vmatprep.subr.mxu0 0.0
        %1363 = vmatpush1.xpose.msra.mxu0 0.0
        %1364 = vmatprep.subr.mxu0 0.0
        %1365 = vmatpush1.xpose.msra.mxu0 0.0
        %1366 = vmatprep.subr.mxu0 0.0
        %1367 = vmatpush1.xpose.msra.mxu0 0.0
        %1368 = vmatprep.subr.mxu0 0.0
        %1369 = vmatpush1.xpose.msra.mxu0 0.0
        %1370 = vmatprep.subr.mxu0 0.0
        %1371 = vmatpush1.xpose.msra.mxu0 0.0
        %1372 = vmatprep.subr.mxu0 0.0
        %1373 = vmatpush1.xpose.msra.mxu0 0.0
        %1374 = vmatprep.subr.mxu0 0.0
        %1375 = vmatpush1.xpose.msra.mxu0 0.0
        %1376 = vmatprep.subr.mxu0 0.0
        %1377 = vmatpush1.xpose.msra.mxu0 0.0
        %1378 = vmatprep.subr.mxu0 0.0
        %1379 = vmatpush1.xpose.msra.mxu0 0.0
        %1380 = vmatprep.subr.mxu0 0.0
        %1381 = vmatpush1.xpose.msra.mxu0 0.0
        %1382 = vmatprep.subr.mxu0 0.0
        %1383 = vmatpush1.xpose.msra.mxu0 0.0
        %1384 = vmatprep.subr.mxu0 0.0
        %1385 = vmatpush1.xpose.msra.mxu0 0.0
        %1386 = vmatprep.subr.mxu0 0.0
        %1387 = vmatpush1.xpose.msra.mxu0 0.0
        %1388 = vmatprep.subr.mxu0 0.0
        %1389 = vmatpush1.xpose.msra.mxu0 0.0
        %1390 = vmatprep.mubr.f32.mxu0 0.0
        %1391 = vmatmul.mubr.f32.gmra.mrb[0].mxu0 %v1318
        %v1392 = vpop.f32.mrb[0].mxu0
        %v1393 = vadd.f32 0.0, %v1392
        %v1394 = vpop.f32.mrb[0].mxu0
        %1395 = vmatprep.mubr.f32.mxu0 0.0
        %1396 = vmatmul.mubr.f32.gmra.mrb[0].mxu0 %v1320
        %v1397 = vpop.f32.mrb[0].mxu0
        %v1398 = vadd.f32 0.0, %v1397
        %v1399 = vpop.f32.mrb[0].mxu0
        %1400 = vdwg.mxu0
        %v1401 = vsel %vm902, %v827, 0
        %v1403 = vsel %vm902, %v829, 0
        %v1405 = vsel %vm902, %v855, 0
        %v1407 = vsel %vm902, %v857, 0
        %1409 = vmatprep.subr.mxu0 0.0
        %1410 = vmatpush1.xpose.msra.mxu0 %v1405
        %1411 = vmatprep.subr.mxu0 0.0
        %1412 = vmatpush1.xpose.msra.mxu0 %v1407
        %1413 = vmatprep.subr.mxu0 0.0
        %1414 = vmatpush1.xpose.msra.mxu0 0.0
        %1415 = vmatprep.subr.mxu0 0.0
        %1416 = vmatpush1.xpose.msra.mxu0 0.0
        %1417 = vmatprep.subr.mxu0 0.0
        %1418 = vmatpush1.xpose.msra.mxu0 0.0
        %1419 = vmatprep.subr.mxu0 0.0
        %1420 = vmatpush1.xpose.msra.mxu0 0.0
        %1421 = vmatprep.subr.mxu0 0.0
        %1422 = vmatpush1.xpose.msra.mxu0 0.0
        %1423 = vmatprep.subr.mxu0 0.0
        %1424 = vmatpush1.xpose.msra.mxu0 0.0
        %1425 = vmatprep.subr.mxu0 0.0
        %1426 = vmatpush1.xpose.msra.mxu0 0.0
        %1427 = vmatprep.subr.mxu0 0.0
        %1428 = vmatpush1.xpose.msra.mxu0 0.0
        %1429 = vmatprep.subr.mxu0 0.0
        %1430 = vmatpush1.xpose.msra.mxu0 0.0
        %1431 = vmatprep.subr.mxu0 0.0
        %1432 = vmatpush1.xpose.msra.mxu0 0.0
        %1433 = vmatprep.subr.mxu0 0.0
        %1434 = vmatpush1.xpose.msra.mxu0 0.0
        %1435 = vmatprep.subr.mxu0 0.0
        %1436 = vmatpush1.xpose.msra.mxu0 0.0
        %1437 = vmatprep.subr.mxu0 0.0
        %1438 = vmatpush1.xpose.msra.mxu0 0.0
        %1439 = vmatprep.subr.mxu0 0.0
        %1440 = vmatpush1.xpose.msra.mxu0 0.0
        %1441 = vmatprep.subr.mxu0 0.0
        %1442 = vmatpush1.xpose.msra.mxu0 0.0
        %1443 = vmatprep.subr.mxu0 0.0
        %1444 = vmatpush1.xpose.msra.mxu0 0.0
        %1445 = vmatprep.subr.mxu0 0.0
        %1446 = vmatpush1.xpose.msra.mxu0 0.0
        %1447 = vmatprep.subr.mxu0 0.0
        %1448 = vmatpush1.xpose.msra.mxu0 0.0
        %1449 = vmatprep.subr.mxu0 0.0
        %1450 = vmatpush1.xpose.msra.mxu0 0.0
        %1451 = vmatprep.subr.mxu0 0.0
        %1452 = vmatpush1.xpose.msra.mxu0 0.0
        %1453 = vmatprep.subr.mxu0 0.0
        %1454 = vmatpush1.xpose.msra.mxu0 0.0
        %1455 = vmatprep.subr.mxu0 0.0
        %1456 = vmatpush1.xpose.msra.mxu0 0.0
        %1457 = vmatprep.subr.mxu0 0.0
        %1458 = vmatpush1.xpose.msra.mxu0 0.0
        %1459 = vmatprep.subr.mxu0 0.0
        %1460 = vmatpush1.xpose.msra.mxu0 0.0
        %1461 = vmatprep.subr.mxu0 0.0
        %1462 = vmatpush1.xpose.msra.mxu0 0.0
        %1463 = vmatprep.subr.mxu0 0.0
        %1464 = vmatpush1.xpose.msra.mxu0 0.0
        %1465 = vmatprep.subr.mxu0 0.0
        %1466 = vmatpush1.xpose.msra.mxu0 0.0
        %1467 = vmatprep.subr.mxu0 0.0
        %1468 = vmatpush1.xpose.msra.mxu0 0.0
        %1469 = vmatprep.subr.mxu0 0.0
        %1470 = vmatpush1.xpose.msra.mxu0 0.0
        %1471 = vmatprep.subr.mxu0 0.0
        %1472 = vmatpush1.xpose.msra.mxu0 0.0
        %1473 = vmatprep.mubr.f32.mxu0 0.0
        %1474 = vmatmul.mubr.f32.gmra.mrb[0].mxu0 %v1401
        %v1475 = vpop.f32.mrb[0].mxu0
        %v1476 = vadd.f32 0.0, %v1475
        %v1477 = vpop.f32.mrb[0].mxu0
        %1478 = vmatprep.mubr.f32.mxu0 0.0
        %1479 = vmatmul.mubr.f32.gmra.mrb[0].mxu0 %v1403
        %v1480 = vpop.f32.mrb[0].mxu0
        %v1481 = vadd.f32 0.0, %v1480
        %v1482 = vpop.f32.mrb[0].mxu0
        %1483 = vdwg.mxu0
        %v1484 = vsel %vm902, %v831, 0
        %v1486 = vsel %vm902, %v833, 0
        %v1488 = vsel %vm902, %v859, 0
        %v1490 = vsel %vm902, %v861, 0
        %1492 = vmatprep.subr.mxu0 0.0
        %1493 = vmatpush1.xpose.msra.mxu0 %v1488
        %1494 = vmatprep.subr.mxu0 0.0
        %1495 = vmatpush1.xpose.msra.mxu0 %v1490
        %1496 = vmatprep.subr.mxu0 0.0
        %1497 = vmatpush1.xpose.msra.mxu0 0.0
        %1498 = vmatprep.subr.mxu0 0.0
        %1499 = vmatpush1.xpose.msra.mxu0 0.0
        %1500 = vmatprep.subr.mxu0 0.0
        %1501 = vmatpush1.xpose.msra.mxu0 0.0
        %1502 = vmatprep.subr.mxu0 0.0
        %1503 = vmatpush1.xpose.msra.mxu0 0.0
        %1504 = vmatprep.subr.mxu0 0.0
        %1505 = vmatpush1.xpose.msra.mxu0 0.0
        %1506 = vmatprep.subr.mxu0 0.0
        %1507 = vmatpush1.xpose.msra.mxu0 0.0
        %1508 = vmatprep.subr.mxu0 0.0
        %1509 = vmatpush1.xpose.msra.mxu0 0.0
        %1510 = vmatprep.subr.mxu0 0.0
        %1511 = vmatpush1.xpose.msra.mxu0 0.0
        %1512 = vmatprep.subr.mxu0 0.0
        %1513 = vmatpush1.xpose.msra.mxu0 0.0
        %1514 = vmatprep.subr.mxu0 0.0
        %1515 = vmatpush1.xpose.msra.mxu0 0.0
        %1516 = vmatprep.subr.mxu0 0.0
        %1517 = vmatpush1.xpose.msra.mxu0 0.0
        %1518 = vmatprep.subr.mxu0 0.0
        %1519 = vmatpush1.xpose.msra.mxu0 0.0
        %1520 = vmatprep.subr.mxu0 0.0
        %1521 = vmatpush1.xpose.msra.mxu0 0.0
        %1522 = vmatprep.subr.mxu0 0.0
        %1523 = vmatpush1.xpose.msra.mxu0 0.0
        %1524 = vmatprep.subr.mxu0 0.0
        %1525 = vmatpush1.xpose.msra.mxu0 0.0
        %1526 = vmatprep.subr.mxu0 0.0
        %1527 = vmatpush1.xpose.msra.mxu0 0.0
        %1528 = vmatprep.subr.mxu0 0.0
        %1529 = vmatpush1.xpose.msra.mxu0 0.0
        %1530 = vmatprep.subr.mxu0 0.0
        %1531 = vmatpush1.xpose.msra.mxu0 0.0
        %1532 = vmatprep.subr.mxu0 0.0
        %1533 = vmatpush1.xpose.msra.mxu0 0.0
        %1534 = vmatprep.subr.mxu0 0.0
        %1535 = vmatpush1.xpose.msra.mxu0 0.0
        %1536 = vmatprep.subr.mxu0 0.0
        %1537 = vmatpush1.xpose.msra.mxu0 0.0
        %1538 = vmatprep.subr.mxu0 0.0
        %1539 = vmatpush1.xpose.msra.mxu0 0.0
        %1540 = vmatprep.subr.mxu0 0.0
        %1541 = vmatpush1.xpose.msra.mxu0 0.0
        %1542 = vmatprep.subr.mxu0 0.0
        %1543 = vmatpush1.xpose.msra.mxu0 0.0
        %1544 = vmatprep.subr.mxu0 0.0
        %1545 = vmatpush1.xpose.msra.mxu0 0.0
        %1546 = vmatprep.subr.mxu0 0.0
        %1547 = vmatpush1.xpose.msra.mxu0 0.0
        %1548 = vmatprep.subr.mxu0 0.0
        %1549 = vmatpush1.xpose.msra.mxu0 0.0
        %1550 = vmatprep.subr.mxu0 0.0
        %1551 = vmatpush1.xpose.msra.mxu0 0.0
        %1552 = vmatprep.subr.mxu0 0.0
        %1553 = vmatpush1.xpose.msra.mxu0 0.0
        %1554 = vmatprep.subr.mxu0 0.0
        %1555 = vmatpush1.xpose.msra.mxu0 0.0
        %1556 = vmatprep.mubr.f32.mxu0 0.0
        %1557 = vmatmul.mubr.f32.gmra.mrb[0].mxu0 %v1484
        %v1558 = vpop.f32.mrb[0].mxu0
        %v1559 = vadd.f32 0.0, %v1558
        %v1560 = vpop.f32.mrb[0].mxu0
        %1561 = vmatprep.mubr.f32.mxu0 0.0
        %1562 = vmatmul.mubr.f32.gmra.mrb[0].mxu0 %v1486
        %v1563 = vpop.f32.mrb[0].mxu0
        %v1564 = vadd.f32 0.0, %v1563
        %v1565 = vpop.f32.mrb[0].mxu0
        %1566 = vdwg.mxu0
        %v1567 = vmul.f32 %v978, 0.17677669
        %v1568 = vmul.f32 %v983, 0.17677669
        %v1569 = vmul.f32 %v1061, 0.17677669
        %v1570 = vmul.f32 %v1066, 0.17677669
        %v1571 = vmul.f32 %v1144, 0.17677669
        %v1572 = vmul.f32 %v1149, 0.17677669
        %v1573 = vmul.f32 %v1227, 0.17677669
        %v1574 = vmul.f32 %v1232, 0.17677669
        %v1575 = vmul.f32 %v1310, 0.17677669
        %v1576 = vmul.f32 %v1315, 0.17677669
        %v1577 = vmul.f32 %v1393, 0.17677669
        %v1578 = vmul.f32 %v1398, 0.17677669
        %v1579 = vmul.f32 %v1476, 0.17677669
        %v1580 = vmul.f32 %v1481, 0.17677669
        %v1581 = vmul.f32 %v1559, 0.17677669
        %v1582 = vmul.f32 %v1564, 0.17677669
        %v1583 = vlaneseq
        %v1584 = vshrl.u32 %v1583, 7
        %v1585 = vadd.s32 %v1584, 8
        %v1586 = vlaneseq
        %v1587 = vand.u32 %v1586, 127
        %vm1588 = vcmp.le.s32.totalorder %v1587, %v1584
        %vm1589 = vcmp.le.s32.totalorder %v1587, %v1585
        %v1590 = vsel %vm1588, 1, 0
        %v1591 = vsel %vm1589, 1, 0
        %vm1592 = vcmp.eq.s32.totalorder %v1590, 1
        %vm1593 = vcmp.eq.s32.totalorder %v1591, 1
        %v1594 = vsel %vm1592, %v1567, -1e+30
        %v1595 = vsel %vm1593, %v1568, -1e+30
        %v1596 = vsel %vm1592, %v1569, -1e+30
        %v1597 = vsel %vm1593, %v1570, -1e+30
        %v1598 = vsel %vm1592, %v1571, -1e+30
        %v1599 = vsel %vm1593, %v1572, -1e+30
        %v1600 = vsel %vm1592, %v1573, -1e+30
        %v1601 = vsel %vm1593, %v1574, -1e+30
        %v1602 = vsel %vm1592, %v1575, -1e+30
        %v1603 = vsel %vm1593, %v1576, -1e+30
        %v1604 = vsel %vm1592, %v1577, -1e+30
        %v1605 = vsel %vm1593, %v1578, -1e+30
        %v1606 = vsel %vm1592, %v1579, -1e+30
        %v1607 = vsel %vm1593, %v1580, -1e+30
        %v1608 = vsel %vm1592, %v1581, -1e+30
        %v1609 = vsel %vm1593, %v1582, -1e+30
        %vm1610 = vcmask 130048
        %v1611 = vsel %vm1610, %v1594, -inf
        %1612 = vmax.xlane.f32.xlu0 %v1611
        %v1613 = vpop.xlane.xlu0 %1612
        %v1614 = vsel %vm1610, %v1595, -inf
        %1615 = vmax.xlane.f32.xlu0 %v1614
        %v1616 = vpop.xlane.xlu0 %1615
        %v1617 = vsel %vm1610, %v1596, -inf
        %1618 = vmax.xlane.f32.xlu0 %v1617
        %v1619 = vpop.xlane.xlu0 %1618
        %v1620 = vsel %vm1610, %v1597, -inf
        %1621 = vmax.xlane.f32.xlu0 %v1620
        %v1622 = vpop.xlane.xlu0 %1621
        %v1623 = vsel %vm1610, %v1598, -inf
        %1624 = vmax.xlane.f32.xlu0 %v1623
        %v1625 = vpop.xlane.xlu0 %1624
        %v1626 = vsel %vm1610, %v1599, -inf
        %1627 = vmax.xlane.f32.xlu0 %v1626
        %v1628 = vpop.xlane.xlu0 %1627
        %v1629 = vsel %vm1610, %v1600, -inf
        %1630 = vmax.xlane.f32.xlu0 %v1629
        %v1631 = vpop.xlane.xlu0 %1630
        %v1632 = vsel %vm1610, %v1601, -inf
        %1633 = vmax.xlane.f32.xlu0 %v1632
        %v1634 = vpop.xlane.xlu0 %1633
        %v1635 = vsel %vm1610, %v1602, -inf
        %1636 = vmax.xlane.f32.xlu0 %v1635
        %v1637 = vpop.xlane.xlu0 %1636
        %v1638 = vsel %vm1610, %v1603, -inf
        %1639 = vmax.xlane.f32.xlu0 %v1638
        %v1640 = vpop.xlane.xlu0 %1639
        %v1641 = vsel %vm1610, %v1604, -inf
        %1642 = vmax.xlane.f32.xlu0 %v1641
        %v1643 = vpop.xlane.xlu0 %1642
        %v1644 = vsel %vm1610, %v1605, -inf
        %1645 = vmax.xlane.f32.xlu0 %v1644
        %v1646 = vpop.xlane.xlu0 %1645
        %v1647 = vsel %vm1610, %v1606, -inf
        %1648 = vmax.xlane.f32.xlu0 %v1647
        %v1649 = vpop.xlane.xlu0 %1648
        %v1650 = vsel %vm1610, %v1607, -inf
        %1651 = vmax.xlane.f32.xlu0 %v1650
        %v1652 = vpop.xlane.xlu0 %1651
        %v1653 = vsel %vm1610, %v1608, -inf
        %1654 = vmax.xlane.f32.xlu0 %v1653
        %v1655 = vpop.xlane.xlu0 %1654
        %v1656 = vsel %vm1610, %v1609, -inf
        %1657 = vmax.xlane.f32.xlu0 %v1656
        %v1658 = vpop.xlane.xlu0 %1657
        %v1659 = vsub.f32 %v1594, %v1613
        %v1660 = vsub.f32 %v1595, %v1616
        %v1661 = vsub.f32 %v1596, %v1619
        %v1662 = vsub.f32 %v1597, %v1622
        %v1663 = vsub.f32 %v1598, %v1625
        %v1664 = vsub.f32 %v1599, %v1628
        %v1665 = vsub.f32 %v1600, %v1631
        %v1666 = vsub.f32 %v1601, %v1634
        %v1667 = vsub.f32 %v1602, %v1637
        %v1668 = vsub.f32 %v1603, %v1640
        %v1669 = vsub.f32 %v1604, %v1643
        %v1670 = vsub.f32 %v1605, %v1646
        %v1671 = vsub.f32 %v1606, %v1649
        %v1672 = vsub.f32 %v1607, %v1652
        %v1673 = vsub.f32 %v1608, %v1655
        %v1674 = vsub.f32 %v1609, %v1658
        %v1675 = vmul.f32 %v1659, 1.442695
        %v1676 = vpow.pop %v1675
        %v1677 = vmul.f32 %v1660, 1.442695
        %v1678 = vpow.pop %v1677
        %v1679 = vmul.f32 %v1661, 1.442695
        %v1680 = vpow.pop %v1679
        %v1681 = vmul.f32 %v1662, 1.442695
        %v1682 = vpow.pop %v1681
        %v1683 = vmul.f32 %v1663, 1.442695
        %v1684 = vpow.pop %v1683
        %v1685 = vmul.f32 %v1664, 1.442695
        %v1686 = vpow.pop %v1685
        %v1687 = vmul.f32 %v1665, 1.442695
        %v1688 = vpow.pop %v1687
        %v1689 = vmul.f32 %v1666, 1.442695
        %v1690 = vpow.pop %v1689
        %v1691 = vmul.f32 %v1667, 1.442695
        %v1692 = vpow.pop %v1691
        %v1693 = vmul.f32 %v1668, 1.442695
        %v1694 = vpow.pop %v1693
        %v1695 = vmul.f32 %v1669, 1.442695
        %v1696 = vpow.pop %v1695
        %v1697 = vmul.f32 %v1670, 1.442695
        %v1698 = vpow.pop %v1697
        %v1699 = vmul.f32 %v1671, 1.442695
        %v1700 = vpow.pop %v1699
        %v1701 = vmul.f32 %v1672, 1.442695
        %v1702 = vpow.pop %v1701
        %v1703 = vmul.f32 %v1673, 1.442695
        %v1704 = vpow.pop %v1703
        %v1705 = vmul.f32 %v1674, 1.442695
        %v1706 = vpow.pop %v1705
        %v1707 = vsel %vm1610, %v1676, 0.0
        %1708 = vadd.xlane.f32.xlu0 %v1707
        %v1709 = vpop.xlane.xlu0 %1708
        %v1710 = vsel %vm1610, %v1678, 0.0
        %1711 = vadd.xlane.f32.xlu0 %v1710
        %v1712 = vpop.xlane.xlu0 %1711
        %v1713 = vsel %vm1610, %v1680, 0.0
        %1714 = vadd.xlane.f32.xlu0 %v1713
        %v1715 = vpop.xlane.xlu0 %1714
        %v1716 = vsel %vm1610, %v1682, 0.0
        %1717 = vadd.xlane.f32.xlu0 %v1716
        %v1718 = vpop.xlane.xlu0 %1717
        %v1719 = vsel %vm1610, %v1684, 0.0
        %1720 = vadd.xlane.f32.xlu0 %v1719
        %v1721 = vpop.xlane.xlu0 %1720
        %v1722 = vsel %vm1610, %v1686, 0.0
        %1723 = vadd.xlane.f32.xlu0 %v1722
        %v1724 = vpop.xlane.xlu0 %1723
        %v1725 = vsel %vm1610, %v1688, 0.0
        %1726 = vadd.xlane.f32.xlu0 %v1725
        %v1727 = vpop.xlane.xlu0 %1726
        %v1728 = vsel %vm1610, %v1690, 0.0
        %1729 = vadd.xlane.f32.xlu0 %v1728
        %v1730 = vpop.xlane.xlu0 %1729
        %v1731 = vsel %vm1610, %v1692, 0.0
        %1732 = vadd.xlane.f32.xlu0 %v1731
        %v1733 = vpop.xlane.xlu0 %1732
        %v1734 = vsel %vm1610, %v1694, 0.0
        %1735 = vadd.xlane.f32.xlu0 %v1734
        %v1736 = vpop.xlane.xlu0 %1735
        %v1737 = vsel %vm1610, %v1696, 0.0
        %1738 = vadd.xlane.f32.xlu0 %v1737
        %v1739 = vpop.xlane.xlu0 %1738
        %v1740 = vsel %vm1610, %v1698, 0.0
        %1741 = vadd.xlane.f32.xlu0 %v1740
        %v1742 = vpop.xlane.xlu0 %1741
        %v1743 = vsel %vm1610, %v1700, 0.0
        %1744 = vadd.xlane.f32.xlu0 %v1743
        %v1745 = vpop.xlane.xlu0 %1744
        %v1746 = vsel %vm1610, %v1702, 0.0
        %1747 = vadd.xlane.f32.xlu0 %v1746
        %v1748 = vpop.xlane.xlu0 %1747
        %v1749 = vsel %vm1610, %v1704, 0.0
        %1750 = vadd.xlane.f32.xlu0 %v1749
        %v1751 = vpop.xlane.xlu0 %1750
        %v1752 = vsel %vm1610, %v1706, 0.0
        %1753 = vadd.xlane.f32.xlu0 %v1752
        %v1754 = vpop.xlane.xlu0 %1753
        %v1755 = vrcp.pop %v1709
        %v1756 = vrcp.pop %v1712
        %v1757 = vrcp.pop %v1715
        %v1758 = vrcp.pop %v1718
        %v1759 = vrcp.pop %v1721
        %v1760 = vrcp.pop %v1724
        %v1761 = vrcp.pop %v1727
        %v1762 = vrcp.pop %v1730
        %v1763 = vrcp.pop %v1733
        %v1764 = vrcp.pop %v1736
        %v1765 = vrcp.pop %v1739
        %v1766 = vrcp.pop %v1742
        %v1767 = vrcp.pop %v1745
        %v1768 = vrcp.pop %v1748
        %v1769 = vrcp.pop %v1751
        %v1770 = vrcp.pop %v1754
        %v1771 = vmul.f32 %v1676, %v1755
        %v1772 = vmul.f32 %v1678, %v1756
        %v1773 = vmul.f32 %v1680, %v1757
        %v1774 = vmul.f32 %v1682, %v1758
        %v1775 = vmul.f32 %v1684, %v1759
        %v1776 = vmul.f32 %v1686, %v1760
        %v1777 = vmul.f32 %v1688, %v1761
        %v1778 = vmul.f32 %v1690, %v1762
        %v1779 = vmul.f32 %v1692, %v1763
        %v1780 = vmul.f32 %v1694, %v1764
        %v1781 = vmul.f32 %v1696, %v1765
        %v1782 = vmul.f32 %v1698, %v1766
        %v1783 = vmul.f32 %v1700, %v1767
        %v1784 = vmul.f32 %v1702, %v1768
        %v1785 = vmul.f32 %v1704, %v1769
        %v1786 = vmul.f32 %v1706, %v1770
        %v1788 = vsel %vm1610, %v1771, 0
        %v1791 = vsel %vm1610, %v1772, 0
        %1793 = vmatprep.subr.mxu0 0.0
        %1794 = vmatpush1.msra.mxu0 %v788
        %1795 = vmatprep.subr.mxu0 0.0
        %1796 = vmatpush1.msra.mxu0 %v793
        %1797 = vmatprep.subr.mxu0 0.0
        %1798 = vmatpush1.msra.mxu0 0.0
        %1799 = vmatprep.subr.mxu0 0.0
        %1800 = vmatpush1.msra.mxu0 0.0
        %1801 = vmatprep.subr.mxu0 0.0
        %1802 = vmatpush1.msra.mxu0 0.0
        %1803 = vmatprep.subr.mxu0 0.0
        %1804 = vmatpush1.msra.mxu0 0.0
        %1805 = vmatprep.subr.mxu0 0.0
        %1806 = vmatpush1.msra.mxu0 0.0
        %1807 = vmatprep.subr.mxu0 0.0
        %1808 = vmatpush1.msra.mxu0 0.0
        %1809 = vmatprep.subr.mxu0 0.0
        %1810 = vmatpush1.msra.mxu0 0.0
        %1811 = vmatprep.subr.mxu0 0.0
        %1812 = vmatpush1.msra.mxu0 0.0
        %1813 = vmatprep.subr.mxu0 0.0
        %1814 = vmatpush1.msra.mxu0 0.0
        %1815 = vmatprep.subr.mxu0 0.0
        %1816 = vmatpush1.msra.mxu0 0.0
        %1817 = vmatprep.subr.mxu0 0.0
        %1818 = vmatpush1.msra.mxu0 0.0
        %1819 = vmatprep.subr.mxu0 0.0
        %1820 = vmatpush1.msra.mxu0 0.0
        %1821 = vmatprep.subr.mxu0 0.0
        %1822 = vmatpush1.msra.mxu0 0.0
        %1823 = vmatprep.subr.mxu0 0.0
        %1824 = vmatpush1.msra.mxu0 0.0
        %1825 = vmatprep.subr.mxu0 0.0
        %1826 = vmatpush1.msra.mxu0 0.0
        %1827 = vmatprep.subr.mxu0 0.0
        %1828 = vmatpush1.msra.mxu0 0.0
        %1829 = vmatprep.subr.mxu0 0.0
        %1830 = vmatpush1.msra.mxu0 0.0
        %1831 = vmatprep.subr.mxu0 0.0
        %1832 = vmatpush1.msra.mxu0 0.0
        %1833 = vmatprep.subr.mxu0 0.0
        %1834 = vmatpush1.msra.mxu0 0.0
        %1835 = vmatprep.subr.mxu0 0.0
        %1836 = vmatpush1.msra.mxu0 0.0
        %1837 = vmatprep.subr.mxu0 0.0
        %1838 = vmatpush1.msra.mxu0 0.0
        %1839 = vmatprep.subr.mxu0 0.0
        %1840 = vmatpush1.msra.mxu0 0.0
        %1841 = vmatprep.subr.mxu0 0.0
        %1842 = vmatpush1.msra.mxu0 0.0
        %1843 = vmatprep.subr.mxu0 0.0
        %1844 = vmatpush1.msra.mxu0 0.0
        %1845 = vmatprep.subr.mxu0 0.0
        %1846 = vmatpush1.msra.mxu0 0.0
        %1847 = vmatprep.subr.mxu0 0.0
        %1848 = vmatpush1.msra.mxu0 0.0
        %1849 = vmatprep.subr.mxu0 0.0
        %1850 = vmatpush1.msra.mxu0 0.0
        %1851 = vmatprep.subr.mxu0 0.0
        %1852 = vmatpush1.msra.mxu0 0.0
        %1853 = vmatprep.subr.mxu0 0.0
        %1854 = vmatpush1.msra.mxu0 0.0
        %1855 = vmatprep.subr.mxu0 0.0
        %1856 = vmatpush1.msra.mxu0 0.0
        %1857 = vmatprep.mubr.f32.mxu0 0.0
        %1858 = vmatmul.mubr.f32.gmra.mrb[0].mxu0 %v1788
        %v1859 = vpop.f32.mrb[0].mxu0
        %v1860 = vadd.f32 0.0, %v1859
        %v1861 = vpop.f32.mrb[0].mxu0
        %1862 = vmatprep.mubr.f32.mxu0 0.0
        %1863 = vmatmul.mubr.f32.gmra.mrb[0].mxu0 %v1791
        %v1864 = vpop.f32.mrb[0].mxu0
        %v1865 = vadd.f32 0.0, %v1864
        %v1866 = vpop.f32.mrb[0].mxu0
        %1867 = vdwg.mxu0
        %v1869 = vsel %vm1610, %v1773, 0
        %v1872 = vsel %vm1610, %v1774, 0
        %1874 = vmatprep.subr.mxu0 0.0
        %1875 = vmatpush1.msra.mxu0 %v798
        %1876 = vmatprep.subr.mxu0 0.0
        %1877 = vmatpush1.msra.mxu0 %v803
        %1878 = vmatprep.subr.mxu0 0.0
        %1879 = vmatpush1.msra.mxu0 0.0
        %1880 = vmatprep.subr.mxu0 0.0
        %1881 = vmatpush1.msra.mxu0 0.0
        %1882 = vmatprep.subr.mxu0 0.0
        %1883 = vmatpush1.msra.mxu0 0.0
        %1884 = vmatprep.subr.mxu0 0.0
        %1885 = vmatpush1.msra.mxu0 0.0
        %1886 = vmatprep.subr.mxu0 0.0
        %1887 = vmatpush1.msra.mxu0 0.0
        %1888 = vmatprep.subr.mxu0 0.0
        %1889 = vmatpush1.msra.mxu0 0.0
        %1890 = vmatprep.subr.mxu0 0.0
        %1891 = vmatpush1.msra.mxu0 0.0
        %1892 = vmatprep.subr.mxu0 0.0
        %1893 = vmatpush1.msra.mxu0 0.0
        %1894 = vmatprep.subr.mxu0 0.0
        %1895 = vmatpush1.msra.mxu0 0.0
        %1896 = vmatprep.subr.mxu0 0.0
        %1897 = vmatpush1.msra.mxu0 0.0
        %1898 = vmatprep.subr.mxu0 0.0
        %1899 = vmatpush1.msra.mxu0 0.0
        %1900 = vmatprep.subr.mxu0 0.0
        %1901 = vmatpush1.msra.mxu0 0.0
        %1902 = vmatprep.subr.mxu0 0.0
        %1903 = vmatpush1.msra.mxu0 0.0
        %1904 = vmatprep.subr.mxu0 0.0
        %1905 = vmatpush1.msra.mxu0 0.0
        %1906 = vmatprep.subr.mxu0 0.0
        %1907 = vmatpush1.msra.mxu0 0.0
        %1908 = vmatprep.subr.mxu0 0.0
        %1909 = vmatpush1.msra.mxu0 0.0
        %1910 = vmatprep.subr.mxu0 0.0
        %1911 = vmatpush1.msra.mxu0 0.0
        %1912 = vmatprep.subr.mxu0 0.0
        %1913 = vmatpush1.msra.mxu0 0.0
        %1914 = vmatprep.subr.mxu0 0.0
        %1915 = vmatpush1.msra.mxu0 0.0
        %1916 = vmatprep.subr.mxu0 0.0
        %1917 = vmatpush1.msra.mxu0 0.0
        %1918 = vmatprep.subr.mxu0 0.0
        %1919 = vmatpush1.msra.mxu0 0.0
        %1920 = vmatprep.subr.mxu0 0.0
        %1921 = vmatpush1.msra.mxu0 0.0
        %1922 = vmatprep.subr.mxu0 0.0
        %1923 = vmatpush1.msra.mxu0 0.0
        %1924 = vmatprep.subr.mxu0 0.0
        %1925 = vmatpush1.msra.mxu0 0.0
        %1926 = vmatprep.subr.mxu0 0.0
        %1927 = vmatpush1.msra.mxu0 0.0
        %1928 = vmatprep.subr.mxu0 0.0
        %1929 = vmatpush1.msra.mxu0 0.0
        %1930 = vmatprep.subr.mxu0 0.0
        %1931 = vmatpush1.msra.mxu0 0.0
        %1932 = vmatprep.subr.mxu0 0.0
        %1933 = vmatpush1.msra.mxu0 0.0
        %1934 = vmatprep.subr.mxu0 0.0
        %1935 = vmatpush1.msra.mxu0 0.0
        %1936 = vmatprep.subr.mxu0 0.0
        %1937 = vmatpush1.msra.mxu0 0.0
        %1938 = vmatprep.mubr.f32.mxu0 0.0
        %1939 = vmatmul.mubr.f32.gmra.mrb[0].mxu0 %v1869
        %v1940 = vpop.f32.mrb[0].mxu0
        %v1941 = vadd.f32 0.0, %v1940
        %v1942 = vpop.f32.mrb[0].mxu0
        %1943 = vmatprep.mubr.f32.mxu0 0.0
        %1944 = vmatmul.mubr.f32.gmra.mrb[0].mxu0 %v1872
        %v1945 = vpop.f32.mrb[0].mxu0
        %v1946 = vadd.f32 0.0, %v1945
        %v1947 = vpop.f32.mrb[0].mxu0
        %1948 = vdwg.mxu0
        %v1950 = vsel %vm1610, %v1775, 0
        %v1953 = vsel %vm1610, %v1776, 0
        %1955 = vmatprep.subr.mxu0 0.0
        %1956 = vmatpush1.msra.mxu0 %v867
        %1957 = vmatprep.subr.mxu0 0.0
        %1958 = vmatpush1.msra.mxu0 %v869
        %1959 = vmatprep.subr.mxu0 0.0
        %1960 = vmatpush1.msra.mxu0 0.0
        %1961 = vmatprep.subr.mxu0 0.0
        %1962 = vmatpush1.msra.mxu0 0.0
        %1963 = vmatprep.subr.mxu0 0.0
        %1964 = vmatpush1.msra.mxu0 0.0
        %1965 = vmatprep.subr.mxu0 0.0
        %1966 = vmatpush1.msra.mxu0 0.0
        %1967 = vmatprep.subr.mxu0 0.0
        %1968 = vmatpush1.msra.mxu0 0.0
        %1969 = vmatprep.subr.mxu0 0.0
        %1970 = vmatpush1.msra.mxu0 0.0
        %1971 = vmatprep.subr.mxu0 0.0
        %1972 = vmatpush1.msra.mxu0 0.0
        %1973 = vmatprep.subr.mxu0 0.0
        %1974 = vmatpush1.msra.mxu0 0.0
        %1975 = vmatprep.subr.mxu0 0.0
        %1976 = vmatpush1.msra.mxu0 0.0
        %1977 = vmatprep.subr.mxu0 0.0
        %1978 = vmatpush1.msra.mxu0 0.0
        %1979 = vmatprep.subr.mxu0 0.0
        %1980 = vmatpush1.msra.mxu0 0.0
        %1981 = vmatprep.subr.mxu0 0.0
        %1982 = vmatpush1.msra.mxu0 0.0
        %1983 = vmatprep.subr.mxu0 0.0
        %1984 = vmatpush1.msra.mxu0 0.0
        %1985 = vmatprep.subr.mxu0 0.0
        %1986 = vmatpush1.msra.mxu0 0.0
        %1987 = vmatprep.subr.mxu0 0.0
        %1988 = vmatpush1.msra.mxu0 0.0
        %1989 = vmatprep.subr.mxu0 0.0
        %1990 = vmatpush1.msra.mxu0 0.0
        %1991 = vmatprep.subr.mxu0 0.0
        %1992 = vmatpush1.msra.mxu0 0.0
        %1993 = vmatprep.subr.mxu0 0.0
        %1994 = vmatpush1.msra.mxu0 0.0
        %1995 = vmatprep.subr.mxu0 0.0
        %1996 = vmatpush1.msra.mxu0 0.0
        %1997 = vmatprep.subr.mxu0 0.0
        %1998 = vmatpush1.msra.mxu0 0.0
        %1999 = vmatprep.subr.mxu0 0.0
        %2000 = vmatpush1.msra.mxu0 0.0
        %2001 = vmatprep.subr.mxu0 0.0
        %2002 = vmatpush1.msra.mxu0 0.0
        %2003 = vmatprep.subr.mxu0 0.0
        %2004 = vmatpush1.msra.mxu0 0.0
        %2005 = vmatprep.subr.mxu0 0.0
        %2006 = vmatpush1.msra.mxu0 0.0
        %2007 = vmatprep.subr.mxu0 0.0
        %2008 = vmatpush1.msra.mxu0 0.0
        %2009 = vmatprep.subr.mxu0 0.0
        %2010 = vmatpush1.msra.mxu0 0.0
        %2011 = vmatprep.subr.mxu0 0.0
        %2012 = vmatpush1.msra.mxu0 0.0
        %2013 = vmatprep.subr.mxu0 0.0
        %2014 = vmatpush1.msra.mxu0 0.0
        %2015 = vmatprep.subr.mxu0 0.0
        %2016 = vmatpush1.msra.mxu0 0.0
        %2017 = vmatprep.subr.mxu0 0.0
        %2018 = vmatpush1.msra.mxu0 0.0
        %2019 = vmatprep.mubr.f32.mxu0 0.0
        %2020 = vmatmul.mubr.f32.gmra.mrb[0].mxu0 %v1950
        %v2021 = vpop.f32.mrb[0].mxu0
        %v2022 = vadd.f32 0.0, %v2021
        %v2023 = vpop.f32.mrb[0].mxu0
        %2024 = vmatprep.mubr.f32.mxu0 0.0
        %2025 = vmatmul.mubr.f32.gmra.mrb[0].mxu0 %v1953
        %v2026 = vpop.f32.mrb[0].mxu0
        %v2027 = vadd.f32 0.0, %v2026
        %v2028 = vpop.f32.mrb[0].mxu0
        %2029 = vdwg.mxu0
        %v2031 = vsel %vm1610, %v1777, 0
        %v2034 = vsel %vm1610, %v1778, 0
        %2036 = vmatprep.subr.mxu0 0.0
        %2037 = vmatpush1.msra.mxu0 %v871
        %2038 = vmatprep.subr.mxu0 0.0
        %2039 = vmatpush1.msra.mxu0 %v873
        %2040 = vmatprep.subr.mxu0 0.0
        %2041 = vmatpush1.msra.mxu0 0.0
        %2042 = vmatprep.subr.mxu0 0.0
        %2043 = vmatpush1.msra.mxu0 0.0
        %2044 = vmatprep.subr.mxu0 0.0
        %2045 = vmatpush1.msra.mxu0 0.0
        %2046 = vmatprep.subr.mxu0 0.0
        %2047 = vmatpush1.msra.mxu0 0.0
        %2048 = vmatprep.subr.mxu0 0.0
        %2049 = vmatpush1.msra.mxu0 0.0
        %2050 = vmatprep.subr.mxu0 0.0
        %2051 = vmatpush1.msra.mxu0 0.0
        %2052 = vmatprep.subr.mxu0 0.0
        %2053 = vmatpush1.msra.mxu0 0.0
        %2054 = vmatprep.subr.mxu0 0.0
        %2055 = vmatpush1.msra.mxu0 0.0
        %2056 = vmatprep.subr.mxu0 0.0
        %2057 = vmatpush1.msra.mxu0 0.0
        %2058 = vmatprep.subr.mxu0 0.0
        %2059 = vmatpush1.msra.mxu0 0.0
        %2060 = vmatprep.subr.mxu0 0.0
        %2061 = vmatpush1.msra.mxu0 0.0
        %2062 = vmatprep.subr.mxu0 0.0
        %2063 = vmatpush1.msra.mxu0 0.0
        %2064 = vmatprep.subr.mxu0 0.0
        %2065 = vmatpush1.msra.mxu0 0.0
        %2066 = vmatprep.subr.mxu0 0.0
        %2067 = vmatpush1.msra.mxu0 0.0
        %2068 = vmatprep.subr.mxu0 0.0
        %2069 = vmatpush1.msra.mxu0 0.0
        %2070 = vmatprep.subr.mxu0 0.0
        %2071 = vmatpush1.msra.mxu0 0.0
        %2072 = vmatprep.subr.mxu0 0.0
        %2073 = vmatpush1.msra.mxu0 0.0
        %2074 = vmatprep.subr.mxu0 0.0
        %2075 = vmatpush1.msra.mxu0 0.0
        %2076 = vmatprep.subr.mxu0 0.0
        %2077 = vmatpush1.msra.mxu0 0.0
        %2078 = vmatprep.subr.mxu0 0.0
        %2079 = vmatpush1.msra.mxu0 0.0
        %2080 = vmatprep.subr.mxu0 0.0
        %2081 = vmatpush1.msra.mxu0 0.0
        %2082 = vmatprep.subr.mxu0 0.0
        %2083 = vmatpush1.msra.mxu0 0.0
        %2084 = vmatprep.subr.mxu0 0.0
        %2085 = vmatpush1.msra.mxu0 0.0
        %2086 = vmatprep.subr.mxu0 0.0
        %2087 = vmatpush1.msra.mxu0 0.0
        %2088 = vmatprep.subr.mxu0 0.0
        %2089 = vmatpush1.msra.mxu0 0.0
        %2090 = vmatprep.subr.mxu0 0.0
        %2091 = vmatpush1.msra.mxu0 0.0
        %2092 = vmatprep.subr.mxu0 0.0
        %2093 = vmatpush1.msra.mxu0 0.0
        %2094 = vmatprep.subr.mxu0 0.0
        %2095 = vmatpush1.msra.mxu0 0.0
        %2096 = vmatprep.subr.mxu0 0.0
        %2097 = vmatpush1.msra.mxu0 0.0
        %2098 = vmatprep.subr.mxu0 0.0
        %2099 = vmatpush1.msra.mxu0 0.0
        %2100 = vmatprep.mubr.f32.mxu0 0.0
        %2101 = vmatmul.mubr.f32.gmra.mrb[0].mxu0 %v2031
        %v2102 = vpop.f32.mrb[0].mxu0
        %v2103 = vadd.f32 0.0, %v2102
        %v2104 = vpop.f32.mrb[0].mxu0
        %2105 = vmatprep.mubr.f32.mxu0 0.0
        %2106 = vmatmul.mubr.f32.gmra.mrb[0].mxu0 %v2034
        %v2107 = vpop.f32.mrb[0].mxu0
        %v2108 = vadd.f32 0.0, %v2107
        %v2109 = vpop.f32.mrb[0].mxu0
        %2110 = vdwg.mxu0
        %v2112 = vsel %vm1610, %v1779, 0
        %v2115 = vsel %vm1610, %v1780, 0
        %2117 = vmatprep.subr.mxu0 0.0
        %2118 = vmatpush1.msra.mxu0 %v879
        %2119 = vmatprep.subr.mxu0 0.0
        %2120 = vmatpush1.msra.mxu0 %v881
        %2121 = vmatprep.subr.mxu0 0.0
        %2122 = vmatpush1.msra.mxu0 0.0
        %2123 = vmatprep.subr.mxu0 0.0
        %2124 = vmatpush1.msra.mxu0 0.0
        %2125 = vmatprep.subr.mxu0 0.0
        %2126 = vmatpush1.msra.mxu0 0.0
        %2127 = vmatprep.subr.mxu0 0.0
        %2128 = vmatpush1.msra.mxu0 0.0
        %2129 = vmatprep.subr.mxu0 0.0
        %2130 = vmatpush1.msra.mxu0 0.0
        %2131 = vmatprep.subr.mxu0 0.0
        %2132 = vmatpush1.msra.mxu0 0.0
        %2133 = vmatprep.subr.mxu0 0.0
        %2134 = vmatpush1.msra.mxu0 0.0
        %2135 = vmatprep.subr.mxu0 0.0
        %2136 = vmatpush1.msra.mxu0 0.0
        %2137 = vmatprep.subr.mxu0 0.0
        %2138 = vmatpush1.msra.mxu0 0.0
        %2139 = vmatprep.subr.mxu0 0.0
        %2140 = vmatpush1.msra.mxu0 0.0
        %2141 = vmatprep.subr.mxu0 0.0
        %2142 = vmatpush1.msra.mxu0 0.0
        %2143 = vmatprep.subr.mxu0 0.0
        %2144 = vmatpush1.msra.mxu0 0.0
        %2145 = vmatprep.subr.mxu0 0.0
        %2146 = vmatpush1.msra.mxu0 0.0
        %2147 = vmatprep.subr.mxu0 0.0
        %2148 = vmatpush1.msra.mxu0 0.0
        %2149 = vmatprep.subr.mxu0 0.0
        %2150 = vmatpush1.msra.mxu0 0.0
        %2151 = vmatprep.subr.mxu0 0.0
        %2152 = vmatpush1.msra.mxu0 0.0
        %2153 = vmatprep.subr.mxu0 0.0
        %2154 = vmatpush1.msra.mxu0 0.0
        %2155 = vmatprep.subr.mxu0 0.0
        %2156 = vmatpush1.msra.mxu0 0.0
        %2157 = vmatprep.subr.mxu0 0.0
        %2158 = vmatpush1.msra.mxu0 0.0
        %2159 = vmatprep.subr.mxu0 0.0
        %2160 = vmatpush1.msra.mxu0 0.0
        %2161 = vmatprep.subr.mxu0 0.0
        %2162 = vmatpush1.msra.mxu0 0.0
        %2163 = vmatprep.subr.mxu0 0.0
        %2164 = vmatpush1.msra.mxu0 0.0
        %2165 = vmatprep.subr.mxu0 0.0
        %2166 = vmatpush1.msra.mxu0 0.0
        %2167 = vmatprep.subr.mxu0 0.0
        %2168 = vmatpush1.msra.mxu0 0.0
        %2169 = vmatprep.subr.mxu0 0.0
        %2170 = vmatpush1.msra.mxu0 0.0
        %2171 = vmatprep.subr.mxu0 0.0
        %2172 = vmatpush1.msra.mxu0 0.0
        %2173 = vmatprep.subr.mxu0 0.0
        %2174 = vmatpush1.msra.mxu0 0.0
        %2175 = vmatprep.subr.mxu0 0.0
        %2176 = vmatpush1.msra.mxu0 0.0
        %2177 = vmatprep.subr.mxu0 0.0
        %2178 = vmatpush1.msra.mxu0 0.0
        %2179 = vmatprep.subr.mxu0 0.0
        %2180 = vmatpush1.msra.mxu0 0.0
        %2181 = vmatprep.mubr.f32.mxu0 0.0
        %2182 = vmatmul.mubr.f32.gmra.mrb[0].mxu0 %v2112
        %v2183 = vpop.f32.mrb[0].mxu0
        %v2184 = vadd.f32 0.0, %v2183
        %v2185 = vpop.f32.mrb[0].mxu0
        %2186 = vmatprep.mubr.f32.mxu0 0.0
        %2187 = vmatmul.mubr.f32.gmra.mrb[0].mxu0 %v2115
        %v2188 = vpop.f32.mrb[0].mxu0
        %v2189 = vadd.f32 0.0, %v2188
        %v2190 = vpop.f32.mrb[0].mxu0
        %2191 = vdwg.mxu0
        %v2193 = vsel %vm1610, %v1781, 0
        %v2196 = vsel %vm1610, %v1782, 0
        %2198 = vmatprep.subr.mxu0 0.0
        %2199 = vmatpush1.msra.mxu0 %v883
        %2200 = vmatprep.subr.mxu0 0.0
        %2201 = vmatpush1.msra.mxu0 %v885
        %2202 = vmatprep.subr.mxu0 0.0
        %2203 = vmatpush1.msra.mxu0 0.0
        %2204 = vmatprep.subr.mxu0 0.0
        %2205 = vmatpush1.msra.mxu0 0.0
        %2206 = vmatprep.subr.mxu0 0.0
        %2207 = vmatpush1.msra.mxu0 0.0
        %2208 = vmatprep.subr.mxu0 0.0
        %2209 = vmatpush1.msra.mxu0 0.0
        %2210 = vmatprep.subr.mxu0 0.0
        %2211 = vmatpush1.msra.mxu0 0.0
        %2212 = vmatprep.subr.mxu0 0.0
        %2213 = vmatpush1.msra.mxu0 0.0
        %2214 = vmatprep.subr.mxu0 0.0
        %2215 = vmatpush1.msra.mxu0 0.0
        %2216 = vmatprep.subr.mxu0 0.0
        %2217 = vmatpush1.msra.mxu0 0.0
        %2218 = vmatprep.subr.mxu0 0.0
        %2219 = vmatpush1.msra.mxu0 0.0
        %2220 = vmatprep.subr.mxu0 0.0
        %2221 = vmatpush1.msra.mxu0 0.0
        %2222 = vmatprep.subr.mxu0 0.0
        %2223 = vmatpush1.msra.mxu0 0.0
        %2224 = vmatprep.subr.mxu0 0.0
        %2225 = vmatpush1.msra.mxu0 0.0
        %2226 = vmatprep.subr.mxu0 0.0
        %2227 = vmatpush1.msra.mxu0 0.0
        %2228 = vmatprep.subr.mxu0 0.0
        %2229 = vmatpush1.msra.mxu0 0.0
        %2230 = vmatprep.subr.mxu0 0.0
        %2231 = vmatpush1.msra.mxu0 0.0
        %2232 = vmatprep.subr.mxu0 0.0
        %2233 = vmatpush1.msra.mxu0 0.0
        %2234 = vmatprep.subr.mxu0 0.0
        %2235 = vmatpush1.msra.mxu0 0.0
        %2236 = vmatprep.subr.mxu0 0.0
        %2237 = vmatpush1.msra.mxu0 0.0
        %2238 = vmatprep.subr.mxu0 0.0
        %2239 = vmatpush1.msra.mxu0 0.0
        %2240 = vmatprep.subr.mxu0 0.0
        %2241 = vmatpush1.msra.mxu0 0.0
        %2242 = vmatprep.subr.mxu0 0.0
        %2243 = vmatpush1.msra.mxu0 0.0
        %2244 = vmatprep.subr.mxu0 0.0
        %2245 = vmatpush1.msra.mxu0 0.0
        %2246 = vmatprep.subr.mxu0 0.0
        %2247 = vmatpush1.msra.mxu0 0.0
        %2248 = vmatprep.subr.mxu0 0.0
        %2249 = vmatpush1.msra.mxu0 0.0
        %2250 = vmatprep.subr.mxu0 0.0
        %2251 = vmatpush1.msra.mxu0 0.0
        %2252 = vmatprep.subr.mxu0 0.0
        %2253 = vmatpush1.msra.mxu0 0.0
        %2254 = vmatprep.subr.mxu0 0.0
        %2255 = vmatpush1.msra.mxu0 0.0
        %2256 = vmatprep.subr.mxu0 0.0
        %2257 = vmatpush1.msra.mxu0 0.0
        %2258 = vmatprep.subr.mxu0 0.0
        %2259 = vmatpush1.msra.mxu0 0.0
        %2260 = vmatprep.subr.mxu0 0.0
        %2261 = vmatpush1.msra.mxu0 0.0
        %2262 = vmatprep.mubr.f32.mxu0 0.0
        %2263 = vmatmul.mubr.f32.gmra.mrb[0].mxu0 %v2193
        %v2264 = vpop.f32.mrb[0].mxu0
        %v2265 = vadd.f32 0.0, %v2264
        %v2266 = vpop.f32.mrb[0].mxu0
        %2267 = vmatprep.mubr.f32.mxu0 0.0
        %2268 = vmatmul.mubr.f32.gmra.mrb[0].mxu0 %v2196
        %v2269 = vpop.f32.mrb[0].mxu0
        %v2270 = vadd.f32 0.0, %v2269
        %v2271 = vpop.f32.mrb[0].mxu0
        %2272 = vdwg.mxu0
        %v2274 = vsel %vm1610, %v1783, 0
        %v2277 = vsel %vm1610, %v1784, 0
        %2279 = vmatprep.subr.mxu0 0.0
        %2280 = vmatpush1.msra.mxu0 %v891
        %2281 = vmatprep.subr.mxu0 0.0
        %2282 = vmatpush1.msra.mxu0 %v893
        %2283 = vmatprep.subr.mxu0 0.0
        %2284 = vmatpush1.msra.mxu0 0.0
        %2285 = vmatprep.subr.mxu0 0.0
        %2286 = vmatpush1.msra.mxu0 0.0
        %2287 = vmatprep.subr.mxu0 0.0
        %2288 = vmatpush1.msra.mxu0 0.0
        %2289 = vmatprep.subr.mxu0 0.0
        %2290 = vmatpush1.msra.mxu0 0.0
        %2291 = vmatprep.subr.mxu0 0.0
        %2292 = vmatpush1.msra.mxu0 0.0
        %2293 = vmatprep.subr.mxu0 0.0
        %2294 = vmatpush1.msra.mxu0 0.0
        %2295 = vmatprep.subr.mxu0 0.0
        %2296 = vmatpush1.msra.mxu0 0.0
        %2297 = vmatprep.subr.mxu0 0.0
        %2298 = vmatpush1.msra.mxu0 0.0
        %2299 = vmatprep.subr.mxu0 0.0
        %2300 = vmatpush1.msra.mxu0 0.0
        %2301 = vmatprep.subr.mxu0 0.0
        %2302 = vmatpush1.msra.mxu0 0.0
        %2303 = vmatprep.subr.mxu0 0.0
        %2304 = vmatpush1.msra.mxu0 0.0
        %2305 = vmatprep.subr.mxu0 0.0
        %2306 = vmatpush1.msra.mxu0 0.0
        %2307 = vmatprep.subr.mxu0 0.0
        %2308 = vmatpush1.msra.mxu0 0.0
        %2309 = vmatprep.subr.mxu0 0.0
        %2310 = vmatpush1.msra.mxu0 0.0
        %2311 = vmatprep.subr.mxu0 0.0
        %2312 = vmatpush1.msra.mxu0 0.0
        %2313 = vmatprep.subr.mxu0 0.0
        %2314 = vmatpush1.msra.mxu0 0.0
        %2315 = vmatprep.subr.mxu0 0.0
        %2316 = vmatpush1.msra.mxu0 0.0
        %2317 = vmatprep.subr.mxu0 0.0
        %2318 = vmatpush1.msra.mxu0 0.0
        %2319 = vmatprep.subr.mxu0 0.0
        %2320 = vmatpush1.msra.mxu0 0.0
        %2321 = vmatprep.subr.mxu0 0.0
        %2322 = vmatpush1.msra.mxu0 0.0
        %2323 = vmatprep.subr.mxu0 0.0
        %2324 = vmatpush1.msra.mxu0 0.0
        %2325 = vmatprep.subr.mxu0 0.0
        %2326 = vmatpush1.msra.mxu0 0.0
        %2327 = vmatprep.subr.mxu0 0.0
        %2328 = vmatpush1.msra.mxu0 0.0
        %2329 = vmatprep.subr.mxu0 0.0
        %2330 = vmatpush1.msra.mxu0 0.0
        %2331 = vmatprep.subr.mxu0 0.0
        %2332 = vmatpush1.msra.mxu0 0.0
        %2333 = vmatprep.subr.mxu0 0.0
        %2334 = vmatpush1.msra.mxu0 0.0
        %2335 = vmatprep.subr.mxu0 0.0
        %2336 = vmatpush1.msra.mxu0 0.0
        %2337 = vmatprep.subr.mxu0 0.0
        %2338 = vmatpush1.msra.mxu0 0.0
        %2339 = vmatprep.subr.mxu0 0.0
        %2340 = vmatpush1.msra.mxu0 0.0
        %2341 = vmatprep.subr.mxu0 0.0
        %2342 = vmatpush1.msra.mxu0 0.0
        %2343 = vmatprep.mubr.f32.mxu0 0.0
        %2344 = vmatmul.mubr.f32.gmra.mrb[0].mxu0 %v2274
        %v2345 = vpop.f32.mrb[0].mxu0
        %v2346 = vadd.f32 0.0, %v2345
        %v2347 = vpop.f32.mrb[0].mxu0
        %2348 = vmatprep.mubr.f32.mxu0 0.0
        %2349 = vmatmul.mubr.f32.gmra.mrb[0].mxu0 %v2277
        %v2350 = vpop.f32.mrb[0].mxu0
        %v2351 = vadd.f32 0.0, %v2350
        %v2352 = vpop.f32.mrb[0].mxu0
        %2353 = vdwg.mxu0
        %v2355 = vsel %vm1610, %v1785, 0
        %v2358 = vsel %vm1610, %v1786, 0
        %2360 = vmatprep.subr.mxu0 0.0
        %2361 = vmatpush1.msra.mxu0 %v895
        %2362 = vmatprep.subr.mxu0 0.0
        %2363 = vmatpush1.msra.mxu0 %v897
        %2364 = vmatprep.subr.mxu0 0.0
        %2365 = vmatpush1.msra.mxu0 0.0
        %2366 = vmatprep.subr.mxu0 0.0
        %2367 = vmatpush1.msra.mxu0 0.0
        %2368 = vmatprep.subr.mxu0 0.0
        %2369 = vmatpush1.msra.mxu0 0.0
        %2370 = vmatprep.subr.mxu0 0.0
        %2371 = vmatpush1.msra.mxu0 0.0
        %2372 = vmatprep.subr.mxu0 0.0
        %2373 = vmatpush1.msra.mxu0 0.0
        %2374 = vmatprep.subr.mxu0 0.0
        %2375 = vmatpush1.msra.mxu0 0.0
        %2376 = vmatprep.subr.mxu0 0.0
        %2377 = vmatpush1.msra.mxu0 0.0
        %2378 = vmatprep.subr.mxu0 0.0
        %2379 = vmatpush1.msra.mxu0 0.0
        %2380 = vmatprep.subr.mxu0 0.0
        %2381 = vmatpush1.msra.mxu0 0.0
        %2382 = vmatprep.subr.mxu0 0.0
        %2383 = vmatpush1.msra.mxu0 0.0
        %2384 = vmatprep.subr.mxu0 0.0
        %2385 = vmatpush1.msra.mxu0 0.0
        %2386 = vmatprep.subr.mxu0 0.0
        %2387 = vmatpush1.msra.mxu0 0.0
        %2388 = vmatprep.subr.mxu0 0.0
        %2389 = vmatpush1.msra.mxu0 0.0
        %2390 = vmatprep.subr.mxu0 0.0
        %2391 = vmatpush1.msra.mxu0 0.0
        %2392 = vmatprep.subr.mxu0 0.0
        %2393 = vmatpush1.msra.mxu0 0.0
        %2394 = vmatprep.subr.mxu0 0.0
        %2395 = vmatpush1.msra.mxu0 0.0
        %2396 = vmatprep.subr.mxu0 0.0
        %2397 = vmatpush1.msra.mxu0 0.0
        %2398 = vmatprep.subr.mxu0 0.0
        %2399 = vmatpush1.msra.mxu0 0.0
        %2400 = vmatprep.subr.mxu0 0.0
        %2401 = vmatpush1.msra.mxu0 0.0
        %2402 = vmatprep.subr.mxu0 0.0
        %2403 = vmatpush1.msra.mxu0 0.0
        %2404 = vmatprep.subr.mxu0 0.0
        %2405 = vmatpush1.msra.mxu0 0.0
        %2406 = vmatprep.subr.mxu0 0.0
        %2407 = vmatpush1.msra.mxu0 0.0
        %2408 = vmatprep.subr.mxu0 0.0
        %2409 = vmatpush1.msra.mxu0 0.0
        %2410 = vmatprep.subr.mxu0 0.0
        %2411 = vmatpush1.msra.mxu0 0.0
        %2412 = vmatprep.subr.mxu0 0.0
        %2413 = vmatpush1.msra.mxu0 0.0
        %2414 = vmatprep.subr.mxu0 0.0
        %2415 = vmatpush1.msra.mxu0 0.0
        %2416 = vmatprep.subr.mxu0 0.0
        %2417 = vmatpush1.msra.mxu0 0.0
        %2418 = vmatprep.subr.mxu0 0.0
        %2419 = vmatpush1.msra.mxu0 0.0
        %2420 = vmatprep.subr.mxu0 0.0
        %2421 = vmatpush1.msra.mxu0 0.0
        %2422 = vmatprep.subr.mxu0 0.0
        %2423 = vmatpush1.msra.mxu0 0.0
        %2424 = vmatprep.mubr.f32.mxu0 0.0
        %2425 = vmatmul.mubr.f32.gmra.mrb[0].mxu0 %v2355
        %v2426 = vpop.f32.mrb[0].mxu0
        %v2427 = vadd.f32 0.0, %v2426
        %v2428 = vpop.f32.mrb[0].mxu0
        %2429 = vmatprep.mubr.f32.mxu0 0.0
        %2430 = vmatmul.mubr.f32.gmra.mrb[0].mxu0 %v2358
        %v2431 = vpop.f32.mrb[0].mxu0
        %v2432 = vadd.f32 0.0, %v2431
        %v2433 = vpop.f32.mrb[0].mxu0
        %2434 = vdwg.mxu0
        %v2435 = vld [vmem:[%s463] sm:$0xff]
        %v2436 = vld [vmem:[%s463 + $0x8] sm:$0xff]
        %v2437 = vld [vmem:[%s463 + $0x10] sm:$0xff]
        %v2438 = vld [vmem:[%s463 + $0x18] sm:$0xff]
        %v2439 = vld [vmem:[%s463 + $0x20] sm:$0xff]
        %v2440 = vld [vmem:[%s463 + $0x28] sm:$0xff]
        %v2441 = vld [vmem:[%s463 + $0x30] sm:$0xff]
        %v2442 = vld [vmem:[%s463 + $0x38] sm:$0xff]
        %v2443 = vld [vmem:[%s463 + $0x40] sm:$0xff]
        %v2444 = vld [vmem:[%s463 + $0x48] sm:$0xff]
        %v2445 = vld [vmem:[%s463 + $0x50] sm:$0xff]
        %v2446 = vld [vmem:[%s463 + $0x58] sm:$0xff]
        %v2447 = vld [vmem:[%s463 + $0x60] sm:$0xff]
        %v2448 = vld [vmem:[%s463 + $0x68] sm:$0xff]
        %v2449 = vld [vmem:[%s463 + $0x70] sm:$0xff]
        %v2450 = vld [vmem:[%s463 + $0x78] sm:$0xff]
        %v2452 = vsel %vm902, %v2022, 0
        %v2455 = vsel %vm902, %v2027, 0
        %v2458 = vsel %vm902, %v2103, 0
        %v2461 = vsel %vm902, %v2108, 0
        %2463 = vmatprep.subr.mxu0 0.0
        %2464 = vmatpush1.msra.mxu0 %v2439
        %2465 = vmatprep.subr.mxu0 0.0
        %2466 = vmatpush1.msra.mxu0 %v2440
        %2467 = vmatprep.subr.mxu0 0.0
        %2468 = vmatpush1.msra.mxu0 %v2441
        %2469 = vmatprep.subr.mxu0 0.0
        %2470 = vmatpush1.msra.mxu0 %v2442
        %2471 = vmatprep.subr.mxu0 0.0
        %2472 = vmatpush1.msra.mxu0 0.0
        %2473 = vmatprep.subr.mxu0 0.0
        %2474 = vmatpush1.msra.mxu0 0.0
        %2475 = vmatprep.subr.mxu0 0.0
        %2476 = vmatpush1.msra.mxu0 0.0
        %2477 = vmatprep.subr.mxu0 0.0
        %2478 = vmatpush1.msra.mxu0 0.0
        %2479 = vmatprep.subr.mxu0 0.0
        %2480 = vmatpush1.msra.mxu0 0.0
        %2481 = vmatprep.subr.mxu0 0.0
        %2482 = vmatpush1.msra.mxu0 0.0
        %2483 = vmatprep.subr.mxu0 0.0
        %2484 = vmatpush1.msra.mxu0 0.0
        %2485 = vmatprep.subr.mxu0 0.0
        %2486 = vmatpush1.msra.mxu0 0.0
        %2487 = vmatprep.subr.mxu0 0.0
        %2488 = vmatpush1.msra.mxu0 0.0
        %2489 = vmatprep.subr.mxu0 0.0
        %2490 = vmatpush1.msra.mxu0 0.0
        %2491 = vmatprep.subr.mxu0 0.0
        %2492 = vmatpush1.msra.mxu0 0.0
        %2493 = vmatprep.subr.mxu0 0.0
        %2494 = vmatpush1.msra.mxu0 0.0
        %2495 = vmatprep.subr.mxu0 0.0
        %2496 = vmatpush1.msra.mxu0 0.0
        %2497 = vmatprep.subr.mxu0 0.0
        %2498 = vmatpush1.msra.mxu0 0.0
        %2499 = vmatprep.subr.mxu0 0.0
        %2500 = vmatpush1.msra.mxu0 0.0
        %2501 = vmatprep.subr.mxu0 0.0
        %2502 = vmatpush1.msra.mxu0 0.0
        %2503 = vmatprep.subr.mxu0 0.0
        %2504 = vmatpush1.msra.mxu0 0.0
        %2505 = vmatprep.subr.mxu0 0.0
        %2506 = vmatpush1.msra.mxu0 0.0
        %2507 = vmatprep.subr.mxu0 0.0
        %2508 = vmatpush1.msra.mxu0 0.0
        %2509 = vmatprep.subr.mxu0 0.0
        %2510 = vmatpush1.msra.mxu0 0.0
        %2511 = vmatprep.subr.mxu0 0.0
        %2512 = vmatpush1.msra.mxu0 0.0
        %2513 = vmatprep.subr.mxu0 0.0
        %2514 = vmatpush1.msra.mxu0 0.0
        %2515 = vmatprep.subr.mxu0 0.0
        %2516 = vmatpush1.msra.mxu0 0.0
        %2517 = vmatprep.subr.mxu0 0.0
        %2518 = vmatpush1.msra.mxu0 0.0
        %2519 = vmatprep.subr.mxu0 0.0
        %2520 = vmatpush1.msra.mxu0 0.0
        %2521 = vmatprep.subr.mxu0 0.0
        %2522 = vmatpush1.msra.mxu0 0.0
        %2523 = vmatprep.subr.mxu0 0.0
        %2524 = vmatpush1.msra.mxu0 0.0
        %2525 = vmatprep.subr.mxu0 0.0
        %2526 = vmatpush1.msra.mxu0 0.0
        %2527 = vmatprep.mubr.f32.mxu0 0.0
        %2528 = vmatmul.mubr.f32.gmra.mrb[0].mxu0 %v2452
        %v2529 = vpop.f32.mrb[0].mxu0
        %v2530 = vadd.f32 0.0, %v2529
        %v2531 = vpop.f32.mrb[0].mxu0
        %2532 = vmatprep.mubr.f32.mxu0 0.0
        %2533 = vmatmul.mubr.f32.gmra.mrb[0].mxu0 %v2455
        %v2534 = vpop.f32.mrb[0].mxu0
        %v2535 = vadd.f32 0.0, %v2534
        %v2536 = vpop.f32.mrb[0].mxu0
        %2537 = vmatprep.mubr.f32.mxu0 0.0
        %2538 = vmatmul.mubr.f32.gmra.mrb[0].mxu0 %v2458
        %v2539 = vpop.f32.mrb[0].mxu0
        %v2540 = vadd.f32 0.0, %v2539
        %v2541 = vpop.f32.mrb[0].mxu0
        %2542 = vmatprep.mubr.f32.mxu0 0.0
        %2543 = vmatmul.mubr.f32.gmra.mrb[0].mxu0 %v2461
        %v2544 = vpop.f32.mrb[0].mxu0
        %v2545 = vadd.f32 0.0, %v2544
        %v2546 = vpop.f32.mrb[0].mxu0
        %2547 = vdwg.mxu0
        %v2549 = vsel %vm902, %v1860, 0
        %v2552 = vsel %vm902, %v1865, 0
        %v2555 = vsel %vm902, %v1941, 0
        %v2558 = vsel %vm902, %v1946, 0
        %2560 = vmatprep.subr.mxu0 0.0
        %2561 = vmatpush1.msra.mxu0 %v2435
        %2562 = vmatprep.subr.mxu0 0.0
        %2563 = vmatpush1.msra.mxu0 %v2436
        %2564 = vmatprep.subr.mxu0 0.0
        %2565 = vmatpush1.msra.mxu0 %v2437
        %2566 = vmatprep.subr.mxu0 0.0
        %2567 = vmatpush1.msra.mxu0 %v2438
        %2568 = vmatprep.subr.mxu0 0.0
        %2569 = vmatpush1.msra.mxu0 0.0
        %2570 = vmatprep.subr.mxu0 0.0
        %2571 = vmatpush1.msra.mxu0 0.0
        %2572 = vmatprep.subr.mxu0 0.0
        %2573 = vmatpush1.msra.mxu0 0.0
        %2574 = vmatprep.subr.mxu0 0.0
        %2575 = vmatpush1.msra.mxu0 0.0
        %2576 = vmatprep.subr.mxu0 0.0
        %2577 = vmatpush1.msra.mxu0 0.0
        %2578 = vmatprep.subr.mxu0 0.0
        %2579 = vmatpush1.msra.mxu0 0.0
        %2580 = vmatprep.subr.mxu0 0.0
        %2581 = vmatpush1.msra.mxu0 0.0
        %2582 = vmatprep.subr.mxu0 0.0
        %2583 = vmatpush1.msra.mxu0 0.0
        %2584 = vmatprep.subr.mxu0 0.0
        %2585 = vmatpush1.msra.mxu0 0.0
        %2586 = vmatprep.subr.mxu0 0.0
        %2587 = vmatpush1.msra.mxu0 0.0
        %2588 = vmatprep.subr.mxu0 0.0
        %2589 = vmatpush1.msra.mxu0 0.0
        %2590 = vmatprep.subr.mxu0 0.0
        %2591 = vmatpush1.msra.mxu0 0.0
        %2592 = vmatprep.subr.mxu0 0.0
        %2593 = vmatpush1.msra.mxu0 0.0
        %2594 = vmatprep.subr.mxu0 0.0
        %2595 = vmatpush1.msra.mxu0 0.0
        %2596 = vmatprep.subr.mxu0 0.0
        %2597 = vmatpush1.msra.mxu0 0.0
        %2598 = vmatprep.subr.mxu0 0.0
        %2599 = vmatpush1.msra.mxu0 0.0
        %2600 = vmatprep.subr.mxu0 0.0
        %2601 = vmatpush1.msra.mxu0 0.0
        %2602 = vmatprep.subr.mxu0 0.0
        %2603 = vmatpush1.msra.mxu0 0.0
        %2604 = vmatprep.subr.mxu0 0.0
        %2605 = vmatpush1.msra.mxu0 0.0
        %2606 = vmatprep.subr.mxu0 0.0
        %2607 = vmatpush1.msra.mxu0 0.0
        %2608 = vmatprep.subr.mxu0 0.0
        %2609 = vmatpush1.msra.mxu0 0.0
        %2610 = vmatprep.subr.mxu0 0.0
        %2611 = vmatpush1.msra.mxu0 0.0
        %2612 = vmatprep.subr.mxu0 0.0
        %2613 = vmatpush1.msra.mxu0 0.0
        %2614 = vmatprep.subr.mxu0 0.0
        %2615 = vmatpush1.msra.mxu0 0.0
        %2616 = vmatprep.subr.mxu0 0.0
        %2617 = vmatpush1.msra.mxu0 0.0
        %2618 = vmatprep.subr.mxu0 0.0
        %2619 = vmatpush1.msra.mxu0 0.0
        %2620 = vmatprep.subr.mxu0 0.0
        %2621 = vmatpush1.msra.mxu0 0.0
        %2622 = vmatprep.subr.mxu0 0.0
        %2623 = vmatpush1.msra.mxu0 0.0
        %2624 = vmatprep.mubr.f32.mxu0 0.0
        %2625 = vmatmul.mubr.f32.gmra.mrb[0].mxu0 %v2549
        %v2626 = vpop.f32.mrb[0].mxu0
        %v2627 = vadd.f32 %v2530, %v2626
        %v2628 = vpop.f32.mrb[0].mxu0
        %2629 = vmatprep.mubr.f32.mxu0 0.0
        %2630 = vmatmul.mubr.f32.gmra.mrb[0].mxu0 %v2552
        %v2631 = vpop.f32.mrb[0].mxu0
        %v2632 = vadd.f32 %v2535, %v2631
        %v2633 = vpop.f32.mrb[0].mxu0
        %2634 = vmatprep.mubr.f32.mxu0 0.0
        %2635 = vmatmul.mubr.f32.gmra.mrb[0].mxu0 %v2555
        %v2636 = vpop.f32.mrb[0].mxu0
        %v2637 = vadd.f32 %v2540, %v2636
        %v2638 = vpop.f32.mrb[0].mxu0
        %2639 = vmatprep.mubr.f32.mxu0 0.0
        %2640 = vmatmul.mubr.f32.gmra.mrb[0].mxu0 %v2558
        %v2641 = vpop.f32.mrb[0].mxu0
        %v2642 = vadd.f32 %v2545, %v2641
        %v2643 = vpop.f32.mrb[0].mxu0
        %2644 = vdwg.mxu0
        %v2646 = vsel %vm902, %v2184, 0
        %v2649 = vsel %vm902, %v2189, 0
        %v2652 = vsel %vm902, %v2265, 0
        %v2655 = vsel %vm902, %v2270, 0
        %2657 = vmatprep.subr.mxu0 0.0
        %2658 = vmatpush1.msra.mxu0 %v2443
        %2659 = vmatprep.subr.mxu0 0.0
        %2660 = vmatpush1.msra.mxu0 %v2444
        %2661 = vmatprep.subr.mxu0 0.0
        %2662 = vmatpush1.msra.mxu0 %v2445
        %2663 = vmatprep.subr.mxu0 0.0
        %2664 = vmatpush1.msra.mxu0 %v2446
        %2665 = vmatprep.subr.mxu0 0.0
        %2666 = vmatpush1.msra.mxu0 0.0
        %2667 = vmatprep.subr.mxu0 0.0
        %2668 = vmatpush1.msra.mxu0 0.0
        %2669 = vmatprep.subr.mxu0 0.0
        %2670 = vmatpush1.msra.mxu0 0.0
        %2671 = vmatprep.subr.mxu0 0.0
        %2672 = vmatpush1.msra.mxu0 0.0
        %2673 = vmatprep.subr.mxu0 0.0
        %2674 = vmatpush1.msra.mxu0 0.0
        %2675 = vmatprep.subr.mxu0 0.0
        %2676 = vmatpush1.msra.mxu0 0.0
        %2677 = vmatprep.subr.mxu0 0.0
        %2678 = vmatpush1.msra.mxu0 0.0
        %2679 = vmatprep.subr.mxu0 0.0
        %2680 = vmatpush1.msra.mxu0 0.0
        %2681 = vmatprep.subr.mxu0 0.0
        %2682 = vmatpush1.msra.mxu0 0.0
        %2683 = vmatprep.subr.mxu0 0.0
        %2684 = vmatpush1.msra.mxu0 0.0
        %2685 = vmatprep.subr.mxu0 0.0
        %2686 = vmatpush1.msra.mxu0 0.0
        %2687 = vmatprep.subr.mxu0 0.0
        %2688 = vmatpush1.msra.mxu0 0.0
        %2689 = vmatprep.subr.mxu0 0.0
        %2690 = vmatpush1.msra.mxu0 0.0
        %2691 = vmatprep.subr.mxu0 0.0
        %2692 = vmatpush1.msra.mxu0 0.0
        %2693 = vmatprep.subr.mxu0 0.0
        %2694 = vmatpush1.msra.mxu0 0.0
        %2695 = vmatprep.subr.mxu0 0.0
        %2696 = vmatpush1.msra.mxu0 0.0
        %2697 = vmatprep.subr.mxu0 0.0
        %2698 = vmatpush1.msra.mxu0 0.0
        %2699 = vmatprep.subr.mxu0 0.0
        %2700 = vmatpush1.msra.mxu0 0.0
        %2701 = vmatprep.subr.mxu0 0.0
        %2702 = vmatpush1.msra.mxu0 0.0
        %2703 = vmatprep.subr.mxu0 0.0
        %2704 = vmatpush1.msra.mxu0 0.0
        %2705 = vmatprep.subr.mxu0 0.0
        %2706 = vmatpush1.msra.mxu0 0.0
        %2707 = vmatprep.subr.mxu0 0.0
        %2708 = vmatpush1.msra.mxu0 0.0
        %2709 = vmatprep.subr.mxu0 0.0
        %2710 = vmatpush1.msra.mxu0 0.0
        %2711 = vmatprep.subr.mxu0 0.0
        %2712 = vmatpush1.msra.mxu0 0.0
        %2713 = vmatprep.subr.mxu0 0.0
        %2714 = vmatpush1.msra.mxu0 0.0
        %2715 = vmatprep.subr.mxu0 0.0
        %2716 = vmatpush1.msra.mxu0 0.0
        %2717 = vmatprep.subr.mxu0 0.0
        %2718 = vmatpush1.msra.mxu0 0.0
        %2719 = vmatprep.subr.mxu0 0.0
        %2720 = vmatpush1.msra.mxu0 0.0
        %2721 = vmatprep.mubr.f32.mxu0 0.0
        %2722 = vmatmul.mubr.f32.gmra.mrb[0].mxu0 %v2646
        %v2723 = vpop.f32.mrb[0].mxu0
        %v2724 = vadd.f32 0.0, %v2723
        %v2725 = vpop.f32.mrb[0].mxu0
        %2726 = vmatprep.mubr.f32.mxu0 0.0
        %2727 = vmatmul.mubr.f32.gmra.mrb[0].mxu0 %v2649
        %v2728 = vpop.f32.mrb[0].mxu0
        %v2729 = vadd.f32 0.0, %v2728
        %v2730 = vpop.f32.mrb[0].mxu0
        %2731 = vmatprep.mubr.f32.mxu0 0.0
        %2732 = vmatmul.mubr.f32.gmra.mrb[0].mxu0 %v2652
        %v2733 = vpop.f32.mrb[0].mxu0
        %v2734 = vadd.f32 0.0, %v2733
        %v2735 = vpop.f32.mrb[0].mxu0
        %2736 = vmatprep.mubr.f32.mxu0 0.0
        %2737 = vmatmul.mubr.f32.gmra.mrb[0].mxu0 %v2655
        %v2738 = vpop.f32.mrb[0].mxu0
        %v2739 = vadd.f32 0.0, %v2738
        %v2740 = vpop.f32.mrb[0].mxu0
        %2741 = vdwg.mxu0
        %v2742 = vadd.f32 %v2627, %v2724
        %v2743 = vadd.f32 %v2632, %v2729
        %v2744 = vadd.f32 %v2637, %v2734
        %v2745 = vadd.f32 %v2642, %v2739
        %v2747 = vsel %vm902, %v2346, 0
        %v2750 = vsel %vm902, %v2351, 0
        %v2753 = vsel %vm902, %v2427, 0
        %v2756 = vsel %vm902, %v2432, 0
        %2758 = vmatprep.subr.mxu0 0.0
        %2759 = vmatpush1.msra.mxu0 %v2447
        %2760 = vmatprep.subr.mxu0 0.0
        %2761 = vmatpush1.msra.mxu0 %v2448
        %2762 = vmatprep.subr.mxu0 0.0
        %2763 = vmatpush1.msra.mxu0 %v2449
        %2764 = vmatprep.subr.mxu0 0.0
        %2765 = vmatpush1.msra.mxu0 %v2450
        %2766 = vmatprep.subr.mxu0 0.0
        %2767 = vmatpush1.msra.mxu0 0.0
        %2768 = vmatprep.subr.mxu0 0.0
        %2769 = vmatpush1.msra.mxu0 0.0
        %2770 = vmatprep.subr.mxu0 0.0
        %2771 = vmatpush1.msra.mxu0 0.0
        %2772 = vmatprep.subr.mxu0 0.0
        %2773 = vmatpush1.msra.mxu0 0.0
        %2774 = vmatprep.subr.mxu0 0.0
        %2775 = vmatpush1.msra.mxu0 0.0
        %2776 = vmatprep.subr.mxu0 0.0
        %2777 = vmatpush1.msra.mxu0 0.0
        %2778 = vmatprep.subr.mxu0 0.0
        %2779 = vmatpush1.msra.mxu0 0.0
        %2780 = vmatprep.subr.mxu0 0.0
        %2781 = vmatpush1.msra.mxu0 0.0
        %2782 = vmatprep.subr.mxu0 0.0
        %2783 = vmatpush1.msra.mxu0 0.0
        %2784 = vmatprep.subr.mxu0 0.0
        %2785 = vmatpush1.msra.mxu0 0.0
        %2786 = vmatprep.subr.mxu0 0.0
        %2787 = vmatpush1.msra.mxu0 0.0
        %2788 = vmatprep.subr.mxu0 0.0
        %2789 = vmatpush1.msra.mxu0 0.0
        %2790 = vmatprep.subr.mxu0 0.0
        %2791 = vmatpush1.msra.mxu0 0.0
        %2792 = vmatprep.subr.mxu0 0.0
        %2793 = vmatpush1.msra.mxu0 0.0
        %2794 = vmatprep.subr.mxu0 0.0
        %2795 = vmatpush1.msra.mxu0 0.0
        %2796 = vmatprep.subr.mxu0 0.0
        %2797 = vmatpush1.msra.mxu0 0.0
        %2798 = vmatprep.subr.mxu0 0.0
        %2799 = vmatpush1.msra.mxu0 0.0
        %2800 = vmatprep.subr.mxu0 0.0
        %2801 = vmatpush1.msra.mxu0 0.0
        %2802 = vmatprep.subr.mxu0 0.0
        %2803 = vmatpush1.msra.mxu0 0.0
        %2804 = vmatprep.subr.mxu0 0.0
        %2805 = vmatpush1.msra.mxu0 0.0
        %2806 = vmatprep.subr.mxu0 0.0
        %2807 = vmatpush1.msra.mxu0 0.0
        %2808 = vmatprep.subr.mxu0 0.0
        %2809 = vmatpush1.msra.mxu0 0.0
        %2810 = vmatprep.subr.mxu0 0.0
        %2811 = vmatpush1.msra.mxu0 0.0
        %2812 = vmatprep.subr.mxu0 0.0
        %2813 = vmatpush1.msra.mxu0 0.0
        %2814 = vmatprep.subr.mxu0 0.0
        %2815 = vmatpush1.msra.mxu0 0.0
        %2816 = vmatprep.subr.mxu0 0.0
        %2817 = vmatpush1.msra.mxu0 0.0
        %2818 = vmatprep.subr.mxu0 0.0
        %2819 = vmatpush1.msra.mxu0 0.0
        %2820 = vmatprep.subr.mxu0 0.0
        %2821 = vmatpush1.msra.mxu0 0.0
        %2822 = vmatprep.mubr.f32.mxu0 0.0
        %2823 = vmatmul.mubr.f32.gmra.mrb[0].mxu0 %v2747
        %v2824 = vpop.f32.mrb[0].mxu0
        %v2825 = vadd.f32 0.0, %v2824
        %v2826 = vpop.f32.mrb[0].mxu0
        %2827 = vmatprep.mubr.f32.mxu0 0.0
        %2828 = vmatmul.mubr.f32.gmra.mrb[0].mxu0 %v2750
        %v2829 = vpop.f32.mrb[0].mxu0
        %v2830 = vadd.f32 0.0, %v2829
        %v2831 = vpop.f32.mrb[0].mxu0
        %2832 = vmatprep.mubr.f32.mxu0 0.0
        %2833 = vmatmul.mubr.f32.gmra.mrb[0].mxu0 %v2753
        %v2834 = vpop.f32.mrb[0].mxu0
        %v2835 = vadd.f32 0.0, %v2834
        %v2836 = vpop.f32.mrb[0].mxu0
        %2837 = vmatprep.mubr.f32.mxu0 0.0
        %2838 = vmatmul.mubr.f32.gmra.mrb[0].mxu0 %v2756
        %v2839 = vpop.f32.mrb[0].mxu0
        %v2840 = vadd.f32 0.0, %v2839
        %v2841 = vpop.f32.mrb[0].mxu0
        %2842 = vdwg.mxu0
        %v2843 = vadd.f32 %v2742, %v2825
        %v2844 = vadd.f32 %v2743, %v2830
        %v2845 = vadd.f32 %v2744, %v2835
        %v2846 = vadd.f32 %v2745, %v2840
        %v2847 = vld [vmem:[%s543] sm:$0x1]
        %v2849 = vlaneseq
        %v2850 = vshrl.u32 %v2849, 7
        %v2851 = vsub.s32 0, %v2850
        %v2852 = vrot.slane %v2847, %v2851
        %v2854 = vadd.f32 %v2843, %v2852
        %v2855 = vadd.f32 %v2844, %v2852
        %v2856 = vadd.f32 %v2845, %v2852
        %v2857 = vadd.f32 %v2846, %v2852
        %v2858 = vadd.f32 %v563, %v2854
        %v2859 = vadd.f32 %v564, %v2855
        %v2860 = vadd.f32 %v565, %v2856
        %v2861 = vadd.f32 %v566, %v2857
        %v2862 = vld [vmem:[%s472] sm:$0xff]
        %v2863 = vld [vmem:[%s472 + $0x8] sm:$0xff]
        %v2864 = vld [vmem:[%s472 + $0x10] sm:$0xff]
        %v2865 = vld [vmem:[%s472 + $0x18] sm:$0xff]
        %v2866 = vld [vmem:[%s472 + $0x20] sm:$0xff]
        %v2867 = vld [vmem:[%s472 + $0x28] sm:$0xff]
        %v2868 = vld [vmem:[%s472 + $0x30] sm:$0xff]
        %v2869 = vld [vmem:[%s472 + $0x38] sm:$0xff]
        %v2870 = vld [vmem:[%s472 + $0x40] sm:$0xff]
        %v2871 = vld [vmem:[%s472 + $0x48] sm:$0xff]
        %v2872 = vld [vmem:[%s472 + $0x50] sm:$0xff]
        %v2873 = vld [vmem:[%s472 + $0x58] sm:$0xff]
        %v2874 = vld [vmem:[%s472 + $0x60] sm:$0xff]
        %v2875 = vld [vmem:[%s472 + $0x68] sm:$0xff]
        %v2876 = vld [vmem:[%s472 + $0x70] sm:$0xff]
        %v2877 = vld [vmem:[%s472 + $0x78] sm:$0xff]
        %v2878 = vld [vmem:[%s472 + $0x80] sm:$0xff]
        %v2879 = vld [vmem:[%s472 + $0x88] sm:$0xff]
        %v2880 = vld [vmem:[%s472 + $0x90] sm:$0xff]
        %v2881 = vld [vmem:[%s472 + $0x98] sm:$0xff]
        %v2882 = vld [vmem:[%s472 + $0xa0] sm:$0xff]
        %v2883 = vld [vmem:[%s472 + $0xa8] sm:$0xff]
        %v2884 = vld [vmem:[%s472 + $0xb0] sm:$0xff]
        %v2885 = vld [vmem:[%s472 + $0xb8] sm:$0xff]
        %v2886 = vld [vmem:[%s472 + $0xc0] sm:$0xff]
        %v2887 = vld [vmem:[%s472 + $0xc8] sm:$0xff]
        %v2888 = vld [vmem:[%s472 + $0xd0] sm:$0xff]
        %v2889 = vld [vmem:[%s472 + $0xd8] sm:$0xff]
        %v2890 = vld [vmem:[%s472 + $0xe0] sm:$0xff]
        %v2891 = vld [vmem:[%s472 + $0xe8] sm:$0xff]
        %v2892 = vld [vmem:[%s472 + $0xf0] sm:$0xff]
        %v2893 = vld [vmem:[%s472 + $0xf8] sm:$0xff]
        %v2894 = vld [vmem:[%s472 + $0x100] sm:$0xff]
        %v2895 = vld [vmem:[%s472 + $0x108] sm:$0xff]
        %v2896 = vld [vmem:[%s472 + $0x110] sm:$0xff]
        %v2897 = vld [vmem:[%s472 + $0x118] sm:$0xff]
        %v2898 = vld [vmem:[%s472 + $0x120] sm:$0xff]
        %v2899 = vld [vmem:[%s472 + $0x128] sm:$0xff]
        %v2900 = vld [vmem:[%s472 + $0x130] sm:$0xff]
        %v2901 = vld [vmem:[%s472 + $0x138] sm:$0xff]
        %v2902 = vld [vmem:[%s472 + $0x140] sm:$0xff]
        %v2903 = vld [vmem:[%s472 + $0x148] sm:$0xff]
        %v2904 = vld [vmem:[%s472 + $0x150] sm:$0xff]
        %v2905 = vld [vmem:[%s472 + $0x158] sm:$0xff]
        %v2906 = vld [vmem:[%s472 + $0x160] sm:$0xff]
        %v2907 = vld [vmem:[%s472 + $0x168] sm:$0xff]
        %v2908 = vld [vmem:[%s472 + $0x170] sm:$0xff]
        %v2909 = vld [vmem:[%s472 + $0x178] sm:$0xff]
        %v2910 = vld [vmem:[%s472 + $0x180] sm:$0xff]
        %v2911 = vld [vmem:[%s472 + $0x188] sm:$0xff]
        %v2912 = vld [vmem:[%s472 + $0x190] sm:$0xff]
        %v2913 = vld [vmem:[%s472 + $0x198] sm:$0xff]
        %v2914 = vld [vmem:[%s472 + $0x1a0] sm:$0xff]
        %v2915 = vld [vmem:[%s472 + $0x1a8] sm:$0xff]
        %v2916 = vld [vmem:[%s472 + $0x1b0] sm:$0xff]
        %v2917 = vld [vmem:[%s472 + $0x1b8] sm:$0xff]
        %v2918 = vld [vmem:[%s472 + $0x1c0] sm:$0xff]
        %v2919 = vld [vmem:[%s472 + $0x1c8] sm:$0xff]
        %v2920 = vld [vmem:[%s472 + $0x1d0] sm:$0xff]
        %v2921 = vld [vmem:[%s472 + $0x1d8] sm:$0xff]
        %v2922 = vld [vmem:[%s472 + $0x1e0] sm:$0xff]
        %v2923 = vld [vmem:[%s472 + $0x1e8] sm:$0xff]
        %v2924 = vld [vmem:[%s472 + $0x1f0] sm:$0xff]
        %v2925 = vld [vmem:[%s472 + $0x1f8] sm:$0xff]
        %v2926 = vld [vmem:[%s547] sm:$0xf]
        %v2928 = vlaneseq
        %v2929 = vshrl.u32 %v2928, 7
        %v2930 = vsub.s32 0, %v2929
        %v2931 = vrot.slane %v2926, %v2930
        %v2932 = vlaneseq
        %v2933 = vshrl.u32 %v2932, 7
        %v2934 = vsub.s32 1, %v2933
        %v2935 = vrot.slane %v2926, %v2934
        %v2936 = vlaneseq
        %v2937 = vshrl.u32 %v2936, 7
        %v2938 = vsub.s32 2, %v2937
        %v2939 = vrot.slane %v2926, %v2938
        %v2940 = vlaneseq
        %v2941 = vshrl.u32 %v2940, 7
        %v2942 = vsub.s32 3, %v2941
        %v2943 = vrot.slane %v2926, %v2942
        %2948 = vmatprep.subr.mxu0 %v2863
        %2949 = vmatpush1.msra.mxu0 %v2862
        %2950 = vmatprep.subr.mxu0 %v2867
        %2951 = vmatpush1.msra.mxu0 %v2866
        %2952 = vmatprep.subr.mxu0 %v2871
        %2953 = vmatpush1.msra.mxu0 %v2870
        %2954 = vmatprep.subr.mxu0 %v2875
        %2955 = vmatpush1.msra.mxu0 %v2874
        %2956 = vmatprep.subr.mxu0 %v2879
        %2957 = vmatpush1.msra.mxu0 %v2878
        %2958 = vmatprep.subr.mxu0 %v2883
        %2959 = vmatpush1.msra.mxu0 %v2882
        %2960 = vmatprep.subr.mxu0 %v2887
        %2961 = vmatpush1.msra.mxu0 %v2886
        %2962 = vmatprep.subr.mxu0 %v2891
        %2963 = vmatpush1.msra.mxu0 %v2890
        %2964 = vmatprep.subr.mxu0 %v2895
        %2965 = vmatpush1.msra.mxu0 %v2894
        %2966 = vmatprep.subr.mxu0 %v2899
        %2967 = vmatpush1.msra.mxu0 %v2898
        %2968 = vmatprep.subr.mxu0 %v2903
        %2969 = vmatpush1.msra.mxu0 %v2902
        %2970 = vmatprep.subr.mxu0 %v2907
        %2971 = vmatpush1.msra.mxu0 %v2906
        %2972 = vmatprep.subr.mxu0 %v2911
        %2973 = vmatpush1.msra.mxu0 %v2910
        %2974 = vmatprep.subr.mxu0 %v2915
        %2975 = vmatpush1.msra.mxu0 %v2914
        %2976 = vmatprep.subr.mxu0 %v2919
        %2977 = vmatpush1.msra.mxu0 %v2918
        %2978 = vmatprep.subr.mxu0 %v2923
        %2979 = vmatpush1.msra.mxu0 %v2922
        %2980 = vmatprep.subr.mxu0 0.0
        %2981 = vmatpush1.msra.mxu0 0.0
        %2982 = vmatprep.subr.mxu0 0.0
        %2983 = vmatpush1.msra.mxu0 0.0
        %2984 = vmatprep.subr.mxu0 0.0
        %2985 = vmatpush1.msra.mxu0 0.0
        %2986 = vmatprep.subr.mxu0 0.0
        %2987 = vmatpush1.msra.mxu0 0.0
        %2988 = vmatprep.subr.mxu0 0.0
        %2989 = vmatpush1.msra.mxu0 0.0
        %2990 = vmatprep.subr.mxu0 0.0
        %2991 = vmatpush1.msra.mxu0 0.0
        %2992 = vmatprep.subr.mxu0 0.0
        %2993 = vmatpush1.msra.mxu0 0.0
        %2994 = vmatprep.subr.mxu0 0.0
        %2995 = vmatpush1.msra.mxu0 0.0
        %2996 = vmatprep.subr.mxu0 0.0
        %2997 = vmatpush1.msra.mxu0 0.0
        %2998 = vmatprep.subr.mxu0 0.0
        %2999 = vmatpush1.msra.mxu0 0.0
        %3000 = vmatprep.subr.mxu0 0.0
        %3001 = vmatpush1.msra.mxu0 0.0
        %3002 = vmatprep.subr.mxu0 0.0
        %3003 = vmatpush1.msra.mxu0 0.0
        %3004 = vmatprep.subr.mxu0 0.0
        %3005 = vmatpush1.msra.mxu0 0.0
        %3006 = vmatprep.subr.mxu0 0.0
        %3007 = vmatpush1.msra.mxu0 0.0
        %3008 = vmatprep.subr.mxu0 0.0
        %3009 = vmatpush1.msra.mxu0 0.0
        %3010 = vmatprep.subr.mxu0 0.0
        %3011 = vmatpush1.msra.mxu0 0.0
        %3012 = vmatprep.mubr.f32.mxu0 0.0
        %3013 = vmatmul.mubr.f32.gmra.mrb[0].mxu0 %v2858
        %v3014 = vpop.f32.mrb[0].mxu0
        %v3015 = vadd.f32 %v2931, %v3014
        %v3016 = vpop.f32.mrb[0].mxu0
        %v3017 = vadd.f32 %v2935, %v3016
        %3018 = vmatprep.mubr.f32.mxu0 0.0
        %3019 = vmatmul.mubr.f32.gmra.mrb[0].mxu0 %v2859
        %v3020 = vpop.f32.mrb[0].mxu0
        %v3021 = vadd.f32 %v2931, %v3020
        %v3022 = vpop.f32.mrb[0].mxu0
        %v3023 = vadd.f32 %v2935, %v3022
        %3024 = vmatprep.mubr.f32.mxu0 0.0
        %3025 = vmatmul.mubr.f32.gmra.mrb[0].mxu0 %v2860
        %v3026 = vpop.f32.mrb[0].mxu0
        %v3027 = vadd.f32 %v2931, %v3026
        %v3028 = vpop.f32.mrb[0].mxu0
        %v3029 = vadd.f32 %v2935, %v3028
        %3030 = vmatprep.mubr.f32.mxu0 0.0
        %3031 = vmatmul.mubr.f32.gmra.mrb[0].mxu0 %v2861
        %v3032 = vpop.f32.mrb[0].mxu0
        %v3033 = vadd.f32 %v2931, %v3032
        %v3034 = vpop.f32.mrb[0].mxu0
        %v3035 = vadd.f32 %v2935, %v3034
        %3036 = vdwg.mxu0
        %3037 = vmatprep.subr.mxu0 %v2865
        %3038 = vmatpush1.msra.mxu0 %v2864
        %3039 = vmatprep.subr.mxu0 %v2869
        %3040 = vmatpush1.msra.mxu0 %v2868
        %3041 = vmatprep.subr.mxu0 %v2873
        %3042 = vmatpush1.msra.mxu0 %v2872
        %3043 = vmatprep.subr.mxu0 %v2877
        %3044 = vmatpush1.msra.mxu0 %v2876
        %3045 = vmatprep.subr.mxu0 %v2881
        %3046 = vmatpush1.msra.mxu0 %v2880
        %3047 = vmatprep.subr.mxu0 %v2885
        %3048 = vmatpush1.msra.mxu0 %v2884
        %3049 = vmatprep.subr.mxu0 %v2889
        %3050 = vmatpush1.msra.mxu0 %v2888
        %3051 = vmatprep.subr.mxu0 %v2893
        %3052 = vmatpush1.msra.mxu0 %v2892
        %3053 = vmatprep.subr.mxu0 %v2897
        %3054 = vmatpush1.msra.mxu0 %v2896
        %3055 = vmatprep.subr.mxu0 %v2901
        %3056 = vmatpush1.msra.mxu0 %v2900
        %3057 = vmatprep.subr.mxu0 %v2905
        %3058 = vmatpush1.msra.mxu0 %v2904
        %3059 = vmatprep.subr.mxu0 %v2909
        %3060 = vmatpush1.msra.mxu0 %v2908
        %3061 = vmatprep.subr.mxu0 %v2913
        %3062 = vmatpush1.msra.mxu0 %v2912
        %3063 = vmatprep.subr.mxu0 %v2917
        %3064 = vmatpush1.msra.mxu0 %v2916
        %3065 = vmatprep.subr.mxu0 %v2921
        %3066 = vmatpush1.msra.mxu0 %v2920
        %3067 = vmatprep.subr.mxu0 %v2925
        %3068 = vmatpush1.msra.mxu0 %v2924
        %3069 = vmatprep.subr.mxu0 0.0
        %3070 = vmatpush1.msra.mxu0 0.0
        %3071 = vmatprep.subr.mxu0 0.0
        %3072 = vmatpush1.msra.mxu0 0.0
        %3073 = vmatprep.subr.mxu0 0.0
        %3074 = vmatpush1.msra.mxu0 0.0
        %3075 = vmatprep.subr.mxu0 0.0
        %3076 = vmatpush1.msra.mxu0 0.0
        %3077 = vmatprep.subr.mxu0 0.0
        %3078 = vmatpush1.msra.mxu0 0.0
        %3079 = vmatprep.subr.mxu0 0.0
        %3080 = vmatpush1.msra.mxu0 0.0
        %3081 = vmatprep.subr.mxu0 0.0
        %3082 = vmatpush1.msra.mxu0 0.0
        %3083 = vmatprep.subr.mxu0 0.0
        %3084 = vmatpush1.msra.mxu0 0.0
        %3085 = vmatprep.subr.mxu0 0.0
        %3086 = vmatpush1.msra.mxu0 0.0
        %3087 = vmatprep.subr.mxu0 0.0
        %3088 = vmatpush1.msra.mxu0 0.0
        %3089 = vmatprep.subr.mxu0 0.0
        %3090 = vmatpush1.msra.mxu0 0.0
        %3091 = vmatprep.subr.mxu0 0.0
        %3092 = vmatpush1.msra.mxu0 0.0
        %3093 = vmatprep.subr.mxu0 0.0
        %3094 = vmatpush1.msra.mxu0 0.0
        %3095 = vmatprep.subr.mxu0 0.0
        %3096 = vmatpush1.msra.mxu0 0.0
        %3097 = vmatprep.subr.mxu0 0.0
        %3098 = vmatpush1.msra.mxu0 0.0
        %3099 = vmatprep.subr.mxu0 0.0
        %3100 = vmatpush1.msra.mxu0 0.0
        %3101 = vmatprep.mubr.f32.mxu0 0.0
        %3102 = vmatmul.mubr.f32.gmra.mrb[0].mxu0 %v2858
        %v3103 = vpop.f32.mrb[0].mxu0
        %v3104 = vadd.f32 %v2939, %v3103
        %v3105 = vpop.f32.mrb[0].mxu0
        %v3106 = vadd.f32 %v2943, %v3105
        %3107 = vmatprep.mubr.f32.mxu0 0.0
        %3108 = vmatmul.mubr.f32.gmra.mrb[0].mxu0 %v2859
        %v3109 = vpop.f32.mrb[0].mxu0
        %v3110 = vadd.f32 %v2939, %v3109
        %v3111 = vpop.f32.mrb[0].mxu0
        %v3112 = vadd.f32 %v2943, %v3111
        %3113 = vmatprep.mubr.f32.mxu0 0.0
        %3114 = vmatmul.mubr.f32.gmra.mrb[0].mxu0 %v2860
        %v3115 = vpop.f32.mrb[0].mxu0
        %v3116 = vadd.f32 %v2939, %v3115
        %v3117 = vpop.f32.mrb[0].mxu0
        %v3118 = vadd.f32 %v2943, %v3117
        %3119 = vmatprep.mubr.f32.mxu0 0.0
        %3120 = vmatmul.mubr.f32.gmra.mrb[0].mxu0 %v2861
        %v3121 = vpop.f32.mrb[0].mxu0
        %v3122 = vadd.f32 %v2939, %v3121
        %v3123 = vpop.f32.mrb[0].mxu0
        %v3124 = vadd.f32 %v2943, %v3123
        %3125 = vdwg.mxu0
        %v3126 = vld [vmem:[%s481] sm:$0xff]
        %v3127 = vld [vmem:[%s481 + $0x8] sm:$0xff]
        %v3128 = vld [vmem:[%s481 + $0x10] sm:$0xff]
        %v3129 = vld [vmem:[%s481 + $0x18] sm:$0xff]
        %v3130 = vld [vmem:[%s481 + $0x20] sm:$0xff]
        %v3131 = vld [vmem:[%s481 + $0x28] sm:$0xff]
        %v3132 = vld [vmem:[%s481 + $0x30] sm:$0xff]
        %v3133 = vld [vmem:[%s481 + $0x38] sm:$0xff]
        %v3134 = vld [vmem:[%s481 + $0x40] sm:$0xff]
        %v3135 = vld [vmem:[%s481 + $0x48] sm:$0xff]
        %v3136 = vld [vmem:[%s481 + $0x50] sm:$0xff]
        %v3137 = vld [vmem:[%s481 + $0x58] sm:$0xff]
        %v3138 = vld [vmem:[%s481 + $0x60] sm:$0xff]
        %v3139 = vld [vmem:[%s481 + $0x68] sm:$0xff]
        %v3140 = vld [vmem:[%s481 + $0x70] sm:$0xff]
        %v3141 = vld [vmem:[%s481 + $0x78] sm:$0xff]
        %v3142 = vld [vmem:[%s481 + $0x80] sm:$0xff]
        %v3143 = vld [vmem:[%s481 + $0x88] sm:$0xff]
        %v3144 = vld [vmem:[%s481 + $0x90] sm:$0xff]
        %v3145 = vld [vmem:[%s481 + $0x98] sm:$0xff]
        %v3146 = vld [vmem:[%s481 + $0xa0] sm:$0xff]
        %v3147 = vld [vmem:[%s481 + $0xa8] sm:$0xff]
        %v3148 = vld [vmem:[%s481 + $0xb0] sm:$0xff]
        %v3149 = vld [vmem:[%s481 + $0xb8] sm:$0xff]
        %v3150 = vld [vmem:[%s481 + $0xc0] sm:$0xff]
        %v3151 = vld [vmem:[%s481 + $0xc8] sm:$0xff]
        %v3152 = vld [vmem:[%s481 + $0xd0] sm:$0xff]
        %v3153 = vld [vmem:[%s481 + $0xd8] sm:$0xff]
        %v3154 = vld [vmem:[%s481 + $0xe0] sm:$0xff]
        %v3155 = vld [vmem:[%s481 + $0xe8] sm:$0xff]
        %v3156 = vld [vmem:[%s481 + $0xf0] sm:$0xff]
        %v3157 = vld [vmem:[%s481 + $0xf8] sm:$0xff]
        %v3158 = vld [vmem:[%s481 + $0x100] sm:$0xff]
        %v3159 = vld [vmem:[%s481 + $0x108] sm:$0xff]
        %v3160 = vld [vmem:[%s481 + $0x110] sm:$0xff]
        %v3161 = vld [vmem:[%s481 + $0x118] sm:$0xff]
        %v3162 = vld [vmem:[%s481 + $0x120] sm:$0xff]
        %v3163 = vld [vmem:[%s481 + $0x128] sm:$0xff]
        %v3164 = vld [vmem:[%s481 + $0x130] sm:$0xff]
        %v3165 = vld [vmem:[%s481 + $0x138] sm:$0xff]
        %v3166 = vld [vmem:[%s481 + $0x140] sm:$0xff]
        %v3167 = vld [vmem:[%s481 + $0x148] sm:$0xff]
        %v3168 = vld [vmem:[%s481 + $0x150] sm:$0xff]
        %v3169 = vld [vmem:[%s481 + $0x158] sm:$0xff]
        %v3170 = vld [vmem:[%s481 + $0x160] sm:$0xff]
        %v3171 = vld [vmem:[%s481 + $0x168] sm:$0xff]
        %v3172 = vld [vmem:[%s481 + $0x170] sm:$0xff]
        %v3173 = vld [vmem:[%s481 + $0x178] sm:$0xff]
        %v3174 = vld [vmem:[%s481 + $0x180] sm:$0xff]
        %v3175 = vld [vmem:[%s481 + $0x188] sm:$0xff]
        %v3176 = vld [vmem:[%s481 + $0x190] sm:$0xff]
        %v3177 = vld [vmem:[%s481 + $0x198] sm:$0xff]
        %v3178 = vld [vmem:[%s481 + $0x1a0] sm:$0xff]
        %v3179 = vld [vmem:[%s481 + $0x1a8] sm:$0xff]
        %v3180 = vld [vmem:[%s481 + $0x1b0] sm:$0xff]
        %v3181 = vld [vmem:[%s481 + $0x1b8] sm:$0xff]
        %v3182 = vld [vmem:[%s481 + $0x1c0] sm:$0xff]
        %v3183 = vld [vmem:[%s481 + $0x1c8] sm:$0xff]
        %v3184 = vld [vmem:[%s481 + $0x1d0] sm:$0xff]
        %v3185 = vld [vmem:[%s481 + $0x1d8] sm:$0xff]
        %v3186 = vld [vmem:[%s481 + $0x1e0] sm:$0xff]
        %v3187 = vld [vmem:[%s481 + $0x1e8] sm:$0xff]
        %v3188 = vld [vmem:[%s481 + $0x1f0] sm:$0xff]
        %v3189 = vld [vmem:[%s481 + $0x1f8] sm:$0xff]
        %v3190 = vld [vmem:[%s550] sm:$0x1]
        %v3192 = vlaneseq
        %v3193 = vshrl.u32 %v3192, 7
        %v3194 = vsub.s32 0, %v3193
        %v3195 = vrot.slane %v3190, %v3194
        %3197 = vmatprep.subr.mxu0 0.0
        %3198 = vmatpush1.msra.mxu0 %v3126
        %3199 = vmatprep.subr.mxu0 0.0
        %3200 = vmatpush1.msra.mxu0 %v3127
        %3201 = vmatprep.subr.mxu0 0.0
        %3202 = vmatpush1.msra.mxu0 %v3128
        %3203 = vmatprep.subr.mxu0 0.0
        %3204 = vmatpush1.msra.mxu0 %v3129
        %3205 = vmatprep.subr.mxu0 0.0
        %3206 = vmatpush1.msra.mxu0 %v3130
        %3207 = vmatprep.subr.mxu0 0.0
        %3208 = vmatpush1.msra.mxu0 %v3131
        %3209 = vmatprep.subr.mxu0 0.0
        %3210 = vmatpush1.msra.mxu0 %v3132
        %3211 = vmatprep.subr.mxu0 0.0
        %3212 = vmatpush1.msra.mxu0 %v3133
        %3213 = vmatprep.subr.mxu0 0.0
        %3214 = vmatpush1.msra.mxu0 %v3134
        %3215 = vmatprep.subr.mxu0 0.0
        %3216 = vmatpush1.msra.mxu0 %v3135
        %3217 = vmatprep.subr.mxu0 0.0
        %3218 = vmatpush1.msra.mxu0 %v3136
        %3219 = vmatprep.subr.mxu0 0.0
        %3220 = vmatpush1.msra.mxu0 %v3137
        %3221 = vmatprep.subr.mxu0 0.0
        %3222 = vmatpush1.msra.mxu0 %v3138
        %3223 = vmatprep.subr.mxu0 0.0
        %3224 = vmatpush1.msra.mxu0 %v3139
        %3225 = vmatprep.subr.mxu0 0.0
        %3226 = vmatpush1.msra.mxu0 %v3140
        %3227 = vmatprep.subr.mxu0 0.0
        %3228 = vmatpush1.msra.mxu0 %v3141
        %3229 = vmatprep.subr.mxu0 0.0
        %3230 = vmatpush1.msra.mxu0 %v3142
        %3231 = vmatprep.subr.mxu0 0.0
        %3232 = vmatpush1.msra.mxu0 %v3143
        %3233 = vmatprep.subr.mxu0 0.0
        %3234 = vmatpush1.msra.mxu0 %v3144
        %3235 = vmatprep.subr.mxu0 0.0
        %3236 = vmatpush1.msra.mxu0 %v3145
        %3237 = vmatprep.subr.mxu0 0.0
        %3238 = vmatpush1.msra.mxu0 %v3146
        %3239 = vmatprep.subr.mxu0 0.0
        %3240 = vmatpush1.msra.mxu0 %v3147
        %3241 = vmatprep.subr.mxu0 0.0
        %3242 = vmatpush1.msra.mxu0 %v3148
        %3243 = vmatprep.subr.mxu0 0.0
        %3244 = vmatpush1.msra.mxu0 %v3149
        %3245 = vmatprep.subr.mxu0 0.0
        %3246 = vmatpush1.msra.mxu0 %v3150
        %3247 = vmatprep.subr.mxu0 0.0
        %3248 = vmatpush1.msra.mxu0 %v3151
        %3249 = vmatprep.subr.mxu0 0.0
        %3250 = vmatpush1.msra.mxu0 %v3152
        %3251 = vmatprep.subr.mxu0 0.0
        %3252 = vmatpush1.msra.mxu0 %v3153
        %3253 = vmatprep.subr.mxu0 0.0
        %3254 = vmatpush1.msra.mxu0 %v3154
        %3255 = vmatprep.subr.mxu0 0.0
        %3256 = vmatpush1.msra.mxu0 %v3155
        %3257 = vmatprep.subr.mxu0 0.0
        %3258 = vmatpush1.msra.mxu0 %v3156
        %3259 = vmatprep.subr.mxu0 0.0
        %3260 = vmatpush1.msra.mxu0 %v3157
        %3261 = vmatprep.mubr.f32.mxu0 %v3017
        %3262 = vmatmul.mubr.f32.gmra.mrb[0].mxu0 %v3015
        %v3263 = vpop.f32.mrb[0].mxu0
        %v3264 = vadd.f32 %v3195, %v3263
        %v3265 = vpop.f32.mrb[0].mxu0
        %3266 = vmatprep.mubr.f32.mxu0 %v3023
        %3267 = vmatmul.mubr.f32.gmra.mrb[0].mxu0 %v3021
        %v3268 = vpop.f32.mrb[0].mxu0
        %v3269 = vadd.f32 %v3195, %v3268
        %v3270 = vpop.f32.mrb[0].mxu0
        %3271 = vmatprep.mubr.f32.mxu0 %v3029
        %3272 = vmatmul.mubr.f32.gmra.mrb[0].mxu0 %v3027
        %v3273 = vpop.f32.mrb[0].mxu0
        %v3274 = vadd.f32 %v3195, %v3273
        %v3275 = vpop.f32.mrb[0].mxu0
        %3276 = vmatprep.mubr.f32.mxu0 %v3035
        %3277 = vmatmul.mubr.f32.gmra.mrb[0].mxu0 %v3033
        %v3278 = vpop.f32.mrb[0].mxu0
        %v3279 = vadd.f32 %v3195, %v3278
        %v3280 = vpop.f32.mrb[0].mxu0
        %3281 = vdwg.mxu0
        %3282 = vmatprep.subr.mxu0 0.0
        %3283 = vmatpush1.msra.mxu0 %v3158
        %3284 = vmatprep.subr.mxu0 0.0
        %3285 = vmatpush1.msra.mxu0 %v3159
        %3286 = vmatprep.subr.mxu0 0.0
        %3287 = vmatpush1.msra.mxu0 %v3160
        %3288 = vmatprep.subr.mxu0 0.0
        %3289 = vmatpush1.msra.mxu0 %v3161
        %3290 = vmatprep.subr.mxu0 0.0
        %3291 = vmatpush1.msra.mxu0 %v3162
        %3292 = vmatprep.subr.mxu0 0.0
        %3293 = vmatpush1.msra.mxu0 %v3163
        %3294 = vmatprep.subr.mxu0 0.0
        %3295 = vmatpush1.msra.mxu0 %v3164
        %3296 = vmatprep.subr.mxu0 0.0
        %3297 = vmatpush1.msra.mxu0 %v3165
        %3298 = vmatprep.subr.mxu0 0.0
        %3299 = vmatpush1.msra.mxu0 %v3166
        %3300 = vmatprep.subr.mxu0 0.0
        %3301 = vmatpush1.msra.mxu0 %v3167
        %3302 = vmatprep.subr.mxu0 0.0
        %3303 = vmatpush1.msra.mxu0 %v3168
        %3304 = vmatprep.subr.mxu0 0.0
        %3305 = vmatpush1.msra.mxu0 %v3169
        %3306 = vmatprep.subr.mxu0 0.0
        %3307 = vmatpush1.msra.mxu0 %v3170
        %3308 = vmatprep.subr.mxu0 0.0
        %3309 = vmatpush1.msra.mxu0 %v3171
        %3310 = vmatprep.subr.mxu0 0.0
        %3311 = vmatpush1.msra.mxu0 %v3172
        %3312 = vmatprep.subr.mxu0 0.0
        %3313 = vmatpush1.msra.mxu0 %v3173
        %3314 = vmatprep.subr.mxu0 0.0
        %3315 = vmatpush1.msra.mxu0 %v3174
        %3316 = vmatprep.subr.mxu0 0.0
        %3317 = vmatpush1.msra.mxu0 %v3175
        %3318 = vmatprep.subr.mxu0 0.0
        %3319 = vmatpush1.msra.mxu0 %v3176
        %3320 = vmatprep.subr.mxu0 0.0
        %3321 = vmatpush1.msra.mxu0 %v3177
        %3322 = vmatprep.subr.mxu0 0.0
        %3323 = vmatpush1.msra.mxu0 %v3178
        %3324 = vmatprep.subr.mxu0 0.0
        %3325 = vmatpush1.msra.mxu0 %v3179
        %3326 = vmatprep.subr.mxu0 0.0
        %3327 = vmatpush1.msra.mxu0 %v3180
        %3328 = vmatprep.subr.mxu0 0.0
        %3329 = vmatpush1.msra.mxu0 %v3181
        %3330 = vmatprep.subr.mxu0 0.0
        %3331 = vmatpush1.msra.mxu0 %v3182
        %3332 = vmatprep.subr.mxu0 0.0
        %3333 = vmatpush1.msra.mxu0 %v3183
        %3334 = vmatprep.subr.mxu0 0.0
        %3335 = vmatpush1.msra.mxu0 %v3184
        %3336 = vmatprep.subr.mxu0 0.0
        %3337 = vmatpush1.msra.mxu0 %v3185
        %3338 = vmatprep.subr.mxu0 0.0
        %3339 = vmatpush1.msra.mxu0 %v3186
        %3340 = vmatprep.subr.mxu0 0.0
        %3341 = vmatpush1.msra.mxu0 %v3187
        %3342 = vmatprep.subr.mxu0 0.0
        %3343 = vmatpush1.msra.mxu0 %v3188
        %3344 = vmatprep.subr.mxu0 0.0
        %3345 = vmatpush1.msra.mxu0 %v3189
        %3346 = vmatprep.mubr.f32.mxu0 %v3106
        %3347 = vmatmul.mubr.f32.gmra.mrb[0].mxu0 %v3104
        %v3348 = vpop.f32.mrb[0].mxu0
        %v3349 = vadd.f32 %v3264, %v3348
        %v3350 = vpop.f32.mrb[0].mxu0
        %3351 = vmatprep.mubr.f32.mxu0 %v3112
        %3352 = vmatmul.mubr.f32.gmra.mrb[0].mxu0 %v3110
        %v3353 = vpop.f32.mrb[0].mxu0
        %v3354 = vadd.f32 %v3269, %v3353
        %v3355 = vpop.f32.mrb[0].mxu0
        %3356 = vmatprep.mubr.f32.mxu0 %v3118
        %3357 = vmatmul.mubr.f32.gmra.mrb[0].mxu0 %v3116
        %v3358 = vpop.f32.mrb[0].mxu0
        %v3359 = vadd.f32 %v3274, %v3358
        %v3360 = vpop.f32.mrb[0].mxu0
        %3361 = vmatprep.mubr.f32.mxu0 %v3124
        %3362 = vmatmul.mubr.f32.gmra.mrb[0].mxu0 %v3122
        %v3363 = vpop.f32.mrb[0].mxu0
        %v3364 = vadd.f32 %v3279, %v3363
        %v3365 = vpop.f32.mrb[0].mxu0
        %3366 = vdwg.mxu0
        %v3367 = vadd.f32 %v2858, %v3349
        %v3368 = vadd.f32 %v2859, %v3354
        %v3369 = vadd.f32 %v2860, %v3359
        %v3370 = vadd.f32 %v2861, %v3364
        %3371 = vst [vmem:[#allocation2] sm:$0xff] %v3367
        %3372 = vst [vmem:[#allocation2 + $0x8] sm:$0xff] %v3368
        %3373 = vst [vmem:[#allocation2 + $0x10] sm:$0xff] %v3369
        %3374 = vst [vmem:[#allocation2 + $0x18] sm:$0xff] %v3370
        %p3375 = scmp.eq.s32.totalorder %s31, 3
        // Predicated region
        $region85: #{tpu_custom_call.1} parent=55 // pred_check
          %p3376 = pneg %p3375
        $region86: #{tpu_custom_call.1} parent=55 // pred_check_branch
          %3378 = sbr.rel (%p3376) target = $region88
        $region87: #{tpu_custom_call.1} parent=55 // pred_region
          %3379 = vst [vmem:[#allocation14] sm:$0xff] %v3367
          %3380 = vst [vmem:[#allocation14 + $0x8] sm:$0xff] %v3368
          %3381 = vst [vmem:[#allocation14 + $0x10] sm:$0xff] %v3369
          %3382 = vst [vmem:[#allocation14 + $0x18] sm:$0xff] %v3370
        $region88: #{tpu_custom_call.1} parent=55 // pred_fallthru
          _
        // Predicated region
        $region89: #{tpu_custom_call.1} parent=55 // pred_check
          %p3383 = pneg %p273
        $region90: #{tpu_custom_call.1} parent=55 // pred_check_branch
          %3385 = sbr.rel (%p3383) target = $region92
        $region91: #{tpu_custom_call.1} parent=55 // pred_region
          %s3387 = ssub.s32 512, 512
          %3388 = vsyncadd [#allocation5], %s3387
          %s3389 = sshll.u32 [#allocation14], 4
          %s3390 = int_to_ptr.vmem [resolvable:$true] %s3389
          %3395 = dma.vmem_to_hbm [thread:$0]  %s3390, 512, %s9, [#allocation5], 128, 128, 8
        $region92: #{tpu_custom_call.1} parent=55 // pred_fallthru
          _
        // Predicated region
        $region93: #{tpu_custom_call.1} parent=55 // pred_check
          %p3396 = pneg %p273
        $region94: #{tpu_custom_call.1} parent=55 // pred_check_branch
          %3398 = sbr.rel (%p3396) target = $region96
        $region95: #{tpu_custom_call.1} parent=55 // pred_region
          %3399 = dma.done [#allocation5], 512
        $region96: #{tpu_custom_call.1} parent=55 // pred_fallthru
          _
      $region56: #{tpu_custom_call.1} parent=5 // pred_fallthru
        _
      %p3400 = scmp.le.s32.totalorder 2, %s26
      // Predicated region
      $region97: #{tpu_custom_call.1} parent=5 // pred_check
        %p3401 = pneg %p3400
      $region98: #{tpu_custom_call.1} parent=5 // pred_check_branch
        %3403 = sbr.rel (%p3401) target = $region100
      $region99: #{tpu_custom_call.1} parent=5 // pred_region
        %s3404 = ssub.s32 %s26, 2
      $region100: #{tpu_custom_call.1} parent=5 // pred_fallthru
        _
    $region6: #{tpu_custom_call.1} parent=1 // loop_footer
      %s30 = sadd.s32 1, %s26
    $region7: #{tpu_custom_call.1} parent=1 // loop_footer_branch
      %25 = sbr.rel target = $region3
    $region8: #{tpu_custom_call.1} parent=1 // loop_exit
      _
    %3405 = vsyncpa [#allocation4], 1
    %s3406 = scalar_lea.sflag [#allocation4], 1
    %3407 = vsyncpa %s3406, 1
    %3408 = vsyncpa [#allocation7], 1
    %s3409 = scalar_lea.sflag [#allocation7], 1
    %3410 = vsyncpa %s3409, 1
    %3411 = vsyncpa [#allocation10], 1
    %s3412 = scalar_lea.sflag [#allocation10], 1
    %3413 = vsyncpa %s3412, 1
    %3414 = vsyncpa [#allocation13], 1
    %s3415 = scalar_lea.sflag [#allocation13], 1
    %3416 = vsyncpa %s3415, 1
    %3417 = vsyncpa [#allocation5], 1
    %s3418 = scalar_lea.sflag [#allocation5], 1
    %3419 = vsyncpa %s3418, 1

</llo_original>
